<compile_context>
chip_gen: v7x
topology: tpu7x:2x2x1
jax: 0.10.0
libtpu: 0.0.40
codegen_flags: <defaults>
</compile_context>

<pallas_src>
import functools

import jax
import jax.numpy as jnp
from jax.experimental import pallas as pl
from jax.experimental.pallas import tpu as pltpu

_LANE = 128
_VMEM_LIMIT_BYTES = 48 * 1024 * 1024  # explicit scoped-VMEM cap (fits v5e/v6e/v7x)


# --------------------------------------------------------------------------- #
# helpers
# --------------------------------------------------------------------------- #
def _round_up(x, m):
    return ((x + m - 1) // m) * m


def _pad_axis(a, axis, new_size):
    if a.shape[axis] == new_size:
        return a
    pads = [(0, 0)] * a.ndim
    pads[axis] = (0, new_size - a.shape[axis])
    return jnp.pad(a, pads)


def _choose_tile_m(m):
    """Largest M tile (<=1024) dividing m, preferring >=2 grid steps so the
    'parallel' axis can be sharded across both v7x TensorCores."""
    cands = (1024, 512, 256, 128, 64, 32, 16, 8)
    for t in cands:
        if m % t == 0 and m // t >= 2:
            return t
    for t in cands:
        if m % t == 0:
            return t
    return m  # tiny / odd M: a single full-extent tile


def _fold_bn_into_matmul(w_oi, gamma, beta, mean, var, eps, k_pad, n_pad):
    """1x1 conv weight [Cout, Cin] -> ([K_pad, N_pad] bf16 weight with BN scale
    folded into the columns, [1, N_pad] f32 folded bias)."""
    scale = gamma / jnp.sqrt(var + eps)
    w_kn = w_oi.T * scale[None, :]
    bias = (beta - mean * scale).reshape(1, -1)
    w_kn = _pad_axis(_pad_axis(w_kn, 0, k_pad), 1, n_pad).astype(jnp.bfloat16)
    bias = _pad_axis(bias, 1, n_pad).astype(jnp.float32)
    return w_kn, bias


def _expand_grouped_weight(w, groups):
    """Grouped conv weight [Cout, Cin//groups, kh, kw] -> block-diagonal dense
    [Cout, Cin, kh, kw] (matches PyTorch grouped-conv semantics)."""
    if groups == 1:
        return w
    c_out, cin_g, kh, kw = w.shape
    cout_g = c_out // groups
    dense = jnp.zeros((c_out, cin_g * groups, kh, kw), w.dtype)
    for g in range(groups):
        dense = dense.at[g * cout_g:(g + 1) * cout_g,
                         g * cin_g:(g + 1) * cin_g].set(w[g * cout_g:(g + 1) * cout_g])
    return dense


# --------------------------------------------------------------------------- #
# kernels
# --------------------------------------------------------------------------- #
def _mm_bn_kernel(x_ref, w_ref, b_ref, o_ref, *, relu):
    """o = [relu](x @ w + b); BN scale pre-folded into w, b is the folded bias."""
    acc = jnp.dot(x_ref[...], w_ref[...], preferred_element_type=jnp.float32)
    y = acc + b_ref[...]
    if relu:
        y = jnp.maximum(y, 0.0)
    o_ref[...] = y.astype(o_ref.dtype)


def _mm_bn_add_relu_kernel(x_ref, w_ref, b_ref, s_ref, o_ref):
    """conv3 epilogue: o = relu(x @ w + b + shortcut) (residual fused)."""
    acc = jnp.dot(x_ref[...], w_ref[...], preferred_element_type=jnp.float32)
    y = acc + b_ref[...] + s_ref[...].astype(jnp.float32)
    o_ref[...] = jnp.maximum(y, 0.0).astype(o_ref.dtype)


def _conv3x3_taps_kernel(x_ref, w_ref, b_ref, o_ref, *, kh, kw, h_out, w_out):
    """3x3 (grouped, expanded to block-diagonal dense) conv + BN + ReLU, one image.

    x_ref: (1, Hp, Wp, C)    spatially padded NHWC tile (bf16)
    w_ref: (kh*kw, C, Cout)  per-tap weight with BN scale folded in (bf16)
    b_ref: (1, Cout)         folded BN bias (f32)
    o_ref: (1, h_out, w_out, Cout)
    """
    x = x_ref[...]           # (1, Hp, Wp, C)
    wt = w_ref[...]          # (kh*kw, C, Cout)
    c_in = x.shape[-1]
    c_out = wt.shape[-1]
    acc = jnp.zeros((h_out * w_out, c_out), jnp.float32)
    for dh in range(kh):
        for dw in range(kw):
            win = x[0, dh:dh + h_out, dw:dw + w_out, :].reshape(h_out * w_out, c_in)
            acc = acc + jnp.dot(win, wt[dh * kw + dw],
                                preferred_element_type=jnp.float32)
    y = jnp.maximum(acc + b_ref[...], 0.0)
    o_ref[...] = y.reshape(1, h_out, w_out, c_out).astype(o_ref.dtype)


# --------------------------------------------------------------------------- #
# pallas_call wrappers
# --------------------------------------------------------------------------- #
def _matmul_bn(x2d, w2d, bias, *, relu, out_dtype):
    m, k = x2d.shape
    n_out = w2d.shape[1]
    tm = _choose_tile_m(m)
    return pl.pallas_call(
        functools.partial(_mm_bn_kernel, relu=relu),
        out_shape=jax.ShapeDtypeStruct((m, n_out), out_dtype),
        grid_spec=pltpu.PrefetchScalarGridSpec(
            num_scalar_prefetch=0,
            grid=(m // tm,),
            in_specs=[
                pl.BlockSpec((tm, k), lambda i: (i, 0)),
                pl.BlockSpec((k, n_out), lambda i: (0, 0)),
                pl.BlockSpec((1, n_out), lambda i: (0, 0)),
            ],
            out_specs=pl.BlockSpec((tm, n_out), lambda i: (i, 0)),
        ),
        compiler_params=pltpu.CompilerParams(
            dimension_semantics=("parallel",),
            vmem_limit_bytes=_VMEM_LIMIT_BYTES),
    )(x2d, w2d, bias)


def _matmul_bn_add_relu(x2d, w2d, bias, shortcut2d, *, out_dtype):
    m, k = x2d.shape
    n_out = w2d.shape[1]
    tm = _choose_tile_m(m)
    return pl.pallas_call(
        _mm_bn_add_relu_kernel,
        out_shape=jax.ShapeDtypeStruct((m, n_out), out_dtype),
        grid_spec=pltpu.PrefetchScalarGridSpec(
            num_scalar_prefetch=0,
            grid=(m // tm,),
            in_specs=[
                pl.BlockSpec((tm, k), lambda i: (i, 0)),
                pl.BlockSpec((k, n_out), lambda i: (0, 0)),
                pl.BlockSpec((1, n_out), lambda i: (0, 0)),
                pl.BlockSpec((tm, n_out), lambda i: (i, 0)),
            ],
            out_specs=pl.BlockSpec((tm, n_out), lambda i: (i, 0)),
        ),
        compiler_params=pltpu.CompilerParams(
            dimension_semantics=("parallel",),
            vmem_limit_bytes=_VMEM_LIMIT_BYTES),
    )(x2d, w2d, bias, shortcut2d)


def _conv3x3_bn_relu(xp, w_taps, bias, *, kh, kw, h_out, w_out):
    n, hp, wp, c = xp.shape
    taps, _, n_out = w_taps.shape
    return pl.pallas_call(
        functools.partial(_conv3x3_taps_kernel, kh=kh, kw=kw,
                          h_out=h_out, w_out=w_out),
        out_shape=jax.ShapeDtypeStruct((n, h_out, w_out, n_out), jnp.bfloat16),
        grid_spec=pltpu.PrefetchScalarGridSpec(
            num_scalar_prefetch=0,
            grid=(n,),
            in_specs=[
                pl.BlockSpec((1, hp, wp, c), lambda i: (i, 0, 0, 0)),
                pl.BlockSpec((taps, c, n_out), lambda i: (0, 0, 0)),
                pl.BlockSpec((1, n_out), lambda i: (0, 0)),
            ],
            out_specs=pl.BlockSpec((1, h_out, w_out, n_out), lambda i: (i, 0, 0, 0)),
        ),
        compiler_params=pltpu.CompilerParams(
            dimension_semantics=("parallel",),
            vmem_limit_bytes=_VMEM_LIMIT_BYTES),
    )(xp, w_taps, bias)


# --------------------------------------------------------------------------- #
# Bottleneck forward
# --------------------------------------------------------------------------- #
@functools.partial(jax.jit, static_argnames=("stride", "groups", "eps"))
def bottleneck_forward(x_nchw, params, *, stride=1, groups=1, eps=1e-5):
    """Bottleneck forward (eval-mode BN). `params` maps
    'conv1'/'conv2'/'conv3'[/'down'] -> (weight, gamma, beta, running_mean, running_var).
    conv2's weight uses the PyTorch grouped layout [out_c, out_c//groups, 3, 3]."""
    n, c_in, h, w = x_nchw.shape
    c_out = params["conv1"][0].shape[0]
    kh, kw = params["conv2"][0].shape[-2:]
    pad_hw = (kh - 1) // 2          # module uses padding=1 for the 3x3 conv
    c_in_p = _round_up(c_in, _LANE)
    c_p = _round_up(c_out, _LANE)

    # boundary: NCHW -> NHWC, zero-pad channels to a lane-dense multiple of 128, bf16
    x = jnp.transpose(x_nchw, (0, 2, 3, 1))
    x = _pad_axis(x, 3, c_in_p).astype(jnp.bfloat16)          # [N, H, W, Cin_p]

    # ---- conv1: 1x1 + BN + ReLU --------------------------------------------
    cw1, g1, b1, m1, v1 = params["conv1"]
    w1m, bias1 = _fold_bn_into_matmul(cw1.reshape(c_out, c_in), g1, b1, m1, v1,
                                      eps, c_in_p, c_p)
    y1 = _matmul_bn(x.reshape(n * h * w, c_in_p), w1m, bias1,
                    relu=True, out_dtype=jnp.bfloat16)
    y1 = y1.reshape(n, h, w, c_p)

    # ---- conv2: 3x3 grouped + BN + ReLU (in-kernel tap loop, no im2col) -----
    cw2, g2, b2, m2, v2 = params["conv2"]
    scale2 = g2 / jnp.sqrt(v2 + eps)
    w2d = _expand_grouped_weight(cw2, groups)                  # [Cout, Cout, kh, kw]
    w_taps = jnp.transpose(w2d, (2, 3, 1, 0)) * scale2         # [kh, kw, Cin, Cout]
    w_taps = w_taps.reshape(kh * kw, c_out, c_out)
    w_taps = _pad_axis(_pad_axis(w_taps, 1, c_p), 2, c_p).astype(jnp.bfloat16)
    bias2 = _pad_axis((b2 - m2 * scale2).reshape(1, -1), 1, c_p).astype(jnp.float32)

    xp = jnp.pad(y1, ((0, 0), (pad_hw, pad_hw), (pad_hw, pad_hw), (0, 0)))
    h_full = h + 2 * pad_hw - kh + 1                           # stride-1 output size
    w_full = w + 2 * pad_hw - kw + 1
    y2 = _conv3x3_bn_relu(xp, w_taps, bias2, kh=kh, kw=kw,
                          h_out=h_full, w_out=w_full)
    if stride > 1:
        # TODO(synk): stride>1 computes the stride-1 conv and subsamples; a
        # strided in-kernel window would avoid the extra compute.
        y2 = y2[:, ::stride, ::stride, :]
    h_out, w_out = y2.shape[1], y2.shape[2]

    # ---- se / dropout: Identity for the default se_ratio=0, drop_ratio=0 ----

    # ---- shortcut (downsample: 1x1 strided conv + BN, no activation) --------
    if "down" in params:
        cwd, gd, bd, md, vd = params["down"]
        wdm, biasd = _fold_bn_into_matmul(cwd.reshape(c_out, c_in), gd, bd, md, vd,
                                          eps, c_in_p, c_p)
        xs = x[:, ::stride, ::stride, :]
        shortcut = _matmul_bn(xs.reshape(n * h_out * w_out, c_in_p), wdm, biasd,
                              relu=False, out_dtype=jnp.bfloat16)
    else:
        shortcut = x.reshape(n * h_out * w_out, c_p)

    # ---- conv3: 1x1 + BN, fused residual add + final ReLU -------------------
    cw3, g3, b3, m3, v3 = params["conv3"]
    w3m, bias3 = _fold_bn_into_matmul(cw3.reshape(c_out, c_out), g3, b3, m3, v3,
                                      eps, c_p, c_p)
    y3 = _matmul_bn_add_relu(y2.reshape(n * h_out * w_out, c_p), w3m, bias3,
                             shortcut, out_dtype=jnp.float32)

    # boundary: drop channel padding, NHWC -> NCHW
    out = y3.reshape(n, h_out, w_out, c_p)[..., :c_out]
    return jnp.transpose(out, (0, 3, 1, 2))


# --------------------------------------------------------------------------- #
# pure-JAX reference (f32, XLA convs) for correctness check
# --------------------------------------------------------------------------- #
def _ref_conv_bn(x, wt, gamma, beta, mean, var, stride, padding, groups, relu,
                 eps=1e-5):
    y = jax.lax.conv_general_dilated(
        x, wt, window_strides=(stride, stride),
        padding=[(padding, padding), (padding, padding)],
        dimension_numbers=("NCHW", "OIHW", "NCHW"),
        feature_group_count=groups)
    scale = (gamma / jnp.sqrt(var + eps)).reshape(1, -1, 1, 1)
    bias = (beta - mean * gamma / jnp.sqrt(var + eps)).reshape(1, -1, 1, 1)
    y = y * scale + bias
    return jnp.maximum(y, 0.0) if relu else y


def _ref_bottleneck(x, params, stride, groups):
    sc = x
    y = _ref_conv_bn(x, *params["conv1"], 1, 0, 1, True)
    y = _ref_conv_bn(y, *params["conv2"], stride, 1, groups, True)
    y = _ref_conv_bn(y, *params["conv3"], 1, 0, 1, False)
    if "down" in params:
        sc = _ref_conv_bn(sc, *params["down"], stride, 0, 1, False)
    return jnp.maximum(y + sc, 0.0)


# --------------------------------------------------------------------------- #
if __name__ == "__main__":
    key = jax.random.PRNGKey(0)
    ks = jax.random.split(key, 9)

    N, C_IN, H, W = 2, 4, 16, 16
    C_OUT, STRIDE, GROUP_WIDTH = 8, 1, 4
    GROUPS = C_OUT // GROUP_WIDTH           # grouped 3x3 conv (groups=2)

    def bn_init(k, c):
        k1, k2, k3, k4 = jax.random.split(k, 4)
        gamma = 1.0 + 0.1 * jax.random.normal(k1, (c,), jnp.float32)
        beta = 0.1 * jax.random.normal(k2, (c,), jnp.float32)
        mean = 0.1 * jax.random.normal(k3, (c,), jnp.float32)
        var = 1.0 + 0.1 * jax.random.uniform(k4, (c,), jnp.float32)
        return gamma, beta, mean, var

    x = jax.random.normal(ks[0], (N, C_IN, H, W), jnp.float32)
    w1 = 0.2 * jax.random.normal(ks[1], (C_OUT, C_IN, 1, 1), jnp.float32)
    w2 = 0.2 * jax.random.normal(ks[2], (C_OUT, C_OUT // GROUPS, 3, 3), jnp.float32)
    w3 = 0.2 * jax.random.normal(ks[3], (C_OUT, C_OUT, 1, 1), jnp.float32)
    wd = 0.2 * jax.random.normal(ks[4], (C_OUT, C_IN, 1, 1), jnp.float32)

    params = {
        "conv1": (w1,) + bn_init(ks[5], C_OUT),
        "conv2": (w2,) + bn_init(ks[6], C_OUT),
        "conv3": (w3,) + bn_init(ks[7], C_OUT),
        "down": (wd,) + bn_init(ks[8], C_OUT),   # in_c != out_c -> downsample branch
    }

    out = bottleneck_forward(x, params, stride=STRIDE, groups=GROUPS)
    out = jax.block_until_ready(out)

    ref = _ref_bottleneck(x, params, STRIDE, GROUPS)
    h_ref = (H + 2 - 3) // STRIDE + 1
    assert out.shape == (N, C_OUT, h_ref, h_ref), out.shape
    # bf16 matmul path -> loose tolerance vs. the f32 XLA reference
    err = float(jnp.max(jnp.abs(out - ref)))
    assert jnp.allclose(out, ref, atol=5e-2, rtol=5e-2), err

    print("KERNEL_OK")
</pallas_src>

<mosaic_0001>
module attributes {stable_mosaic.version = 11 : i64} {
  func.func @_mm_bn_kernel(%arg0: i32, %arg1: memref<256x128xbf16, #tpu.memory_space<vmem>>, %arg2: memref<128x128xbf16, #tpu.memory_space<vmem>>, %arg3: memref<1x128xf32, #tpu.memory_space<vmem>>, %arg4: memref<256x128xbf16, #tpu.memory_space<vmem>>) attributes {dimension_semantics = [#tpu.dimension_semantics<parallel>], iteration_bounds = array<i64: 2>, scalar_prefetch = 0 : i64, scratch_operands = 0 : i64, tpu.core_type = #tpu.core_type<tc>, window_params = [{transform_indices = @transform_0, window_bounds = array<i64: 256, 128>}, {pipeline_mode = #tpu.pipeline_mode<synchronous>, transform_indices = @transform_1, window_bounds = array<i64: 128, 128>}, {pipeline_mode = #tpu.pipeline_mode<synchronous>, transform_indices = @transform_2, window_bounds = array<i64: 1, 128>}, {transform_indices = @transform_3, window_bounds = array<i64: 256, 128>}]} {
    %c0 = arith.constant 0 : index
    %c0_0 = arith.constant 0 : index
    %0 = vector.load %arg1[%c0, %c0_0] : memref<256x128xbf16, #tpu.memory_space<vmem>>, vector<256x128xbf16>
    %c0_1 = arith.constant 0 : index
    %c0_2 = arith.constant 0 : index
    %1 = vector.load %arg2[%c0_1, %c0_2] : memref<128x128xbf16, #tpu.memory_space<vmem>>, vector<128x128xbf16>
    %cst = arith.constant dense<0.000000e+00> : vector<256x128xf32>
    %2 = tpu.matmul %0, %1, %cst {dimension_numbers = #tpu.dot_dimension_numbers<[1], [0], [0], [1], [0, 0, 1, 1], [], []>} : vector<256x128xbf16>, vector<128x128xbf16>, vector<256x128xf32> -> vector<256x128xf32>
    %c0_3 = arith.constant 0 : index
    %c0_4 = arith.constant 0 : index
    %3 = vector.load %arg3[%c0_3, %c0_4] : memref<1x128xf32, #tpu.memory_space<vmem>>, vector<1x128xf32>
    %4 = vector.broadcast %3 : vector<1x128xf32> to vector<256x128xf32>
    %5 = arith.addf %2, %4 : vector<256x128xf32>
    %cst_5 = arith.constant 0.000000e+00 : f32
    %6 = vector.broadcast %cst_5 : f32 to vector<256x128xf32>
    %7 = arith.maximumf %5, %6 : vector<256x128xf32>
    %8 = arith.truncf %7 : vector<256x128xf32> to vector<256x128xbf16>
    %c0_6 = arith.constant 0 : index
    %c0_7 = arith.constant 0 : index
    %9 = vector.load %arg4[%c0_6, %c0_7] : memref<256x128xbf16, #tpu.memory_space<vmem>>, vector<256x128xbf16>
    tpu.vector_store %arg4[%c0_6, %c0_7], %8 {strides = array<i32>} : memref<256x128xbf16, #tpu.memory_space<vmem>>, vector<256x128xbf16>,
    return
  }
  func.func @transform_0(%arg0: i32) -> (i32, i32) {
    %c0_i32 = arith.constant 0 : i32
    %c0_i32_0 = arith.constant 0 : i32
    return %arg0, %c0_i32 : i32, i32
  }
  func.func @transform_1(%arg0: i32) -> (i32, i32) {
    %c0_i32 = arith.constant 0 : i32
    %c0_i32_0 = arith.constant 0 : i32
    %c0_i32_1 = arith.constant 0 : i32
    return %c0_i32, %c0_i32_0 : i32, i32
  }
  func.func @transform_2(%arg0: i32) -> (i32, i32) {
    %c0_i32 = arith.constant 0 : i32
    %c0_i32_0 = arith.constant 0 : i32
    %c0_i32_1 = arith.constant 0 : i32
    return %c0_i32, %c0_i32_0 : i32, i32
  }
  func.func @transform_3(%arg0: i32) -> (i32, i32) {
    %c0_i32 = arith.constant 0 : i32
    %c0_i32_0 = arith.constant 0 : i32
    return %arg0, %c0_i32 : i32, i32
  }
}

module attributes {stable_mosaic.version = 11 : i64} {
  func.func @_conv3x3_taps_kernel(%arg0: i32, %arg1: memref<1x18x18x128xbf16, #tpu.memory_space<vmem>>, %arg2: memref<9x128x128xbf16, #tpu.memory_space<vmem>>, %arg3: memref<1x128xf32, #tpu.memory_space<vmem>>, %arg4: memref<1x16x16x128xbf16, #tpu.memory_space<vmem>>) attributes {dimension_semantics = [#tpu.dimension_semantics<parallel>], iteration_bounds = array<i64: 2>, scalar_prefetch = 0 : i64, scratch_operands = 0 : i64, tpu.core_type = #tpu.core_type<tc>, window_params = [{transform_indices = @transform_0, window_bounds = array<i64: 1, 18, 18, 128>}, {pipeline_mode = #tpu.pipeline_mode<synchronous>, transform_indices = @transform_1, window_bounds = array<i64: 9, 128, 128>}, {pipeline_mode = #tpu.pipeline_mode<synchronous>, transform_indices = @transform_2, window_bounds = array<i64: 1, 128>}, {transform_indices = @transform_3, window_bounds = array<i64: 1, 16, 16, 128>}]} {
    %c0 = arith.constant 0 : index
    %c0_0 = arith.constant 0 : index
    %c0_1 = arith.constant 0 : index
    %c0_2 = arith.constant 0 : index
    %0 = vector.load %arg1[%c0, %c0_0, %c0_1, %c0_2] : memref<1x18x18x128xbf16, #tpu.memory_space<vmem>>, vector<1x18x18x128xbf16>
    %c0_3 = arith.constant 0 : index
    %c0_4 = arith.constant 0 : index
    %c0_5 = arith.constant 0 : index
    %1 = vector.load %arg2[%c0_3, %c0_4, %c0_5] : memref<9x128x128xbf16, #tpu.memory_space<vmem>>, vector<9x128x128xbf16>
    %cst = arith.constant 0.000000e+00 : f32
    %2 = vector.broadcast %cst : f32 to vector<256x128xf32>
    %3 = vector.extract_strided_slice %0 {offsets = [0, 0, 0, 0], sizes = [1, 16, 16, 128], strides = [1, 1, 1, 1]} : vector<1x18x18x128xbf16> to vector<1x16x16x128xbf16>
    %4 = vector.shape_cast %3 : vector<1x16x16x128xbf16> to vector<16x16x128xbf16>
    %5 = vector.shape_cast %4 : vector<16x16x128xbf16> to vector<256x128xbf16>
    %6 = vector.extract_strided_slice %1 {offsets = [0, 0, 0], sizes = [1, 128, 128], strides = [1, 1, 1]} : vector<9x128x128xbf16> to vector<1x128x128xbf16>
    %7 = vector.shape_cast %6 : vector<1x128x128xbf16> to vector<128x128xbf16>
    %cst_6 = arith.constant dense<0.000000e+00> : vector<256x128xf32>
    %8 = tpu.matmul %5, %7, %cst_6 {dimension_numbers = #tpu.dot_dimension_numbers<[1], [0], [0], [1], [0, 0, 1, 1], [], []>} : vector<256x128xbf16>, vector<128x128xbf16>, vector<256x128xf32> -> vector<256x128xf32>
    %9 = arith.addf %2, %8 : vector<256x128xf32>
    %10 = vector.extract_strided_slice %0 {offsets = [0, 0, 1, 0], sizes = [1, 16, 16, 128], strides = [1, 1, 1, 1]} : vector<1x18x18x128xbf16> to vector<1x16x16x128xbf16>
    %11 = vector.shape_cast %10 : vector<1x16x16x128xbf16> to vector<16x16x128xbf16>
    %12 = vector.shape_cast %11 : vector<16x16x128xbf16> to vector<256x128xbf16>
    %13 = vector.extract_strided_slice %1 {offsets = [1, 0, 0], sizes = [1, 128, 128], strides = [1, 1, 1]} : vector<9x128x128xbf16> to vector<1x128x128xbf16>
    %14 = vector.shape_cast %13 : vector<1x128x128xbf16> to vector<128x128xbf16>
    %cst_7 = arith.constant dense<0.000000e+00> : vector<256x128xf32>
    %15 = tpu.matmul %12, %14, %cst_7 {dimension_numbers = #tpu.dot_dimension_numbers<[1], [0], [0], [1], [0, 0, 1, 1], [], []>} : vector<256x128xbf16>, vector<128x128xbf16>, vector<256x128xf32> -> vector<256x128xf32>
    %16 = arith.addf %9, %15 : vector<256x128xf32>
    %17 = vector.extract_strided_slice %0 {offsets = [0, 0, 2, 0], sizes = [1, 16, 16, 128], strides = [1, 1, 1, 1]} : vector<1x18x18x128xbf16> to vector<1x16x16x128xbf16>
    %18 = vector.shape_cast %17 : vector<1x16x16x128xbf16> to vector<16x16x128xbf16>
    %19 = vector.shape_cast %18 : vector<16x16x128xbf16> to vector<256x128xbf16>
    %20 = vector.extract_strided_slice %1 {offsets = [2, 0, 0], sizes = [1, 128, 128], strides = [1, 1, 1]} : vector<9x128x128xbf16> to vector<1x128x128xbf16>
    %21 = vector.shape_cast %20 : vector<1x128x128xbf16> to vector<128x128xbf16>
    %cst_8 = arith.constant dense<0.000000e+00> : vector<256x128xf32>
    %22 = tpu.matmul %19, %21, %cst_8 {dimension_numbers = #tpu.dot_dimension_numbers<[1], [0], [0], [1], [0, 0, 1, 1], [], []>} : vector<256x128xbf16>, vector<128x128xbf16>, vector<256x128xf32> -> vector<256x128xf32>
    %23 = arith.addf %16, %22 : vector<256x128xf32>
    %24 = vector.extract_strided_slice %0 {offsets = [0, 1, 0, 0], sizes = [1, 16, 16, 128], strides = [1, 1, 1, 1]} : vector<1x18x18x128xbf16> to vector<1x16x16x128xbf16>
    %25 = vector.shape_cast %24 : vector<1x16x16x128xbf16> to vector<16x16x128xbf16>
    %26 = vector.shape_cast %25 : vector<16x16x128xbf16> to vector<256x128xbf16>
    %27 = vector.extract_strided_slice %1 {offsets = [3, 0, 0], sizes = [1, 128, 128], strides = [1, 1, 1]} : vector<9x128x128xbf16> to vector<1x128x128xbf16>
    %28 = vector.shape_cast %27 : vector<1x128x128xbf16> to vector<128x128xbf16>
    %cst_9 = arith.constant dense<0.000000e+00> : vector<256x128xf32>
    %29 = tpu.matmul %26, %28, %cst_9 {dimension_numbers = #tpu.dot_dimension_numbers<[1], [0], [0], [1], [0, 0, 1, 1], [], []>} : vector<256x128xbf16>, vector<128x128xbf16>, vector<256x128xf32> -> vector<256x128xf32>
    %30 = arith.addf %23, %29 : vector<256x128xf32>
    %31 = vector.extract_strided_slice %0 {offsets = [0, 1, 1, 0], sizes = [1, 16, 16, 128], strides = [1, 1, 1, 1]} : vector<1x18x18x128xbf16> to vector<1x16x16x128xbf16>
    %32 = vector.shape_cast %31 : vector<1x16x16x128xbf16> to vector<16x16x128xbf16>
    %33 = vector.shape_cast %32 : vector<16x16x128xbf16> to vector<256x128xbf16>
    %34 = vector.extract_strided_slice %1 {offsets = [4, 0, 0], sizes = [1, 128, 128], strides = [1, 1, 1]} : vector<9x128x128xbf16> to vector<1x128x128xbf16>
    %35 = vector.shape_cast %34 : vector<1x128x128xbf16> to vector<128x128xbf16>
    %cst_10 = arith.constant dense<0.000000e+00> : vector<256x128xf32>
    %36 = tpu.matmul %33, %35, %cst_10 {dimension_numbers = #tpu.dot_dimension_numbers<[1], [0], [0], [1], [0, 0, 1, 1], [], []>} : vector<256x128xbf16>, vector<128x128xbf16>, vector<256x128xf32> -> vector<256x128xf32>
    %37 = arith.addf %30, %36 : vector<256x128xf32>
    %38 = vector.extract_strided_slice %0 {offsets = [0, 1, 2, 0], sizes = [1, 16, 16, 128], strides = [1, 1, 1, 1]} : vector<1x18x18x128xbf16> to vector<1x16x16x128xbf16>
    %39 = vector.shape_cast %38 : vector<1x16x16x128xbf16> to vector<16x16x128xbf16>
    %40 = vector.shape_cast %39 : vector<16x16x128xbf16> to vector<256x128xbf16>
    %41 = vector.extract_strided_slice %1 {offsets = [5, 0, 0], sizes = [1, 128, 128], strides = [1, 1, 1]} : vector<9x128x128xbf16> to vector<1x128x128xbf16>
    %42 = vector.shape_cast %41 : vector<1x128x128xbf16> to vector<128x128xbf16>
    %cst_11 = arith.constant dense<0.000000e+00> : vector<256x128xf32>
    %43 = tpu.matmul %40, %42, %cst_11 {dimension_numbers = #tpu.dot_dimension_numbers<[1], [0], [0], [1], [0, 0, 1, 1], [], []>} : vector<256x128xbf16>, vector<128x128xbf16>, vector<256x128xf32> -> vector<256x128xf32>
    %44 = arith.addf %37, %43 : vector<256x128xf32>
    %45 = vector.extract_strided_slice %0 {offsets = [0, 2, 0, 0], sizes = [1, 16, 16, 128], strides = [1, 1, 1, 1]} : vector<1x18x18x128xbf16> to vector<1x16x16x128xbf16>
    %46 = vector.shape_cast %45 : vector<1x16x16x128xbf16> to vector<16x16x128xbf16>
    %47 = vector.shape_cast %46 : vector<16x16x128xbf16> to vector<256x128xbf16>
    %48 = vector.extract_strided_slice %1 {offsets = [6, 0, 0], sizes = [1, 128, 128], strides = [1, 1, 1]} : vector<9x128x128xbf16> to vector<1x128x128xbf16>
    %49 = vector.shape_cast %48 : vector<1x128x128xbf16> to vector<128x128xbf16>
    %cst_12 = arith.constant dense<0.000000e+00> : vector<256x128xf32>
    %50 = tpu.matmul %47, %49, %cst_12 {dimension_numbers = #tpu.dot_dimension_numbers<[1], [0], [0], [1], [0, 0, 1, 1], [], []>} : vector<256x128xbf16>, vector<128x128xbf16>, vector<256x128xf32> -> vector<256x128xf32>
    %51 = arith.addf %44, %50 : vector<256x128xf32>
    %52 = vector.extract_strided_slice %0 {offsets = [0, 2, 1, 0], sizes = [1, 16, 16, 128], strides = [1, 1, 1, 1]} : vector<1x18x18x128xbf16> to vector<1x16x16x128xbf16>
    %53 = vector.shape_cast %52 : vector<1x16x16x128xbf16> to vector<16x16x128xbf16>
    %54 = vector.shape_cast %53 : vector<16x16x128xbf16> to vector<256x128xbf16>
    %55 = vector.extract_strided_slice %1 {offsets = [7, 0, 0], sizes = [1, 128, 128], strides = [1, 1, 1]} : vector<9x128x128xbf16> to vector<1x128x128xbf16>
    %56 = vector.shape_cast %55 : vector<1x128x128xbf16> to vector<128x128xbf16>
    %cst_13 = arith.constant dense<0.000000e+00> : vector<256x128xf32>
    %57 = tpu.matmul %54, %56, %cst_13 {dimension_numbers = #tpu.dot_dimension_numbers<[1], [0], [0], [1], [0, 0, 1, 1], [], []>} : vector<256x128xbf16>, vector<128x128xbf16>, vector<256x128xf32> -> vector<256x128xf32>
    %58 = arith.addf %51, %57 : vector<256x128xf32>
    %59 = vector.extract_strided_slice %0 {offsets = [0, 2, 2, 0], sizes = [1, 16, 16, 128], strides = [1, 1, 1, 1]} : vector<1x18x18x128xbf16> to vector<1x16x16x128xbf16>
    %60 = vector.shape_cast %59 : vector<1x16x16x128xbf16> to vector<16x16x128xbf16>
    %61 = vector.shape_cast %60 : vector<16x16x128xbf16> to vector<256x128xbf16>
    %62 = vector.extract_strided_slice %1 {offsets = [8, 0, 0], sizes = [1, 128, 128], strides = [1, 1, 1]} : vector<9x128x128xbf16> to vector<1x128x128xbf16>
    %63 = vector.shape_cast %62 : vector<1x128x128xbf16> to vector<128x128xbf16>
    %cst_14 = arith.constant dense<0.000000e+00> : vector<256x128xf32>
    %64 = tpu.matmul %61, %63, %cst_14 {dimension_numbers = #tpu.dot_dimension_numbers<[1], [0], [0], [1], [0, 0, 1, 1], [], []>} : vector<256x128xbf16>, vector<128x128xbf16>, vector<256x128xf32> -> vector<256x128xf32>
    %65 = arith.addf %58, %64 : vector<256x128xf32>
    %c0_15 = arith.constant 0 : index
    %c0_16 = arith.constant 0 : index
    %66 = vector.load %arg3[%c0_15, %c0_16] : memref<1x128xf32, #tpu.memory_space<vmem>>, vector<1x128xf32>
    %67 = vector.broadcast %66 : vector<1x128xf32> to vector<256x128xf32>
    %68 = arith.addf %65, %67 : vector<256x128xf32>
    %cst_17 = arith.constant 0.000000e+00 : f32
    %69 = vector.broadcast %cst_17 : f32 to vector<256x128xf32>
    %70 = arith.maximumf %68, %69 : vector<256x128xf32>
    %71 = vector.shape_cast %70 : vector<256x128xf32> to vector<1x16x16x128xf32>
    %72 = arith.truncf %71 : vector<1x16x16x128xf32> to vector<1x16x16x128xbf16>
    %c0_18 = arith.constant 0 : index
    %c0_19 = arith.constant 0 : index
    %c0_20 = arith.constant 0 : index
    %c0_21 = arith.constant 0 : index
    %73 = vector.load %arg4[%c0_18, %c0_19, %c0_20, %c0_21] : memref<1x16x16x128xbf16, #tpu.memory_space<vmem>>, vector<1x16x16x128xbf16>
    tpu.vector_store %arg4[%c0_18, %c0_19, %c0_20, %c0_21], %72 {strides = array<i32>} : memref<1x16x16x128xbf16, #tpu.memory_space<vmem>>, vector<1x16x16x128xbf16>,
    return
  }
  func.func @transform_0(%arg0: i32) -> (i32, i32, i32, i32) {
    %c0_i32 = arith.constant 0 : i32
    %c0_i32_0 = arith.constant 0 : i32
    %c0_i32_1 = arith.constant 0 : i32
    %c0_i32_2 = arith.constant 0 : i32
    return %arg0, %c0_i32, %c0_i32_0, %c0_i32_1 : i32, i32, i32, i32
  }
  func.func @transform_1(%arg0: i32) -> (i32, i32, i32) {
    %c0_i32 = arith.constant 0 : i32
    %c0_i32_0 = arith.constant 0 : i32
    %c0_i32_1 = arith.constant 0 : i32
    %c0_i32_2 = arith.constant 0 : i32
    return %c0_i32, %c0_i32_0, %c0_i32_1 : i32, i32, i32
  }
  func.func @transform_2(%arg0: i32) -> (i32, i32) {
    %c0_i32 = arith.constant 0 : i32
    %c0_i32_0 = arith.constant 0 : i32
    %c0_i32_1 = arith.constant 0 : i32
    return %c0_i32, %c0_i32_0 : i32, i32
  }
  func.func @transform_3(%arg0: i32) -> (i32, i32, i32, i32) {
    %c0_i32 = arith.constant 0 : i32
    %c0_i32_0 = arith.constant 0 : i32
    %c0_i32_1 = arith.constant 0 : i32
    %c0_i32_2 = arith.constant 0 : i32
    return %arg0, %c0_i32, %c0_i32_0, %c0_i32_1 : i32, i32, i32, i32
  }
}

module attributes {stable_mosaic.version = 11 : i64} {
  func.func @_mm_bn_kernel(%arg0: i32, %arg1: memref<256x128xbf16, #tpu.memory_space<vmem>>, %arg2: memref<128x128xbf16, #tpu.memory_space<vmem>>, %arg3: memref<1x128xf32, #tpu.memory_space<vmem>>, %arg4: memref<256x128xbf16, #tpu.memory_space<vmem>>) attributes {dimension_semantics = [#tpu.dimension_semantics<parallel>], iteration_bounds = array<i64: 2>, scalar_prefetch = 0 : i64, scratch_operands = 0 : i64, tpu.core_type = #tpu.core_type<tc>, window_params = [{transform_indices = @transform_0, window_bounds = array<i64: 256, 128>}, {pipeline_mode = #tpu.pipeline_mode<synchronous>, transform_indices = @transform_1, window_bounds = array<i64: 128, 128>}, {pipeline_mode = #tpu.pipeline_mode<synchronous>, transform_indices = @transform_2, window_bounds = array<i64: 1, 128>}, {transform_indices = @transform_3, window_bounds = array<i64: 256, 128>}]} {
    %c0 = arith.constant 0 : index
    %c0_0 = arith.constant 0 : index
    %0 = vector.load %arg1[%c0, %c0_0] : memref<256x128xbf16, #tpu.memory_space<vmem>>, vector<256x128xbf16>
    %c0_1 = arith.constant 0 : index
    %c0_2 = arith.constant 0 : index
    %1 = vector.load %arg2[%c0_1, %c0_2] : memref<128x128xbf16, #tpu.memory_space<vmem>>, vector<128x128xbf16>
    %cst = arith.constant dense<0.000000e+00> : vector<256x128xf32>
    %2 = tpu.matmul %0, %1, %cst {dimension_numbers = #tpu.dot_dimension_numbers<[1], [0], [0], [1], [0, 0, 1, 1], [], []>} : vector<256x128xbf16>, vector<128x128xbf16>, vector<256x128xf32> -> vector<256x128xf32>
    %c0_3 = arith.constant 0 : index
    %c0_4 = arith.constant 0 : index
    %3 = vector.load %arg3[%c0_3, %c0_4] : memref<1x128xf32, #tpu.memory_space<vmem>>, vector<1x128xf32>
    %4 = vector.broadcast %3 : vector<1x128xf32> to vector<256x128xf32>
    %5 = arith.addf %2, %4 : vector<256x128xf32>
    %6 = arith.truncf %5 : vector<256x128xf32> to vector<256x128xbf16>
    %c0_5 = arith.constant 0 : index
    %c0_6 = arith.constant 0 : index
    %7 = vector.load %arg4[%c0_5, %c0_6] : memref<256x128xbf16, #tpu.memory_space<vmem>>, vector<256x128xbf16>
    tpu.vector_store %arg4[%c0_5, %c0_6], %6 {strides = array<i32>} : memref<256x128xbf16, #tpu.memory_space<vmem>>, vector<256x128xbf16>,
    return
  }
  func.func @transform_0(%arg0: i32) -> (i32, i32) {
    %c0_i32 = arith.constant 0 : i32
    %c0_i32_0 = arith.constant 0 : i32
    return %arg0, %c0_i32 : i32, i32
  }
  func.func @transform_1(%arg0: i32) -> (i32, i32) {
    %c0_i32 = arith.constant 0 : i32
    %c0_i32_0 = arith.constant 0 : i32
    %c0_i32_1 = arith.constant 0 : i32
    return %c0_i32, %c0_i32_0 : i32, i32
  }
  func.func @transform_2(%arg0: i32) -> (i32, i32) {
    %c0_i32 = arith.constant 0 : i32
    %c0_i32_0 = arith.constant 0 : i32
    %c0_i32_1 = arith.constant 0 : i32
    return %c0_i32, %c0_i32_0 : i32, i32
  }
  func.func @transform_3(%arg0: i32) -> (i32, i32) {
    %c0_i32 = arith.constant 0 : i32
    %c0_i32_0 = arith.constant 0 : i32
    return %arg0, %c0_i32 : i32, i32
  }
}

module attributes {stable_mosaic.version = 11 : i64} {
  func.func @_mm_bn_add_relu_kernel(%arg0: i32, %arg1: memref<256x128xbf16, #tpu.memory_space<vmem>>, %arg2: memref<128x128xbf16, #tpu.memory_space<vmem>>, %arg3: memref<1x128xf32, #tpu.memory_space<vmem>>, %arg4: memref<256x128xbf16, #tpu.memory_space<vmem>>, %arg5: memref<256x128xf32, #tpu.memory_space<vmem>>) attributes {dimension_semantics = [#tpu.dimension_semantics<parallel>], iteration_bounds = array<i64: 2>, scalar_prefetch = 0 : i64, scratch_operands = 0 : i64, tpu.core_type = #tpu.core_type<tc>, window_params = [{transform_indices = @transform_0, window_bounds = array<i64: 256, 128>}, {pipeline_mode = #tpu.pipeline_mode<synchronous>, transform_indices = @transform_1, window_bounds = array<i64: 128, 128>}, {pipeline_mode = #tpu.pipeline_mode<synchronous>, transform_indices = @transform_2, window_bounds = array<i64: 1, 128>}, {transform_indices = @transform_3, window_bounds = array<i64: 256, 128>}, {transform_indices = @transform_4, window_bounds = array<i64: 256, 128>}]} {
    %c0 = arith.constant 0 : index
    %c0_0 = arith.constant 0 : index
    %0 = vector.load %arg1[%c0, %c0_0] : memref<256x128xbf16, #tpu.memory_space<vmem>>, vector<256x128xbf16>
    %c0_1 = arith.constant 0 : index
    %c0_2 = arith.constant 0 : index
    %1 = vector.load %arg2[%c0_1, %c0_2] : memref<128x128xbf16, #tpu.memory_space<vmem>>, vector<128x128xbf16>
    %cst = arith.constant dense<0.000000e+00> : vector<256x128xf32>
    %2 = tpu.matmul %0, %1, %cst {dimension_numbers = #tpu.dot_dimension_numbers<[1], [0], [0], [1], [0, 0, 1, 1], [], []>} : vector<256x128xbf16>, vector<128x128xbf16>, vector<256x128xf32> -> vector<256x128xf32>
    %c0_3 = arith.constant 0 : index
    %c0_4 = arith.constant 0 : index
    %3 = vector.load %arg3[%c0_3, %c0_4] : memref<1x128xf32, #tpu.memory_space<vmem>>, vector<1x128xf32>
    %4 = vector.broadcast %3 : vector<1x128xf32> to vector<256x128xf32>
    %5 = arith.addf %2, %4 : vector<256x128xf32>
    %c0_5 = arith.constant 0 : index
    %c0_6 = arith.constant 0 : index
    %6 = vector.load %arg4[%c0_5, %c0_6] : memref<256x128xbf16, #tpu.memory_space<vmem>>, vector<256x128xbf16>
    %7 = arith.extf %6 : vector<256x128xbf16> to vector<256x128xf32>
    %8 = arith.addf %5, %7 : vector<256x128xf32>
    %cst_7 = arith.constant 0.000000e+00 : f32
    %9 = vector.broadcast %cst_7 : f32 to vector<256x128xf32>
    %10 = arith.maximumf %8, %9 : vector<256x128xf32>
    %c0_8 = arith.constant 0 : index
    %c0_9 = arith.constant 0 : index
    %11 = vector.load %arg5[%c0_8, %c0_9] : memref<256x128xf32, #tpu.memory_space<vmem>>, vector<256x128xf32>
    tpu.vector_store %arg5[%c0_8, %c0_9], %10 {strides = array<i32>} : memref<256x128xf32, #tpu.memory_space<vmem>>, vector<256x128xf32>,
    return
  }
  func.func @transform_0(%arg0: i32) -> (i32, i32) {
    %c0_i32 = arith.constant 0 : i32
    %c0_i32_0 = arith.constant 0 : i32
    return %arg0, %c0_i32 : i32, i32
  }
  func.func @transform_1(%arg0: i32) -> (i32, i32) {
    %c0_i32 = arith.constant 0 : i32
    %c0_i32_0 = arith.constant 0 : i32
    %c0_i32_1 = arith.constant 0 : i32
    return %c0_i32, %c0_i32_0 : i32, i32
  }
  func.func @transform_2(%arg0: i32) -> (i32, i32) {
    %c0_i32 = arith.constant 0 : i32
    %c0_i32_0 = arith.constant 0 : i32
    %c0_i32_1 = arith.constant 0 : i32
    return %c0_i32, %c0_i32_0 : i32, i32
  }
  func.func @transform_3(%arg0: i32) -> (i32, i32) {
    %c0_i32 = arith.constant 0 : i32
    %c0_i32_0 = arith.constant 0 : i32
    return %arg0, %c0_i32 : i32, i32
  }
  func.func @transform_4(%arg0: i32) -> (i32, i32) {
    %c0_i32 = arith.constant 0 : i32
    %c0_i32_0 = arith.constant 0 : i32
    return %arg0, %c0_i32 : i32, i32
  }
}

</mosaic_0001>

<llo_original>
// kernel: bottleneck_forward.4
$region0: #{bottleneck_forward.4}
  #allocation0 [shape = 'u32[]', space=smem, size = 0x4, offset = 0x4, fixed_abs, tag = 'smem constant byte address 0x4 - core index']
  #allocation1 [shape = 'u32[144,128]{1,0:T(1,128)}', space=vmem, size = 0x12000, scoped, tag = 'internal scratch']
  %s0 = inlined_call_operand.vmem [shape: bf16[512,128], index: 0, kind: input, shape index: {}]
  %s1 = inlined_call_operand.vmem [shape: bf16[128,128], index: 1, kind: input, shape index: {}]
  %s2 = inlined_call_operand.vmem [shape: f32[1,128], index: 2, kind: input, shape index: {}]
  %s3 = inlined_call_operand.vmem [shape: bf16[512,128], index: 3, kind: output, shape index: {}]
  %s4 = sld [smem:[#allocation0]]
  $region45: #{bottleneck_forward.4} parent=0
    _
  %s6 = ssub.s32 1, %s4
  %s7 = scalar_select 0, %s6, %s4
  loop: start=0, step=1, limit=4
  $region2: #{bottleneck_forward.4} parent=0 // loop_pre_header
    _
  $region3: #{bottleneck_forward.4} parent=0 // loop_header
    %s9 = sphi 0, %s13
    %p10 = scmp.ge.s32.totalorder %s9, 4
    %s19 = sphi 0, %s21
    %s22 = sphi 0, %s19
    %s23 = sphi 0, %s22
    %s39 = sphi 0, %s23
    %s43 = sphi 0, %s43
    %s45 = sphi 0, %s43
    %s46 = sphi 0, %s45
    %s60 = sphi 0, %s46
    %s64 = sphi 0, %s64
    %s66 = sphi 0, %s64
    %s67 = sphi 0, %s66
    %s81 = sphi 0, %s67
    %s87 = sphi 0, %s89
    %s90 = sphi 0, %s87
    %s91 = sphi 0, %s90
    %s107 = sphi 0, %s91
  $region4: #{bottleneck_forward.4} parent=0 // loop_header_branch
    %12 = sbr.rel (%p10) target = $region8
  $region5: #{bottleneck_forward.4} parent=0 // loop_body
    %s14 = ssub.s32 %s9, 1
    %s15 = ssub.s32 %s9, 2
    %s16 = sadd.s32 %s9, 1
    %s17 = ssub.s32 %s9, %s16
    %p18 = scmp.eq.s32.totalorder %s17, 0
    %s20 = sadd.s32 %s19, 1
    %s21 = scalar_select %p18, %s19, %s20
    %p24 = pneg %p18
    %p25 = scmp.eq.s32.totalorder %s9, 1
    %p26 = por %p24, %p25
    %p27 = scmp.ne.s32.totalorder %s19, %s22
    %p28 = scmp.eq.s32.totalorder %s9, 0
    %p29 = por %p27, %p28
    %p30 = scmp.ne.s32.totalorder %s19, %s22
    %p31 = scmp.eq.s32.totalorder %s14, 1
    %p32 = por %p30, %p31
    %p33 = scmp.ne.s32.totalorder %s22, %s23
    %p34 = scmp.eq.s32.totalorder %s14, 0
    %p35 = por %p33, %p34
    %p36 = scmp.ne.s32.totalorder %s22, %s23
    %p37 = scmp.eq.s32.totalorder %s15, 1
    %p38 = por %p36, %p37
    %p40 = scmp.ne.s32.totalorder %s23, %s39
    %p41 = scmp.eq.s32.totalorder %s15, 0
    %p42 = por %p40, %p41
    %s44 = sadd.s32 %s43, 1
    %p47 = scmp.eq.s32.totalorder %s9, 1
    %p48 = scmp.ne.s32.totalorder %s43, %s45
    %p49 = scmp.eq.s32.totalorder %s9, 0
    %p50 = por %p48, %p49
    %p51 = scmp.ne.s32.totalorder %s43, %s45
    %p52 = scmp.eq.s32.totalorder %s14, 1
    %p53 = por %p51, %p52
    %p54 = scmp.ne.s32.totalorder %s45, %s46
    %p55 = scmp.eq.s32.totalorder %s14, 0
    %p56 = por %p54, %p55
    %p57 = scmp.ne.s32.totalorder %s45, %s46
    %p58 = scmp.eq.s32.totalorder %s15, 1
    %p59 = por %p57, %p58
    %p61 = scmp.ne.s32.totalorder %s46, %s60
    %p62 = scmp.eq.s32.totalorder %s15, 0
    %p63 = por %p61, %p62
    %s65 = sadd.s32 %s64, 1
    %p68 = scmp.eq.s32.totalorder %s9, 1
    %p69 = scmp.ne.s32.totalorder %s64, %s66
    %p70 = scmp.eq.s32.totalorder %s9, 0
    %p71 = por %p69, %p70
    %p72 = scmp.ne.s32.totalorder %s64, %s66
    %p73 = scmp.eq.s32.totalorder %s14, 1
    %p74 = por %p72, %p73
    %p75 = scmp.ne.s32.totalorder %s66, %s67
    %p76 = scmp.eq.s32.totalorder %s14, 0
    %p77 = por %p75, %p76
    %p78 = scmp.ne.s32.totalorder %s66, %s67
    %p79 = scmp.eq.s32.totalorder %s15, 1
    %p80 = por %p78, %p79
    %p82 = scmp.ne.s32.totalorder %s67, %s81
    %p83 = scmp.eq.s32.totalorder %s15, 0
    %p84 = por %p82, %p83
    %s85 = ssub.s32 %s9, %s16
    %p86 = scmp.eq.s32.totalorder %s85, 0
    %s88 = sadd.s32 %s87, 1
    %s89 = scalar_select %p86, %s87, %s88
    %p92 = pneg %p86
    %p93 = scmp.eq.s32.totalorder %s9, 1
    %p94 = por %p92, %p93
    %p95 = scmp.ne.s32.totalorder %s87, %s90
    %p96 = scmp.eq.s32.totalorder %s9, 0
    %p97 = por %p95, %p96
    %p98 = scmp.ne.s32.totalorder %s87, %s90
    %p99 = scmp.eq.s32.totalorder %s14, 1
    %p100 = por %p98, %p99
    %p101 = scmp.ne.s32.totalorder %s90, %s91
    %p102 = scmp.eq.s32.totalorder %s14, 0
    %p103 = por %p101, %p102
    %p104 = scmp.ne.s32.totalorder %s90, %s91
    %p105 = scmp.eq.s32.totalorder %s15, 1
    %p106 = por %p104, %p105
    %p108 = scmp.ne.s32.totalorder %s91, %s107
    %p109 = scmp.eq.s32.totalorder %s15, 0
    %p110 = por %p108, %p109
    %p111 = scmp.le.s32.totalorder 1, %s9
    %p112 = scmp.lt.s32.totalorder %s9, 3
    %p113 = pnand %p111, %p112
    %p114 = pneg %p113
    // Predicated region
    $region9: #{bottleneck_forward.4} parent=5 // pred_check
      _
    $region10: #{bottleneck_forward.4} parent=5 // pred_check_branch
      %116 = sbr.rel (%p113) target = $region12
    $region11: #{bottleneck_forward.4} parent=5 // pred_region
      %s117 = ssub.s32 %s9, 1
      // Predicated region
      $region13: #{bottleneck_forward.4} parent=11 // pred_check
        %p118 = pneg %p56
      $region14: #{bottleneck_forward.4} parent=11 // pred_check_branch
        %120 = sbr.rel (%p118) target = $region16
      $region15: #{bottleneck_forward.4} parent=11 // pred_region
        _
      $region16: #{bottleneck_forward.4} parent=11 // pred_fallthru
        _
      // Predicated region
      $region17: #{bottleneck_forward.4} parent=11 // pred_check
        %p121 = pneg %p77
      $region18: #{bottleneck_forward.4} parent=11 // pred_check_branch
        %123 = sbr.rel (%p121) target = $region20
      $region19: #{bottleneck_forward.4} parent=11 // pred_region
        _
      $region20: #{bottleneck_forward.4} parent=11 // pred_fallthru
        _
    $region12: #{bottleneck_forward.4} parent=5 // pred_fallthru
      _
    %p124 = scmp.lt.s32.totalorder %s9, 2
    // Predicated region
    $region21: #{bottleneck_forward.4} parent=5 // pred_check
      %p125 = pneg %p124
    $region22: #{bottleneck_forward.4} parent=5 // pred_check_branch
      %127 = sbr.rel (%p125) target = $region24
    $region23: #{bottleneck_forward.4} parent=5 // pred_region
      // Predicated region
      $region25: #{bottleneck_forward.4} parent=23 // pred_check
        %p128 = pneg %p29
      $region26: #{bottleneck_forward.4} parent=23 // pred_check_branch
        %130 = sbr.rel (%p128) target = $region28
      $region27: #{bottleneck_forward.4} parent=23 // pred_region
        %s131 = smul.u32 32, %s9
        %p132 = scmp.lt.s32.totalorder %s131, 63
        %s133 = scalar_select %p132, %s131, 63
        %s134 = smul.addr %s133, 4
        %s135 = scalar_lea.vmem %s0, %s134
        %s136 = smul.u32 32, %s9
      $region28: #{bottleneck_forward.4} parent=23 // pred_fallthru
        _
    $region24: #{bottleneck_forward.4} parent=5 // pred_fallthru
      _
    %p137 = scmp.le.s32.totalorder 1, %s9
    %p138 = scmp.lt.s32.totalorder %s9, 3
    %p139 = pnand %p137, %p138
    %p140 = pneg %p139
    // Predicated region
    $region29: #{bottleneck_forward.4} parent=5 // pred_check
      _
    $region30: #{bottleneck_forward.4} parent=5 // pred_check_branch
      %142 = sbr.rel (%p139) target = $region32
    $region31: #{bottleneck_forward.4} parent=5 // pred_region
      %s143 = ssub.s32 %s9, 1
      %s144 = smul.u32 32, %s14
      %p145 = scmp.lt.s32.totalorder %s144, 63
      %s146 = scalar_select %p145, %s144, 63
      %s147 = smul.addr %s146, 4
      %s148 = scalar_lea.vmem %s0, %s147
      %p149 = pneg %p35
      %p150 = pneg %p32
      %p151 = pneg %p56
      %p152 = pneg %p53
      %p153 = pneg %p77
      %p154 = pneg %p74
      %p155 = pneg %p103
      %p156 = pneg %p100
      %s157 = smul.u32 32, %s14
      %p158 = scmp.lt.s32.totalorder %s157, 63
      %s159 = scalar_select %p158, %s157, 63
      %s160 = smul.addr %s159, 4
      %s161 = scalar_lea.vmem %s3, %s160
      %s162 = smul.u32 32, %s14
      %p163 = scmp.lt.s32.totalorder %s162, 63
      %s164 = scalar_select %p163, %s162, 63
      %s165 = smul.addr %s164, 4
      %s166 = scalar_lea.vmem %s0, %s165
      %s167 = smul.u32 32, %s14
      %s168 = smul.u32 32, %s14
      %p169 = scmp.lt.s32.totalorder %s168, 63
      %s170 = scalar_select %p169, %s168, 63
      %s171 = smul.addr %s170, 4
      %s172 = scalar_lea.vmem %s3, %s171
      %s173 = smul.u32 32, %s14
      %v175 = vld [vmem:[%s166] sm:$0xf]
      %v176 = vld [vmem:[%s166 + $0x4] sm:$0xf]
      %v177 = vld [vmem:[%s166 + $0x8] sm:$0xf]
      %v178 = vld [vmem:[%s166 + $0xc] sm:$0xf]
      %v179 = vld [vmem:[%s166 + $0x10] sm:$0xf]
      %v180 = vld [vmem:[%s166 + $0x14] sm:$0xf]
      %v181 = vld [vmem:[%s166 + $0x18] sm:$0xf]
      %v182 = vld [vmem:[%s166 + $0x1c] sm:$0xf]
      %v183 = vld [vmem:[%s166 + $0x20] sm:$0xf]
      %v184 = vld [vmem:[%s166 + $0x24] sm:$0xf]
      %v185 = vld [vmem:[%s166 + $0x28] sm:$0xf]
      %v186 = vld [vmem:[%s166 + $0x2c] sm:$0xf]
      %v187 = vld [vmem:[%s166 + $0x30] sm:$0xf]
      %v188 = vld [vmem:[%s166 + $0x34] sm:$0xf]
      %v189 = vld [vmem:[%s166 + $0x38] sm:$0xf]
      %v190 = vld [vmem:[%s166 + $0x3c] sm:$0xf]
      %v191 = vld [vmem:[%s166 + $0x40] sm:$0xf]
      %v192 = vld [vmem:[%s166 + $0x44] sm:$0xf]
      %v193 = vld [vmem:[%s166 + $0x48] sm:$0xf]
      %v194 = vld [vmem:[%s166 + $0x4c] sm:$0xf]
      %v195 = vld [vmem:[%s166 + $0x50] sm:$0xf]
      %v196 = vld [vmem:[%s166 + $0x54] sm:$0xf]
      %v197 = vld [vmem:[%s166 + $0x58] sm:$0xf]
      %v198 = vld [vmem:[%s166 + $0x5c] sm:$0xf]
      %v199 = vld [vmem:[%s166 + $0x60] sm:$0xf]
      %v200 = vld [vmem:[%s166 + $0x64] sm:$0xf]
      %v201 = vld [vmem:[%s166 + $0x68] sm:$0xf]
      %v202 = vld [vmem:[%s166 + $0x6c] sm:$0xf]
      %v203 = vld [vmem:[%s166 + $0x70] sm:$0xf]
      %v204 = vld [vmem:[%s166 + $0x74] sm:$0xf]
      %v205 = vld [vmem:[%s166 + $0x78] sm:$0xf]
      %v206 = vld [vmem:[%s166 + $0x7c] sm:$0xf]
      %v207 = vld [vmem:[%s1] sm:$0xf]
      %v208 = vld [vmem:[%s1 + $0x4] sm:$0xf]
      %v209 = vld [vmem:[%s1 + $0x8] sm:$0xf]
      %v210 = vld [vmem:[%s1 + $0xc] sm:$0xf]
      %v211 = vld [vmem:[%s1 + $0x10] sm:$0xf]
      %v212 = vld [vmem:[%s1 + $0x14] sm:$0xf]
      %v213 = vld [vmem:[%s1 + $0x18] sm:$0xf]
      %v214 = vld [vmem:[%s1 + $0x1c] sm:$0xf]
      %v215 = vld [vmem:[%s1 + $0x20] sm:$0xf]
      %v216 = vld [vmem:[%s1 + $0x24] sm:$0xf]
      %v217 = vld [vmem:[%s1 + $0x28] sm:$0xf]
      %v218 = vld [vmem:[%s1 + $0x2c] sm:$0xf]
      %v219 = vld [vmem:[%s1 + $0x30] sm:$0xf]
      %v220 = vld [vmem:[%s1 + $0x34] sm:$0xf]
      %v221 = vld [vmem:[%s1 + $0x38] sm:$0xf]
      %v222 = vld [vmem:[%s1 + $0x3c] sm:$0xf]
      %v223 = vld [vmem:[%s2] sm:$0x1]
      %v225 = vlaneseq
      %v226 = vshrl.u32 %v225, 7
      %v227 = vsub.s32 0, %v226
      %v228 = vrot.slane %v223, %v227
      %v262 = vunpack.c.l.b16 %v175
      %v263 = vunpack.c.l.b16 %v176
      %v264 = vunpack.c.l.b16 %v177
      %v265 = vunpack.c.l.b16 %v178
      %v266 = vunpack.c.l.b16 %v179
      %v267 = vunpack.c.l.b16 %v180
      %v268 = vunpack.c.l.b16 %v181
      %v269 = vunpack.c.l.b16 %v182
      %v270 = vunpack.c.l.b16 %v183
      %v271 = vunpack.c.l.b16 %v184
      %v272 = vunpack.c.l.b16 %v185
      %v273 = vunpack.c.l.b16 %v186
      %v274 = vunpack.c.l.b16 %v187
      %v275 = vunpack.c.l.b16 %v188
      %v276 = vunpack.c.l.b16 %v189
      %v277 = vunpack.c.l.b16 %v190
      %v278 = vunpack.c.l.b16 %v191
      %v279 = vunpack.c.l.b16 %v192
      %v280 = vunpack.c.l.b16 %v193
      %v281 = vunpack.c.l.b16 %v194
      %v282 = vunpack.c.l.b16 %v195
      %v283 = vunpack.c.l.b16 %v196
      %v284 = vunpack.c.l.b16 %v197
      %v285 = vunpack.c.l.b16 %v198
      %v286 = vunpack.c.l.b16 %v199
      %v287 = vunpack.c.l.b16 %v200
      %v288 = vunpack.c.l.b16 %v201
      %v289 = vunpack.c.l.b16 %v202
      %v290 = vunpack.c.l.b16 %v203
      %v291 = vunpack.c.l.b16 %v204
      %v292 = vunpack.c.l.b16 %v205
      %v293 = vunpack.c.l.b16 %v206
      %v294 = vpack.c.b16 %v263, %v262
      %v295 = vpack.c.b16 %v265, %v264
      %v296 = vpack.c.b16 %v267, %v266
      %v297 = vpack.c.b16 %v269, %v268
      %v298 = vpack.c.b16 %v271, %v270
      %v299 = vpack.c.b16 %v273, %v272
      %v300 = vpack.c.b16 %v275, %v274
      %v301 = vpack.c.b16 %v277, %v276
      %v302 = vpack.c.b16 %v279, %v278
      %v303 = vpack.c.b16 %v281, %v280
      %v304 = vpack.c.b16 %v283, %v282
      %v305 = vpack.c.b16 %v285, %v284
      %v306 = vpack.c.b16 %v287, %v286
      %v307 = vpack.c.b16 %v289, %v288
      %v308 = vpack.c.b16 %v291, %v290
      %v309 = vpack.c.b16 %v293, %v292
      %v342 = vunpack.c.l.b16 %v207
      %v343 = vunpack.c.l.b16 %v208
      %v344 = vunpack.c.l.b16 %v209
      %v345 = vunpack.c.l.b16 %v210
      %v346 = vunpack.c.l.b16 %v211
      %v347 = vunpack.c.l.b16 %v212
      %v348 = vunpack.c.l.b16 %v213
      %v349 = vunpack.c.l.b16 %v214
      %v350 = vunpack.c.l.b16 %v215
      %v351 = vunpack.c.l.b16 %v216
      %v352 = vunpack.c.l.b16 %v217
      %v353 = vunpack.c.l.b16 %v218
      %v354 = vunpack.c.l.b16 %v219
      %v355 = vunpack.c.l.b16 %v220
      %v356 = vunpack.c.l.b16 %v221
      %v357 = vunpack.c.l.b16 %v222
      %v358 = vpack.c.b16 %v343, %v342
      %v359 = vpack.c.b16 %v345, %v344
      %v360 = vpack.c.b16 %v347, %v346
      %v361 = vpack.c.b16 %v349, %v348
      %v362 = vpack.c.b16 %v351, %v350
      %v363 = vpack.c.b16 %v353, %v352
      %v364 = vpack.c.b16 %v355, %v354
      %v365 = vpack.c.b16 %v357, %v356
      %374 = vmatprep.subr.bf16.mxu0 0
      %375 = vmatpush1.bf16.msra.mxu0 %v358
      %376 = vmatprep.subr.bf16.mxu0 0
      %377 = vmatpush1.bf16.msra.mxu0 %v359
      %378 = vmatprep.subr.bf16.mxu0 0
      %379 = vmatpush1.bf16.msra.mxu0 %v360
      %380 = vmatprep.subr.bf16.mxu0 0
      %381 = vmatpush1.bf16.msra.mxu0 %v361
      %382 = vmatprep.subr.bf16.mxu0 0
      %383 = vmatpush1.bf16.msra.mxu0 %v362
      %384 = vmatprep.subr.bf16.mxu0 0
      %385 = vmatpush1.bf16.msra.mxu0 %v363
      %386 = vmatprep.subr.bf16.mxu0 0
      %387 = vmatpush1.bf16.msra.mxu0 %v364
      %388 = vmatprep.subr.bf16.mxu0 0
      %389 = vmatpush1.bf16.msra.mxu0 %v365
      %390 = vmatprep.subr.bf16.mxu0 0
      %391 = vmatpush1.bf16.msra.mxu0 0
      %392 = vmatprep.subr.bf16.mxu0 0
      %393 = vmatpush1.bf16.msra.mxu0 0
      %394 = vmatprep.subr.bf16.mxu0 0
      %395 = vmatpush1.bf16.msra.mxu0 0
      %396 = vmatprep.subr.bf16.mxu0 0
      %397 = vmatpush1.bf16.msra.mxu0 0
      %398 = vmatprep.subr.bf16.mxu0 0
      %399 = vmatpush1.bf16.msra.mxu0 0
      %400 = vmatprep.subr.bf16.mxu0 0
      %401 = vmatpush1.bf16.msra.mxu0 0
      %402 = vmatprep.subr.bf16.mxu0 0
      %403 = vmatpush1.bf16.msra.mxu0 0
      %404 = vmatprep.subr.bf16.mxu0 0
      %405 = vmatpush1.bf16.msra.mxu0 0
      %406 = vmatprep.mubr.bf16.mxu0 0
      %407 = vmatmul.mubr.bf16.gmra.mrb[0].mxu0 %v294
      %v408 = vpop.f32.mrb[0].mxu0
      %v409 = vadd.f32 %v228, %v408
      %v410 = vpop.f32.mrb[0].mxu0
      %v411 = vpop.f32.mrb[0].mxu0
      %v412 = vadd.f32 %v228, %v411
      %v413 = vpop.f32.mrb[0].mxu0
      %414 = vmatprep.mubr.bf16.mxu0 0
      %415 = vmatmul.mubr.bf16.gmra.mrb[0].mxu0 %v295
      %v416 = vpop.f32.mrb[0].mxu0
      %v417 = vadd.f32 %v228, %v416
      %v418 = vpop.f32.mrb[0].mxu0
      %v419 = vpop.f32.mrb[0].mxu0
      %v420 = vadd.f32 %v228, %v419
      %v421 = vpop.f32.mrb[0].mxu0
      %422 = vmatprep.mubr.bf16.mxu0 0
      %423 = vmatmul.mubr.bf16.gmra.mrb[0].mxu0 %v296
      %v424 = vpop.f32.mrb[0].mxu0
      %v425 = vadd.f32 %v228, %v424
      %v426 = vpop.f32.mrb[0].mxu0
      %v427 = vpop.f32.mrb[0].mxu0
      %v428 = vadd.f32 %v228, %v427
      %v429 = vpop.f32.mrb[0].mxu0
      %430 = vmatprep.mubr.bf16.mxu0 0
      %431 = vmatmul.mubr.bf16.gmra.mrb[0].mxu0 %v297
      %v432 = vpop.f32.mrb[0].mxu0
      %v433 = vadd.f32 %v228, %v432
      %v434 = vpop.f32.mrb[0].mxu0
      %v435 = vpop.f32.mrb[0].mxu0
      %v436 = vadd.f32 %v228, %v435
      %v437 = vpop.f32.mrb[0].mxu0
      %438 = vmatprep.mubr.bf16.mxu0 0
      %439 = vmatmul.mubr.bf16.gmra.mrb[0].mxu0 %v298
      %v440 = vpop.f32.mrb[0].mxu0
      %v441 = vadd.f32 %v228, %v440
      %v442 = vpop.f32.mrb[0].mxu0
      %v443 = vpop.f32.mrb[0].mxu0
      %v444 = vadd.f32 %v228, %v443
      %v445 = vpop.f32.mrb[0].mxu0
      %446 = vmatprep.mubr.bf16.mxu0 0
      %447 = vmatmul.mubr.bf16.gmra.mrb[0].mxu0 %v299
      %v448 = vpop.f32.mrb[0].mxu0
      %v449 = vadd.f32 %v228, %v448
      %v450 = vpop.f32.mrb[0].mxu0
      %v451 = vpop.f32.mrb[0].mxu0
      %v452 = vadd.f32 %v228, %v451
      %v453 = vpop.f32.mrb[0].mxu0
      %454 = vmatprep.mubr.bf16.mxu0 0
      %455 = vmatmul.mubr.bf16.gmra.mrb[0].mxu0 %v300
      %v456 = vpop.f32.mrb[0].mxu0
      %v457 = vadd.f32 %v228, %v456
      %v458 = vpop.f32.mrb[0].mxu0
      %v459 = vpop.f32.mrb[0].mxu0
      %v460 = vadd.f32 %v228, %v459
      %v461 = vpop.f32.mrb[0].mxu0
      %462 = vmatprep.mubr.bf16.mxu0 0
      %463 = vmatmul.mubr.bf16.gmra.mrb[0].mxu0 %v301
      %v464 = vpop.f32.mrb[0].mxu0
      %v465 = vadd.f32 %v228, %v464
      %v466 = vpop.f32.mrb[0].mxu0
      %v467 = vpop.f32.mrb[0].mxu0
      %v468 = vadd.f32 %v228, %v467
      %v469 = vpop.f32.mrb[0].mxu0
      %470 = vmatprep.mubr.bf16.mxu0 0
      %471 = vmatmul.mubr.bf16.gmra.mrb[0].mxu0 %v302
      %v472 = vpop.f32.mrb[0].mxu0
      %v473 = vadd.f32 %v228, %v472
      %v474 = vpop.f32.mrb[0].mxu0
      %v475 = vpop.f32.mrb[0].mxu0
      %v476 = vadd.f32 %v228, %v475
      %v477 = vpop.f32.mrb[0].mxu0
      %478 = vmatprep.mubr.bf16.mxu0 0
      %479 = vmatmul.mubr.bf16.gmra.mrb[0].mxu0 %v303
      %v480 = vpop.f32.mrb[0].mxu0
      %v481 = vadd.f32 %v228, %v480
      %v482 = vpop.f32.mrb[0].mxu0
      %v483 = vpop.f32.mrb[0].mxu0
      %v484 = vadd.f32 %v228, %v483
      %v485 = vpop.f32.mrb[0].mxu0
      %486 = vmatprep.mubr.bf16.mxu0 0
      %487 = vmatmul.mubr.bf16.gmra.mrb[0].mxu0 %v304
      %v488 = vpop.f32.mrb[0].mxu0
      %v489 = vadd.f32 %v228, %v488
      %v490 = vpop.f32.mrb[0].mxu0
      %v491 = vpop.f32.mrb[0].mxu0
      %v492 = vadd.f32 %v228, %v491
      %v493 = vpop.f32.mrb[0].mxu0
      %494 = vmatprep.mubr.bf16.mxu0 0
      %495 = vmatmul.mubr.bf16.gmra.mrb[0].mxu0 %v305
      %v496 = vpop.f32.mrb[0].mxu0
      %v497 = vadd.f32 %v228, %v496
      %v498 = vpop.f32.mrb[0].mxu0
      %v499 = vpop.f32.mrb[0].mxu0
      %v500 = vadd.f32 %v228, %v499
      %v501 = vpop.f32.mrb[0].mxu0
      %502 = vmatprep.mubr.bf16.mxu0 0
      %503 = vmatmul.mubr.bf16.gmra.mrb[0].mxu0 %v306
      %v504 = vpop.f32.mrb[0].mxu0
      %v505 = vadd.f32 %v228, %v504
      %v506 = vpop.f32.mrb[0].mxu0
      %v507 = vpop.f32.mrb[0].mxu0
      %v508 = vadd.f32 %v228, %v507
      %v509 = vpop.f32.mrb[0].mxu0
      %510 = vmatprep.mubr.bf16.mxu0 0
      %511 = vmatmul.mubr.bf16.gmra.mrb[0].mxu0 %v307
      %v512 = vpop.f32.mrb[0].mxu0
      %v513 = vadd.f32 %v228, %v512
      %v514 = vpop.f32.mrb[0].mxu0
      %v515 = vpop.f32.mrb[0].mxu0
      %v516 = vadd.f32 %v228, %v515
      %v517 = vpop.f32.mrb[0].mxu0
      %518 = vmatprep.mubr.bf16.mxu0 0
      %519 = vmatmul.mubr.bf16.gmra.mrb[0].mxu0 %v308
      %v520 = vpop.f32.mrb[0].mxu0
      %v521 = vadd.f32 %v228, %v520
      %v522 = vpop.f32.mrb[0].mxu0
      %v523 = vpop.f32.mrb[0].mxu0
      %v524 = vadd.f32 %v228, %v523
      %v525 = vpop.f32.mrb[0].mxu0
      %526 = vmatprep.mubr.bf16.mxu0 0
      %527 = vmatmul.mubr.bf16.gmra.mrb[0].mxu0 %v309
      %v528 = vpop.f32.mrb[0].mxu0
      %v529 = vadd.f32 %v228, %v528
      %v530 = vpop.f32.mrb[0].mxu0
      %v531 = vpop.f32.mrb[0].mxu0
      %v532 = vadd.f32 %v228, %v531
      %v533 = vpop.f32.mrb[0].mxu0
      %534 = vdwg.mxu0
      %v535 = vmax.f32 %v409, 0.0
      %v536 = vmax.f32 %v412, 0.0
      %v537 = vmax.f32 %v417, 0.0
      %v538 = vmax.f32 %v420, 0.0
      %v539 = vmax.f32 %v425, 0.0
      %v540 = vmax.f32 %v428, 0.0
      %v541 = vmax.f32 %v433, 0.0
      %v542 = vmax.f32 %v436, 0.0
      %v543 = vmax.f32 %v441, 0.0
      %v544 = vmax.f32 %v444, 0.0
      %v545 = vmax.f32 %v449, 0.0
      %v546 = vmax.f32 %v452, 0.0
      %v547 = vmax.f32 %v457, 0.0
      %v548 = vmax.f32 %v460, 0.0
      %v549 = vmax.f32 %v465, 0.0
      %v550 = vmax.f32 %v468, 0.0
      %v551 = vmax.f32 %v473, 0.0
      %v552 = vmax.f32 %v476, 0.0
      %v553 = vmax.f32 %v481, 0.0
      %v554 = vmax.f32 %v484, 0.0
      %v555 = vmax.f32 %v489, 0.0
      %v556 = vmax.f32 %v492, 0.0
      %v557 = vmax.f32 %v497, 0.0
      %v558 = vmax.f32 %v500, 0.0
      %v559 = vmax.f32 %v505, 0.0
      %v560 = vmax.f32 %v508, 0.0
      %v561 = vmax.f32 %v513, 0.0
      %v562 = vmax.f32 %v516, 0.0
      %v563 = vmax.f32 %v521, 0.0
      %v564 = vmax.f32 %v524, 0.0
      %v565 = vmax.f32 %v529, 0.0
      %v566 = vmax.f32 %v532, 0.0
      %v567 = vpack.c.bf16 %v536, %v535
      %v568 = vpack.c.bf16 %v538, %v537
      %v569 = vpack.c.bf16 %v540, %v539
      %v570 = vpack.c.bf16 %v542, %v541
      %v571 = vpack.c.bf16 %v544, %v543
      %v572 = vpack.c.bf16 %v546, %v545
      %v573 = vpack.c.bf16 %v548, %v547
      %v574 = vpack.c.bf16 %v550, %v549
      %v575 = vpack.c.bf16 %v552, %v551
      %v576 = vpack.c.bf16 %v554, %v553
      %v577 = vpack.c.bf16 %v556, %v555
      %v578 = vpack.c.bf16 %v558, %v557
      %v579 = vpack.c.bf16 %v560, %v559
      %v580 = vpack.c.bf16 %v562, %v561
      %v581 = vpack.c.bf16 %v564, %v563
      %v582 = vpack.c.bf16 %v566, %v565
      %v599 = vunpack.c.l.b16 %v567
      %v600 = vunpack.c.h.b16 %v567
      %v601 = vunpack.c.l.b16 %v568
      %v602 = vunpack.c.h.b16 %v568
      %v603 = vunpack.c.l.b16 %v569
      %v604 = vunpack.c.h.b16 %v569
      %v605 = vunpack.c.l.b16 %v570
      %v606 = vunpack.c.h.b16 %v570
      %v607 = vunpack.c.l.b16 %v571
      %v608 = vunpack.c.h.b16 %v571
      %v609 = vunpack.c.l.b16 %v572
      %v610 = vunpack.c.h.b16 %v572
      %v611 = vunpack.c.l.b16 %v573
      %v612 = vunpack.c.h.b16 %v573
      %v613 = vunpack.c.l.b16 %v574
      %v614 = vunpack.c.h.b16 %v574
      %v615 = vunpack.c.l.b16 %v575
      %v616 = vunpack.c.h.b16 %v575
      %v617 = vunpack.c.l.b16 %v576
      %v618 = vunpack.c.h.b16 %v576
      %v619 = vunpack.c.l.b16 %v577
      %v620 = vunpack.c.h.b16 %v577
      %v621 = vunpack.c.l.b16 %v578
      %v622 = vunpack.c.h.b16 %v578
      %v623 = vunpack.c.l.b16 %v579
      %v624 = vunpack.c.h.b16 %v579
      %v625 = vunpack.c.l.b16 %v580
      %v626 = vunpack.c.h.b16 %v580
      %v627 = vunpack.c.l.b16 %v581
      %v628 = vunpack.c.h.b16 %v581
      %v629 = vunpack.c.l.b16 %v582
      %v630 = vunpack.c.h.b16 %v582
      %v631 = vpack.c.b16 %v599, %v599
      %v632 = vpack.c.b16 %v600, %v600
      %v633 = vpack.c.b16 %v601, %v601
      %v634 = vpack.c.b16 %v602, %v602
      %v635 = vpack.c.b16 %v603, %v603
      %v636 = vpack.c.b16 %v604, %v604
      %v637 = vpack.c.b16 %v605, %v605
      %v638 = vpack.c.b16 %v606, %v606
      %v639 = vpack.c.b16 %v607, %v607
      %v640 = vpack.c.b16 %v608, %v608
      %v641 = vpack.c.b16 %v609, %v609
      %v642 = vpack.c.b16 %v610, %v610
      %v643 = vpack.c.b16 %v611, %v611
      %v644 = vpack.c.b16 %v612, %v612
      %v645 = vpack.c.b16 %v613, %v613
      %v646 = vpack.c.b16 %v614, %v614
      %v647 = vpack.c.b16 %v615, %v615
      %v648 = vpack.c.b16 %v616, %v616
      %v649 = vpack.c.b16 %v617, %v617
      %v650 = vpack.c.b16 %v618, %v618
      %v651 = vpack.c.b16 %v619, %v619
      %v652 = vpack.c.b16 %v620, %v620
      %v653 = vpack.c.b16 %v621, %v621
      %v654 = vpack.c.b16 %v622, %v622
      %v655 = vpack.c.b16 %v623, %v623
      %v656 = vpack.c.b16 %v624, %v624
      %v657 = vpack.c.b16 %v625, %v625
      %v658 = vpack.c.b16 %v626, %v626
      %v659 = vpack.c.b16 %v627, %v627
      %v660 = vpack.c.b16 %v628, %v628
      %v661 = vpack.c.b16 %v629, %v629
      %v662 = vpack.c.b16 %v630, %v630
      %695 = vst [vmem:[%s172] sm:$0xf] %v631
      %696 = vst [vmem:[%s172 + $0x4] sm:$0xf] %v632
      %697 = vst [vmem:[%s172 + $0x8] sm:$0xf] %v633
      %698 = vst [vmem:[%s172 + $0xc] sm:$0xf] %v634
      %699 = vst [vmem:[%s172 + $0x10] sm:$0xf] %v635
      %700 = vst [vmem:[%s172 + $0x14] sm:$0xf] %v636
      %701 = vst [vmem:[%s172 + $0x18] sm:$0xf] %v637
      %702 = vst [vmem:[%s172 + $0x1c] sm:$0xf] %v638
      %703 = vst [vmem:[%s172 + $0x20] sm:$0xf] %v639
      %704 = vst [vmem:[%s172 + $0x24] sm:$0xf] %v640
      %705 = vst [vmem:[%s172 + $0x28] sm:$0xf] %v641
      %706 = vst [vmem:[%s172 + $0x2c] sm:$0xf] %v642
      %707 = vst [vmem:[%s172 + $0x30] sm:$0xf] %v643
      %708 = vst [vmem:[%s172 + $0x34] sm:$0xf] %v644
      %709 = vst [vmem:[%s172 + $0x38] sm:$0xf] %v645
      %710 = vst [vmem:[%s172 + $0x3c] sm:$0xf] %v646
      %711 = vst [vmem:[%s172 + $0x40] sm:$0xf] %v647
      %712 = vst [vmem:[%s172 + $0x44] sm:$0xf] %v648
      %713 = vst [vmem:[%s172 + $0x48] sm:$0xf] %v649
      %714 = vst [vmem:[%s172 + $0x4c] sm:$0xf] %v650
      %715 = vst [vmem:[%s172 + $0x50] sm:$0xf] %v651
      %716 = vst [vmem:[%s172 + $0x54] sm:$0xf] %v652
      %717 = vst [vmem:[%s172 + $0x58] sm:$0xf] %v653
      %718 = vst [vmem:[%s172 + $0x5c] sm:$0xf] %v654
      %719 = vst [vmem:[%s172 + $0x60] sm:$0xf] %v655
      %720 = vst [vmem:[%s172 + $0x64] sm:$0xf] %v656
      %721 = vst [vmem:[%s172 + $0x68] sm:$0xf] %v657
      %722 = vst [vmem:[%s172 + $0x6c] sm:$0xf] %v658
      %723 = vst [vmem:[%s172 + $0x70] sm:$0xf] %v659
      %724 = vst [vmem:[%s172 + $0x74] sm:$0xf] %v660
      %725 = vst [vmem:[%s172 + $0x78] sm:$0xf] %v661
      %726 = vst [vmem:[%s172 + $0x7c] sm:$0xf] %v662
      %s727 = smul.u32 32, %s14
      %p728 = scmp.lt.s32.totalorder %s727, 63
      %s729 = scalar_select %p728, %s727, 63
      %s730 = smul.addr %s729, 4
      %s731 = scalar_lea.vmem %s3, %s730
      // Predicated region
      $region33: #{bottleneck_forward.4} parent=31 // pred_check
        %p732 = pneg %p100
      $region34: #{bottleneck_forward.4} parent=31 // pred_check_branch
        %734 = sbr.rel (%p732) target = $region36
      $region35: #{bottleneck_forward.4} parent=31 // pred_region
        %s735 = smul.u32 32, %s14
      $region36: #{bottleneck_forward.4} parent=31 // pred_fallthru
        _
    $region32: #{bottleneck_forward.4} parent=5 // pred_fallthru
      _
    %p736 = scmp.le.s32.totalorder 2, %s9
    // Predicated region
    $region37: #{bottleneck_forward.4} parent=5 // pred_check
      %p737 = pneg %p736
    $region38: #{bottleneck_forward.4} parent=5 // pred_check_branch
      %739 = sbr.rel (%p737) target = $region40
    $region39: #{bottleneck_forward.4} parent=5 // pred_region
      %s740 = ssub.s32 %s9, 2
      // Predicated region
      $region41: #{bottleneck_forward.4} parent=39 // pred_check
        %p741 = pneg %p106
      $region42: #{bottleneck_forward.4} parent=39 // pred_check_branch
        %743 = sbr.rel (%p741) target = $region44
      $region43: #{bottleneck_forward.4} parent=39 // pred_region
        %s744 = smul.u32 32, %s15
        %p745 = scmp.lt.s32.totalorder %s744, 63
        %s746 = scalar_select %p745, %s744, 63
        %s747 = smul.addr %s746, 4
        %s748 = scalar_lea.vmem %s3, %s747
      $region44: #{bottleneck_forward.4} parent=39 // pred_fallthru
        _
    $region40: #{bottleneck_forward.4} parent=5 // pred_fallthru
      _
  $region6: #{bottleneck_forward.4} parent=0 // loop_footer
    %s13 = sadd.s32 1, %s9
  $region7: #{bottleneck_forward.4} parent=0 // loop_footer_branch
    %8 = sbr.rel target = $region3
  $region8: #{bottleneck_forward.4} parent=0 // loop_exit
    _

// kernel: bottleneck_forward.6
$region0: #{bottleneck_forward.6}
  #allocation0 [shape = 'u32[]', space=smem, size = 0x4, offset = 0x4, fixed_abs, tag = 'smem constant byte address 0x4 - core index']
  #allocation1 [shape = 'u32[144,128]{1,0:T(1,128)}', space=vmem, size = 0x12000, scoped, tag = 'internal scratch']
  %s0 = inlined_call_operand.vmem [shape: bf16[512,128], index: 0, kind: input, shape index: {}]
  %s1 = inlined_call_operand.vmem [shape: bf16[128,128], index: 1, kind: input, shape index: {}]
  %s2 = inlined_call_operand.vmem [shape: f32[1,128], index: 2, kind: input, shape index: {}]
  %s3 = inlined_call_operand.vmem [shape: bf16[512,128], index: 3, kind: output, shape index: {}]
  %s4 = sld [smem:[#allocation0]]
  $region45: #{bottleneck_forward.6} parent=0
    _
  %s6 = ssub.s32 1, %s4
  %s7 = scalar_select 0, %s6, %s4
  loop: start=0, step=1, limit=4
  $region2: #{bottleneck_forward.6} parent=0 // loop_pre_header
    _
  $region3: #{bottleneck_forward.6} parent=0 // loop_header
    %s9 = sphi 0, %s13
    %p10 = scmp.ge.s32.totalorder %s9, 4
    %s19 = sphi 0, %s21
    %s22 = sphi 0, %s19
    %s23 = sphi 0, %s22
    %s39 = sphi 0, %s23
    %s43 = sphi 0, %s43
    %s45 = sphi 0, %s43
    %s46 = sphi 0, %s45
    %s60 = sphi 0, %s46
    %s64 = sphi 0, %s64
    %s66 = sphi 0, %s64
    %s67 = sphi 0, %s66
    %s81 = sphi 0, %s67
    %s87 = sphi 0, %s89
    %s90 = sphi 0, %s87
    %s91 = sphi 0, %s90
    %s107 = sphi 0, %s91
  $region4: #{bottleneck_forward.6} parent=0 // loop_header_branch
    %12 = sbr.rel (%p10) target = $region8
  $region5: #{bottleneck_forward.6} parent=0 // loop_body
    %s14 = ssub.s32 %s9, 1
    %s15 = ssub.s32 %s9, 2
    %s16 = sadd.s32 %s9, 1
    %s17 = ssub.s32 %s9, %s16
    %p18 = scmp.eq.s32.totalorder %s17, 0
    %s20 = sadd.s32 %s19, 1
    %s21 = scalar_select %p18, %s19, %s20
    %p24 = pneg %p18
    %p25 = scmp.eq.s32.totalorder %s9, 1
    %p26 = por %p24, %p25
    %p27 = scmp.ne.s32.totalorder %s19, %s22
    %p28 = scmp.eq.s32.totalorder %s9, 0
    %p29 = por %p27, %p28
    %p30 = scmp.ne.s32.totalorder %s19, %s22
    %p31 = scmp.eq.s32.totalorder %s14, 1
    %p32 = por %p30, %p31
    %p33 = scmp.ne.s32.totalorder %s22, %s23
    %p34 = scmp.eq.s32.totalorder %s14, 0
    %p35 = por %p33, %p34
    %p36 = scmp.ne.s32.totalorder %s22, %s23
    %p37 = scmp.eq.s32.totalorder %s15, 1
    %p38 = por %p36, %p37
    %p40 = scmp.ne.s32.totalorder %s23, %s39
    %p41 = scmp.eq.s32.totalorder %s15, 0
    %p42 = por %p40, %p41
    %s44 = sadd.s32 %s43, 1
    %p47 = scmp.eq.s32.totalorder %s9, 1
    %p48 = scmp.ne.s32.totalorder %s43, %s45
    %p49 = scmp.eq.s32.totalorder %s9, 0
    %p50 = por %p48, %p49
    %p51 = scmp.ne.s32.totalorder %s43, %s45
    %p52 = scmp.eq.s32.totalorder %s14, 1
    %p53 = por %p51, %p52
    %p54 = scmp.ne.s32.totalorder %s45, %s46
    %p55 = scmp.eq.s32.totalorder %s14, 0
    %p56 = por %p54, %p55
    %p57 = scmp.ne.s32.totalorder %s45, %s46
    %p58 = scmp.eq.s32.totalorder %s15, 1
    %p59 = por %p57, %p58
    %p61 = scmp.ne.s32.totalorder %s46, %s60
    %p62 = scmp.eq.s32.totalorder %s15, 0
    %p63 = por %p61, %p62
    %s65 = sadd.s32 %s64, 1
    %p68 = scmp.eq.s32.totalorder %s9, 1
    %p69 = scmp.ne.s32.totalorder %s64, %s66
    %p70 = scmp.eq.s32.totalorder %s9, 0
    %p71 = por %p69, %p70
    %p72 = scmp.ne.s32.totalorder %s64, %s66
    %p73 = scmp.eq.s32.totalorder %s14, 1
    %p74 = por %p72, %p73
    %p75 = scmp.ne.s32.totalorder %s66, %s67
    %p76 = scmp.eq.s32.totalorder %s14, 0
    %p77 = por %p75, %p76
    %p78 = scmp.ne.s32.totalorder %s66, %s67
    %p79 = scmp.eq.s32.totalorder %s15, 1
    %p80 = por %p78, %p79
    %p82 = scmp.ne.s32.totalorder %s67, %s81
    %p83 = scmp.eq.s32.totalorder %s15, 0
    %p84 = por %p82, %p83
    %s85 = ssub.s32 %s9, %s16
    %p86 = scmp.eq.s32.totalorder %s85, 0
    %s88 = sadd.s32 %s87, 1
    %s89 = scalar_select %p86, %s87, %s88
    %p92 = pneg %p86
    %p93 = scmp.eq.s32.totalorder %s9, 1
    %p94 = por %p92, %p93
    %p95 = scmp.ne.s32.totalorder %s87, %s90
    %p96 = scmp.eq.s32.totalorder %s9, 0
    %p97 = por %p95, %p96
    %p98 = scmp.ne.s32.totalorder %s87, %s90
    %p99 = scmp.eq.s32.totalorder %s14, 1
    %p100 = por %p98, %p99
    %p101 = scmp.ne.s32.totalorder %s90, %s91
    %p102 = scmp.eq.s32.totalorder %s14, 0
    %p103 = por %p101, %p102
    %p104 = scmp.ne.s32.totalorder %s90, %s91
    %p105 = scmp.eq.s32.totalorder %s15, 1
    %p106 = por %p104, %p105
    %p108 = scmp.ne.s32.totalorder %s91, %s107
    %p109 = scmp.eq.s32.totalorder %s15, 0
    %p110 = por %p108, %p109
    %p111 = scmp.le.s32.totalorder 1, %s9
    %p112 = scmp.lt.s32.totalorder %s9, 3
    %p113 = pnand %p111, %p112
    %p114 = pneg %p113
    // Predicated region
    $region9: #{bottleneck_forward.6} parent=5 // pred_check
      _
    $region10: #{bottleneck_forward.6} parent=5 // pred_check_branch
      %116 = sbr.rel (%p113) target = $region12
    $region11: #{bottleneck_forward.6} parent=5 // pred_region
      %s117 = ssub.s32 %s9, 1
      // Predicated region
      $region13: #{bottleneck_forward.6} parent=11 // pred_check
        %p118 = pneg %p56
      $region14: #{bottleneck_forward.6} parent=11 // pred_check_branch
        %120 = sbr.rel (%p118) target = $region16
      $region15: #{bottleneck_forward.6} parent=11 // pred_region
        _
      $region16: #{bottleneck_forward.6} parent=11 // pred_fallthru
        _
      // Predicated region
      $region17: #{bottleneck_forward.6} parent=11 // pred_check
        %p121 = pneg %p77
      $region18: #{bottleneck_forward.6} parent=11 // pred_check_branch
        %123 = sbr.rel (%p121) target = $region20
      $region19: #{bottleneck_forward.6} parent=11 // pred_region
        _
      $region20: #{bottleneck_forward.6} parent=11 // pred_fallthru
        _
    $region12: #{bottleneck_forward.6} parent=5 // pred_fallthru
      _
    %p124 = scmp.lt.s32.totalorder %s9, 2
    // Predicated region
    $region21: #{bottleneck_forward.6} parent=5 // pred_check
      %p125 = pneg %p124
    $region22: #{bottleneck_forward.6} parent=5 // pred_check_branch
      %127 = sbr.rel (%p125) target = $region24
    $region23: #{bottleneck_forward.6} parent=5 // pred_region
      // Predicated region
      $region25: #{bottleneck_forward.6} parent=23 // pred_check
        %p128 = pneg %p29
      $region26: #{bottleneck_forward.6} parent=23 // pred_check_branch
        %130 = sbr.rel (%p128) target = $region28
      $region27: #{bottleneck_forward.6} parent=23 // pred_region
        %s131 = smul.u32 32, %s9
        %p132 = scmp.lt.s32.totalorder %s131, 63
        %s133 = scalar_select %p132, %s131, 63
        %s134 = smul.addr %s133, 4
        %s135 = scalar_lea.vmem %s0, %s134
        %s136 = smul.u32 32, %s9
      $region28: #{bottleneck_forward.6} parent=23 // pred_fallthru
        _
    $region24: #{bottleneck_forward.6} parent=5 // pred_fallthru
      _
    %p137 = scmp.le.s32.totalorder 1, %s9
    %p138 = scmp.lt.s32.totalorder %s9, 3
    %p139 = pnand %p137, %p138
    %p140 = pneg %p139
    // Predicated region
    $region29: #{bottleneck_forward.6} parent=5 // pred_check
      _
    $region30: #{bottleneck_forward.6} parent=5 // pred_check_branch
      %142 = sbr.rel (%p139) target = $region32
    $region31: #{bottleneck_forward.6} parent=5 // pred_region
      %s143 = ssub.s32 %s9, 1
      %s144 = smul.u32 32, %s14
      %p145 = scmp.lt.s32.totalorder %s144, 63
      %s146 = scalar_select %p145, %s144, 63
      %s147 = smul.addr %s146, 4
      %s148 = scalar_lea.vmem %s0, %s147
      %p149 = pneg %p35
      %p150 = pneg %p32
      %p151 = pneg %p56
      %p152 = pneg %p53
      %p153 = pneg %p77
      %p154 = pneg %p74
      %p155 = pneg %p103
      %p156 = pneg %p100
      %s157 = smul.u32 32, %s14
      %p158 = scmp.lt.s32.totalorder %s157, 63
      %s159 = scalar_select %p158, %s157, 63
      %s160 = smul.addr %s159, 4
      %s161 = scalar_lea.vmem %s3, %s160
      %s162 = smul.u32 32, %s14
      %p163 = scmp.lt.s32.totalorder %s162, 63
      %s164 = scalar_select %p163, %s162, 63
      %s165 = smul.addr %s164, 4
      %s166 = scalar_lea.vmem %s0, %s165
      %s167 = smul.u32 32, %s14
      %s168 = smul.u32 32, %s14
      %p169 = scmp.lt.s32.totalorder %s168, 63
      %s170 = scalar_select %p169, %s168, 63
      %s171 = smul.addr %s170, 4
      %s172 = scalar_lea.vmem %s3, %s171
      %s173 = smul.u32 32, %s14
      %v175 = vld [vmem:[%s166] sm:$0xf]
      %v176 = vld [vmem:[%s166 + $0x4] sm:$0xf]
      %v177 = vld [vmem:[%s166 + $0x8] sm:$0xf]
      %v178 = vld [vmem:[%s166 + $0xc] sm:$0xf]
      %v179 = vld [vmem:[%s166 + $0x10] sm:$0xf]
      %v180 = vld [vmem:[%s166 + $0x14] sm:$0xf]
      %v181 = vld [vmem:[%s166 + $0x18] sm:$0xf]
      %v182 = vld [vmem:[%s166 + $0x1c] sm:$0xf]
      %v183 = vld [vmem:[%s166 + $0x20] sm:$0xf]
      %v184 = vld [vmem:[%s166 + $0x24] sm:$0xf]
      %v185 = vld [vmem:[%s166 + $0x28] sm:$0xf]
      %v186 = vld [vmem:[%s166 + $0x2c] sm:$0xf]
      %v187 = vld [vmem:[%s166 + $0x30] sm:$0xf]
      %v188 = vld [vmem:[%s166 + $0x34] sm:$0xf]
      %v189 = vld [vmem:[%s166 + $0x38] sm:$0xf]
      %v190 = vld [vmem:[%s166 + $0x3c] sm:$0xf]
      %v191 = vld [vmem:[%s166 + $0x40] sm:$0xf]
      %v192 = vld [vmem:[%s166 + $0x44] sm:$0xf]
      %v193 = vld [vmem:[%s166 + $0x48] sm:$0xf]
      %v194 = vld [vmem:[%s166 + $0x4c] sm:$0xf]
      %v195 = vld [vmem:[%s166 + $0x50] sm:$0xf]
      %v196 = vld [vmem:[%s166 + $0x54] sm:$0xf]
      %v197 = vld [vmem:[%s166 + $0x58] sm:$0xf]
      %v198 = vld [vmem:[%s166 + $0x5c] sm:$0xf]
      %v199 = vld [vmem:[%s166 + $0x60] sm:$0xf]
      %v200 = vld [vmem:[%s166 + $0x64] sm:$0xf]
      %v201 = vld [vmem:[%s166 + $0x68] sm:$0xf]
      %v202 = vld [vmem:[%s166 + $0x6c] sm:$0xf]
      %v203 = vld [vmem:[%s166 + $0x70] sm:$0xf]
      %v204 = vld [vmem:[%s166 + $0x74] sm:$0xf]
      %v205 = vld [vmem:[%s166 + $0x78] sm:$0xf]
      %v206 = vld [vmem:[%s166 + $0x7c] sm:$0xf]
      %v207 = vld [vmem:[%s1] sm:$0xf]
      %v208 = vld [vmem:[%s1 + $0x4] sm:$0xf]
      %v209 = vld [vmem:[%s1 + $0x8] sm:$0xf]
      %v210 = vld [vmem:[%s1 + $0xc] sm:$0xf]
      %v211 = vld [vmem:[%s1 + $0x10] sm:$0xf]
      %v212 = vld [vmem:[%s1 + $0x14] sm:$0xf]
      %v213 = vld [vmem:[%s1 + $0x18] sm:$0xf]
      %v214 = vld [vmem:[%s1 + $0x1c] sm:$0xf]
      %v215 = vld [vmem:[%s1 + $0x20] sm:$0xf]
      %v216 = vld [vmem:[%s1 + $0x24] sm:$0xf]
      %v217 = vld [vmem:[%s1 + $0x28] sm:$0xf]
      %v218 = vld [vmem:[%s1 + $0x2c] sm:$0xf]
      %v219 = vld [vmem:[%s1 + $0x30] sm:$0xf]
      %v220 = vld [vmem:[%s1 + $0x34] sm:$0xf]
      %v221 = vld [vmem:[%s1 + $0x38] sm:$0xf]
      %v222 = vld [vmem:[%s1 + $0x3c] sm:$0xf]
      %v223 = vld [vmem:[%s2] sm:$0x1]
      %v225 = vlaneseq
      %v226 = vshrl.u32 %v225, 7
      %v227 = vsub.s32 0, %v226
      %v228 = vrot.slane %v223, %v227
      %v262 = vunpack.c.l.b16 %v175
      %v263 = vunpack.c.l.b16 %v176
      %v264 = vunpack.c.l.b16 %v177
      %v265 = vunpack.c.l.b16 %v178
      %v266 = vunpack.c.l.b16 %v179
      %v267 = vunpack.c.l.b16 %v180
      %v268 = vunpack.c.l.b16 %v181
      %v269 = vunpack.c.l.b16 %v182
      %v270 = vunpack.c.l.b16 %v183
      %v271 = vunpack.c.l.b16 %v184
      %v272 = vunpack.c.l.b16 %v185
      %v273 = vunpack.c.l.b16 %v186
      %v274 = vunpack.c.l.b16 %v187
      %v275 = vunpack.c.l.b16 %v188
      %v276 = vunpack.c.l.b16 %v189
      %v277 = vunpack.c.l.b16 %v190
      %v278 = vunpack.c.l.b16 %v191
      %v279 = vunpack.c.l.b16 %v192
      %v280 = vunpack.c.l.b16 %v193
      %v281 = vunpack.c.l.b16 %v194
      %v282 = vunpack.c.l.b16 %v195
      %v283 = vunpack.c.l.b16 %v196
      %v284 = vunpack.c.l.b16 %v197
      %v285 = vunpack.c.l.b16 %v198
      %v286 = vunpack.c.l.b16 %v199
      %v287 = vunpack.c.l.b16 %v200
      %v288 = vunpack.c.l.b16 %v201
      %v289 = vunpack.c.l.b16 %v202
      %v290 = vunpack.c.l.b16 %v203
      %v291 = vunpack.c.l.b16 %v204
      %v292 = vunpack.c.l.b16 %v205
      %v293 = vunpack.c.l.b16 %v206
      %v294 = vpack.c.b16 %v263, %v262
      %v295 = vpack.c.b16 %v265, %v264
      %v296 = vpack.c.b16 %v267, %v266
      %v297 = vpack.c.b16 %v269, %v268
      %v298 = vpack.c.b16 %v271, %v270
      %v299 = vpack.c.b16 %v273, %v272
      %v300 = vpack.c.b16 %v275, %v274
      %v301 = vpack.c.b16 %v277, %v276
      %v302 = vpack.c.b16 %v279, %v278
      %v303 = vpack.c.b16 %v281, %v280
      %v304 = vpack.c.b16 %v283, %v282
      %v305 = vpack.c.b16 %v285, %v284
      %v306 = vpack.c.b16 %v287, %v286
      %v307 = vpack.c.b16 %v289, %v288
      %v308 = vpack.c.b16 %v291, %v290
      %v309 = vpack.c.b16 %v293, %v292
      %v342 = vunpack.c.l.b16 %v207
      %v343 = vunpack.c.l.b16 %v208
      %v344 = vunpack.c.l.b16 %v209
      %v345 = vunpack.c.l.b16 %v210
      %v346 = vunpack.c.l.b16 %v211
      %v347 = vunpack.c.l.b16 %v212
      %v348 = vunpack.c.l.b16 %v213
      %v349 = vunpack.c.l.b16 %v214
      %v350 = vunpack.c.l.b16 %v215
      %v351 = vunpack.c.l.b16 %v216
      %v352 = vunpack.c.l.b16 %v217
      %v353 = vunpack.c.l.b16 %v218
      %v354 = vunpack.c.l.b16 %v219
      %v355 = vunpack.c.l.b16 %v220
      %v356 = vunpack.c.l.b16 %v221
      %v357 = vunpack.c.l.b16 %v222
      %v358 = vpack.c.b16 %v343, %v342
      %v359 = vpack.c.b16 %v345, %v344
      %v360 = vpack.c.b16 %v347, %v346
      %v361 = vpack.c.b16 %v349, %v348
      %v362 = vpack.c.b16 %v351, %v350
      %v363 = vpack.c.b16 %v353, %v352
      %v364 = vpack.c.b16 %v355, %v354
      %v365 = vpack.c.b16 %v357, %v356
      %374 = vmatprep.subr.bf16.mxu0 0
      %375 = vmatpush1.bf16.msra.mxu0 %v358
      %376 = vmatprep.subr.bf16.mxu0 0
      %377 = vmatpush1.bf16.msra.mxu0 %v359
      %378 = vmatprep.subr.bf16.mxu0 0
      %379 = vmatpush1.bf16.msra.mxu0 %v360
      %380 = vmatprep.subr.bf16.mxu0 0
      %381 = vmatpush1.bf16.msra.mxu0 %v361
      %382 = vmatprep.subr.bf16.mxu0 0
      %383 = vmatpush1.bf16.msra.mxu0 %v362
      %384 = vmatprep.subr.bf16.mxu0 0
      %385 = vmatpush1.bf16.msra.mxu0 %v363
      %386 = vmatprep.subr.bf16.mxu0 0
      %387 = vmatpush1.bf16.msra.mxu0 %v364
      %388 = vmatprep.subr.bf16.mxu0 0
      %389 = vmatpush1.bf16.msra.mxu0 %v365
      %390 = vmatprep.subr.bf16.mxu0 0
      %391 = vmatpush1.bf16.msra.mxu0 0
      %392 = vmatprep.subr.bf16.mxu0 0
      %393 = vmatpush1.bf16.msra.mxu0 0
      %394 = vmatprep.subr.bf16.mxu0 0
      %395 = vmatpush1.bf16.msra.mxu0 0
      %396 = vmatprep.subr.bf16.mxu0 0
      %397 = vmatpush1.bf16.msra.mxu0 0
      %398 = vmatprep.subr.bf16.mxu0 0
      %399 = vmatpush1.bf16.msra.mxu0 0
      %400 = vmatprep.subr.bf16.mxu0 0
      %401 = vmatpush1.bf16.msra.mxu0 0
      %402 = vmatprep.subr.bf16.mxu0 0
      %403 = vmatpush1.bf16.msra.mxu0 0
      %404 = vmatprep.subr.bf16.mxu0 0
      %405 = vmatpush1.bf16.msra.mxu0 0
      %406 = vmatprep.mubr.bf16.mxu0 0
      %407 = vmatmul.mubr.bf16.gmra.mrb[0].mxu0 %v294
      %v408 = vpop.f32.mrb[0].mxu0
      %v409 = vadd.f32 %v228, %v408
      %v410 = vpop.f32.mrb[0].mxu0
      %v411 = vpop.f32.mrb[0].mxu0
      %v412 = vadd.f32 %v228, %v411
      %v413 = vpop.f32.mrb[0].mxu0
      %414 = vmatprep.mubr.bf16.mxu0 0
      %415 = vmatmul.mubr.bf16.gmra.mrb[0].mxu0 %v295
      %v416 = vpop.f32.mrb[0].mxu0
      %v417 = vadd.f32 %v228, %v416
      %v418 = vpop.f32.mrb[0].mxu0
      %v419 = vpop.f32.mrb[0].mxu0
      %v420 = vadd.f32 %v228, %v419
      %v421 = vpop.f32.mrb[0].mxu0
      %422 = vmatprep.mubr.bf16.mxu0 0
      %423 = vmatmul.mubr.bf16.gmra.mrb[0].mxu0 %v296
      %v424 = vpop.f32.mrb[0].mxu0
      %v425 = vadd.f32 %v228, %v424
      %v426 = vpop.f32.mrb[0].mxu0
      %v427 = vpop.f32.mrb[0].mxu0
      %v428 = vadd.f32 %v228, %v427
      %v429 = vpop.f32.mrb[0].mxu0
      %430 = vmatprep.mubr.bf16.mxu0 0
      %431 = vmatmul.mubr.bf16.gmra.mrb[0].mxu0 %v297
      %v432 = vpop.f32.mrb[0].mxu0
      %v433 = vadd.f32 %v228, %v432
      %v434 = vpop.f32.mrb[0].mxu0
      %v435 = vpop.f32.mrb[0].mxu0
      %v436 = vadd.f32 %v228, %v435
      %v437 = vpop.f32.mrb[0].mxu0
      %438 = vmatprep.mubr.bf16.mxu0 0
      %439 = vmatmul.mubr.bf16.gmra.mrb[0].mxu0 %v298
      %v440 = vpop.f32.mrb[0].mxu0
      %v441 = vadd.f32 %v228, %v440
      %v442 = vpop.f32.mrb[0].mxu0
      %v443 = vpop.f32.mrb[0].mxu0
      %v444 = vadd.f32 %v228, %v443
      %v445 = vpop.f32.mrb[0].mxu0
      %446 = vmatprep.mubr.bf16.mxu0 0
      %447 = vmatmul.mubr.bf16.gmra.mrb[0].mxu0 %v299
      %v448 = vpop.f32.mrb[0].mxu0
      %v449 = vadd.f32 %v228, %v448
      %v450 = vpop.f32.mrb[0].mxu0
      %v451 = vpop.f32.mrb[0].mxu0
      %v452 = vadd.f32 %v228, %v451
      %v453 = vpop.f32.mrb[0].mxu0
      %454 = vmatprep.mubr.bf16.mxu0 0
      %455 = vmatmul.mubr.bf16.gmra.mrb[0].mxu0 %v300
      %v456 = vpop.f32.mrb[0].mxu0
      %v457 = vadd.f32 %v228, %v456
      %v458 = vpop.f32.mrb[0].mxu0
      %v459 = vpop.f32.mrb[0].mxu0
      %v460 = vadd.f32 %v228, %v459
      %v461 = vpop.f32.mrb[0].mxu0
      %462 = vmatprep.mubr.bf16.mxu0 0
      %463 = vmatmul.mubr.bf16.gmra.mrb[0].mxu0 %v301
      %v464 = vpop.f32.mrb[0].mxu0
      %v465 = vadd.f32 %v228, %v464
      %v466 = vpop.f32.mrb[0].mxu0
      %v467 = vpop.f32.mrb[0].mxu0
      %v468 = vadd.f32 %v228, %v467
      %v469 = vpop.f32.mrb[0].mxu0
      %470 = vmatprep.mubr.bf16.mxu0 0
      %471 = vmatmul.mubr.bf16.gmra.mrb[0].mxu0 %v302
      %v472 = vpop.f32.mrb[0].mxu0
      %v473 = vadd.f32 %v228, %v472
      %v474 = vpop.f32.mrb[0].mxu0
      %v475 = vpop.f32.mrb[0].mxu0
      %v476 = vadd.f32 %v228, %v475
      %v477 = vpop.f32.mrb[0].mxu0
      %478 = vmatprep.mubr.bf16.mxu0 0
      %479 = vmatmul.mubr.bf16.gmra.mrb[0].mxu0 %v303
      %v480 = vpop.f32.mrb[0].mxu0
      %v481 = vadd.f32 %v228, %v480
      %v482 = vpop.f32.mrb[0].mxu0
      %v483 = vpop.f32.mrb[0].mxu0
      %v484 = vadd.f32 %v228, %v483
      %v485 = vpop.f32.mrb[0].mxu0
      %486 = vmatprep.mubr.bf16.mxu0 0
      %487 = vmatmul.mubr.bf16.gmra.mrb[0].mxu0 %v304
      %v488 = vpop.f32.mrb[0].mxu0
      %v489 = vadd.f32 %v228, %v488
      %v490 = vpop.f32.mrb[0].mxu0
      %v491 = vpop.f32.mrb[0].mxu0
      %v492 = vadd.f32 %v228, %v491
      %v493 = vpop.f32.mrb[0].mxu0
      %494 = vmatprep.mubr.bf16.mxu0 0
      %495 = vmatmul.mubr.bf16.gmra.mrb[0].mxu0 %v305
      %v496 = vpop.f32.mrb[0].mxu0
      %v497 = vadd.f32 %v228, %v496
      %v498 = vpop.f32.mrb[0].mxu0
      %v499 = vpop.f32.mrb[0].mxu0
      %v500 = vadd.f32 %v228, %v499
      %v501 = vpop.f32.mrb[0].mxu0
      %502 = vmatprep.mubr.bf16.mxu0 0
      %503 = vmatmul.mubr.bf16.gmra.mrb[0].mxu0 %v306
      %v504 = vpop.f32.mrb[0].mxu0
      %v505 = vadd.f32 %v228, %v504
      %v506 = vpop.f32.mrb[0].mxu0
      %v507 = vpop.f32.mrb[0].mxu0
      %v508 = vadd.f32 %v228, %v507
      %v509 = vpop.f32.mrb[0].mxu0
      %510 = vmatprep.mubr.bf16.mxu0 0
      %511 = vmatmul.mubr.bf16.gmra.mrb[0].mxu0 %v307
      %v512 = vpop.f32.mrb[0].mxu0
      %v513 = vadd.f32 %v228, %v512
      %v514 = vpop.f32.mrb[0].mxu0
      %v515 = vpop.f32.mrb[0].mxu0
      %v516 = vadd.f32 %v228, %v515
      %v517 = vpop.f32.mrb[0].mxu0
      %518 = vmatprep.mubr.bf16.mxu0 0
      %519 = vmatmul.mubr.bf16.gmra.mrb[0].mxu0 %v308
      %v520 = vpop.f32.mrb[0].mxu0
      %v521 = vadd.f32 %v228, %v520
      %v522 = vpop.f32.mrb[0].mxu0
      %v523 = vpop.f32.mrb[0].mxu0
      %v524 = vadd.f32 %v228, %v523
      %v525 = vpop.f32.mrb[0].mxu0
      %526 = vmatprep.mubr.bf16.mxu0 0
      %527 = vmatmul.mubr.bf16.gmra.mrb[0].mxu0 %v309
      %v528 = vpop.f32.mrb[0].mxu0
      %v529 = vadd.f32 %v228, %v528
      %v530 = vpop.f32.mrb[0].mxu0
      %v531 = vpop.f32.mrb[0].mxu0
      %v532 = vadd.f32 %v228, %v531
      %v533 = vpop.f32.mrb[0].mxu0
      %534 = vdwg.mxu0
      %v535 = vpack.c.bf16 %v412, %v409
      %v536 = vpack.c.bf16 %v420, %v417
      %v537 = vpack.c.bf16 %v428, %v425
      %v538 = vpack.c.bf16 %v436, %v433
      %v539 = vpack.c.bf16 %v444, %v441
      %v540 = vpack.c.bf16 %v452, %v449
      %v541 = vpack.c.bf16 %v460, %v457
      %v542 = vpack.c.bf16 %v468, %v465
      %v543 = vpack.c.bf16 %v476, %v473
      %v544 = vpack.c.bf16 %v484, %v481
      %v545 = vpack.c.bf16 %v492, %v489
      %v546 = vpack.c.bf16 %v500, %v497
      %v547 = vpack.c.bf16 %v508, %v505
      %v548 = vpack.c.bf16 %v516, %v513
      %v549 = vpack.c.bf16 %v524, %v521
      %v550 = vpack.c.bf16 %v532, %v529
      %v567 = vunpack.c.l.b16 %v535
      %v568 = vunpack.c.h.b16 %v535
      %v569 = vunpack.c.l.b16 %v536
      %v570 = vunpack.c.h.b16 %v536
      %v571 = vunpack.c.l.b16 %v537
      %v572 = vunpack.c.h.b16 %v537
      %v573 = vunpack.c.l.b16 %v538
      %v574 = vunpack.c.h.b16 %v538
      %v575 = vunpack.c.l.b16 %v539
      %v576 = vunpack.c.h.b16 %v539
      %v577 = vunpack.c.l.b16 %v540
      %v578 = vunpack.c.h.b16 %v540
      %v579 = vunpack.c.l.b16 %v541
      %v580 = vunpack.c.h.b16 %v541
      %v581 = vunpack.c.l.b16 %v542
      %v582 = vunpack.c.h.b16 %v542
      %v583 = vunpack.c.l.b16 %v543
      %v584 = vunpack.c.h.b16 %v543
      %v585 = vunpack.c.l.b16 %v544
      %v586 = vunpack.c.h.b16 %v544
      %v587 = vunpack.c.l.b16 %v545
      %v588 = vunpack.c.h.b16 %v545
      %v589 = vunpack.c.l.b16 %v546
      %v590 = vunpack.c.h.b16 %v546
      %v591 = vunpack.c.l.b16 %v547
      %v592 = vunpack.c.h.b16 %v547
      %v593 = vunpack.c.l.b16 %v548
      %v594 = vunpack.c.h.b16 %v548
      %v595 = vunpack.c.l.b16 %v549
      %v596 = vunpack.c.h.b16 %v549
      %v597 = vunpack.c.l.b16 %v550
      %v598 = vunpack.c.h.b16 %v550
      %v599 = vpack.c.b16 %v567, %v567
      %v600 = vpack.c.b16 %v568, %v568
      %v601 = vpack.c.b16 %v569, %v569
      %v602 = vpack.c.b16 %v570, %v570
      %v603 = vpack.c.b16 %v571, %v571
      %v604 = vpack.c.b16 %v572, %v572
      %v605 = vpack.c.b16 %v573, %v573
      %v606 = vpack.c.b16 %v574, %v574
      %v607 = vpack.c.b16 %v575, %v575
      %v608 = vpack.c.b16 %v576, %v576
      %v609 = vpack.c.b16 %v577, %v577
      %v610 = vpack.c.b16 %v578, %v578
      %v611 = vpack.c.b16 %v579, %v579
      %v612 = vpack.c.b16 %v580, %v580
      %v613 = vpack.c.b16 %v581, %v581
      %v614 = vpack.c.b16 %v582, %v582
      %v615 = vpack.c.b16 %v583, %v583
      %v616 = vpack.c.b16 %v584, %v584
      %v617 = vpack.c.b16 %v585, %v585
      %v618 = vpack.c.b16 %v586, %v586
      %v619 = vpack.c.b16 %v587, %v587
      %v620 = vpack.c.b16 %v588, %v588
      %v621 = vpack.c.b16 %v589, %v589
      %v622 = vpack.c.b16 %v590, %v590
      %v623 = vpack.c.b16 %v591, %v591
      %v624 = vpack.c.b16 %v592, %v592
      %v625 = vpack.c.b16 %v593, %v593
      %v626 = vpack.c.b16 %v594, %v594
      %v627 = vpack.c.b16 %v595, %v595
      %v628 = vpack.c.b16 %v596, %v596
      %v629 = vpack.c.b16 %v597, %v597
      %v630 = vpack.c.b16 %v598, %v598
      %663 = vst [vmem:[%s172] sm:$0xf] %v599
      %664 = vst [vmem:[%s172 + $0x4] sm:$0xf] %v600
      %665 = vst [vmem:[%s172 + $0x8] sm:$0xf] %v601
      %666 = vst [vmem:[%s172 + $0xc] sm:$0xf] %v602
      %667 = vst [vmem:[%s172 + $0x10] sm:$0xf] %v603
      %668 = vst [vmem:[%s172 + $0x14] sm:$0xf] %v604
      %669 = vst [vmem:[%s172 + $0x18] sm:$0xf] %v605
      %670 = vst [vmem:[%s172 + $0x1c] sm:$0xf] %v606
      %671 = vst [vmem:[%s172 + $0x20] sm:$0xf] %v607
      %672 = vst [vmem:[%s172 + $0x24] sm:$0xf] %v608
      %673 = vst [vmem:[%s172 + $0x28] sm:$0xf] %v609
      %674 = vst [vmem:[%s172 + $0x2c] sm:$0xf] %v610
      %675 = vst [vmem:[%s172 + $0x30] sm:$0xf] %v611
      %676 = vst [vmem:[%s172 + $0x34] sm:$0xf] %v612
      %677 = vst [vmem:[%s172 + $0x38] sm:$0xf] %v613
      %678 = vst [vmem:[%s172 + $0x3c] sm:$0xf] %v614
      %679 = vst [vmem:[%s172 + $0x40] sm:$0xf] %v615
      %680 = vst [vmem:[%s172 + $0x44] sm:$0xf] %v616
      %681 = vst [vmem:[%s172 + $0x48] sm:$0xf] %v617
      %682 = vst [vmem:[%s172 + $0x4c] sm:$0xf] %v618
      %683 = vst [vmem:[%s172 + $0x50] sm:$0xf] %v619
      %684 = vst [vmem:[%s172 + $0x54] sm:$0xf] %v620
      %685 = vst [vmem:[%s172 + $0x58] sm:$0xf] %v621
      %686 = vst [vmem:[%s172 + $0x5c] sm:$0xf] %v622
      %687 = vst [vmem:[%s172 + $0x60] sm:$0xf] %v623
      %688 = vst [vmem:[%s172 + $0x64] sm:$0xf] %v624
      %689 = vst [vmem:[%s172 + $0x68] sm:$0xf] %v625
      %690 = vst [vmem:[%s172 + $0x6c] sm:$0xf] %v626
      %691 = vst [vmem:[%s172 + $0x70] sm:$0xf] %v627
      %692 = vst [vmem:[%s172 + $0x74] sm:$0xf] %v628
      %693 = vst [vmem:[%s172 + $0x78] sm:$0xf] %v629
      %694 = vst [vmem:[%s172 + $0x7c] sm:$0xf] %v630
      %s695 = smul.u32 32, %s14
      %p696 = scmp.lt.s32.totalorder %s695, 63
      %s697 = scalar_select %p696, %s695, 63
      %s698 = smul.addr %s697, 4
      %s699 = scalar_lea.vmem %s3, %s698
      // Predicated region
      $region33: #{bottleneck_forward.6} parent=31 // pred_check
        %p700 = pneg %p100
      $region34: #{bottleneck_forward.6} parent=31 // pred_check_branch
        %702 = sbr.rel (%p700) target = $region36
      $region35: #{bottleneck_forward.6} parent=31 // pred_region
        %s703 = smul.u32 32, %s14
      $region36: #{bottleneck_forward.6} parent=31 // pred_fallthru
        _
    $region32: #{bottleneck_forward.6} parent=5 // pred_fallthru
      _
    %p704 = scmp.le.s32.totalorder 2, %s9
    // Predicated region
    $region37: #{bottleneck_forward.6} parent=5 // pred_check
      %p705 = pneg %p704
    $region38: #{bottleneck_forward.6} parent=5 // pred_check_branch
      %707 = sbr.rel (%p705) target = $region40
    $region39: #{bottleneck_forward.6} parent=5 // pred_region
      %s708 = ssub.s32 %s9, 2
      // Predicated region
      $region41: #{bottleneck_forward.6} parent=39 // pred_check
        %p709 = pneg %p106
      $region42: #{bottleneck_forward.6} parent=39 // pred_check_branch
        %711 = sbr.rel (%p709) target = $region44
      $region43: #{bottleneck_forward.6} parent=39 // pred_region
        %s712 = smul.u32 32, %s15
        %p713 = scmp.lt.s32.totalorder %s712, 63
        %s714 = scalar_select %p713, %s712, 63
        %s715 = smul.addr %s714, 4
        %s716 = scalar_lea.vmem %s3, %s715
      $region44: #{bottleneck_forward.6} parent=39 // pred_fallthru
        _
    $region40: #{bottleneck_forward.6} parent=5 // pred_fallthru
      _
  $region6: #{bottleneck_forward.6} parent=0 // loop_footer
    %s13 = sadd.s32 1, %s9
  $region7: #{bottleneck_forward.6} parent=0 // loop_footer_branch
    %8 = sbr.rel target = $region3
  $region8: #{bottleneck_forward.6} parent=0 // loop_exit
    _

// kernel: bottleneck_forward.7
$region0: #{bottleneck_forward.7}
  #allocation0 [shape = 'u32[]', space=smem, size = 0x4, offset = 0x4, fixed_abs, tag = 'smem constant byte address 0x4 - core index']
  #allocation1 [shape = 'u32[144,128]{1,0:T(1,128)}', space=vmem, size = 0x12000, scoped, tag = 'internal scratch']
  %s0 = inlined_call_operand.vmem [shape: bf16[512,128], index: 0, kind: input, shape index: {}]
  %s1 = inlined_call_operand.vmem [shape: bf16[128,128], index: 1, kind: input, shape index: {}]
  %s2 = inlined_call_operand.vmem [shape: f32[1,128], index: 2, kind: input, shape index: {}]
  %s3 = inlined_call_operand.vmem [shape: bf16[512,128], index: 3, kind: input, shape index: {}]
  %s4 = inlined_call_operand.vmem [shape: f32[512,128], index: 4, kind: output, shape index: {}]
  %s5 = sld [smem:[#allocation0]]
  $region49: #{bottleneck_forward.7} parent=0
    _
  %s7 = ssub.s32 1, %s5
  %s8 = scalar_select 0, %s7, %s5
  loop: start=0, step=1, limit=4
  $region2: #{bottleneck_forward.7} parent=0 // loop_pre_header
    _
  $region3: #{bottleneck_forward.7} parent=0 // loop_header
    %s10 = sphi 0, %s14
    %p11 = scmp.ge.s32.totalorder %s10, 4
    %s20 = sphi 0, %s22
    %s23 = sphi 0, %s20
    %s24 = sphi 0, %s23
    %s40 = sphi 0, %s24
    %s44 = sphi 0, %s44
    %s46 = sphi 0, %s44
    %s47 = sphi 0, %s46
    %s61 = sphi 0, %s47
    %s65 = sphi 0, %s65
    %s67 = sphi 0, %s65
    %s68 = sphi 0, %s67
    %s82 = sphi 0, %s68
    %s88 = sphi 0, %s90
    %s91 = sphi 0, %s88
    %s92 = sphi 0, %s91
    %s108 = sphi 0, %s92
    %s114 = sphi 0, %s116
    %s117 = sphi 0, %s114
    %s118 = sphi 0, %s117
    %s134 = sphi 0, %s118
  $region4: #{bottleneck_forward.7} parent=0 // loop_header_branch
    %13 = sbr.rel (%p11) target = $region8
  $region5: #{bottleneck_forward.7} parent=0 // loop_body
    %s15 = ssub.s32 %s10, 1
    %s16 = ssub.s32 %s10, 2
    %s17 = sadd.s32 %s10, 1
    %s18 = ssub.s32 %s10, %s17
    %p19 = scmp.eq.s32.totalorder %s18, 0
    %s21 = sadd.s32 %s20, 1
    %s22 = scalar_select %p19, %s20, %s21
    %p25 = pneg %p19
    %p26 = scmp.eq.s32.totalorder %s10, 1
    %p27 = por %p25, %p26
    %p28 = scmp.ne.s32.totalorder %s20, %s23
    %p29 = scmp.eq.s32.totalorder %s10, 0
    %p30 = por %p28, %p29
    %p31 = scmp.ne.s32.totalorder %s20, %s23
    %p32 = scmp.eq.s32.totalorder %s15, 1
    %p33 = por %p31, %p32
    %p34 = scmp.ne.s32.totalorder %s23, %s24
    %p35 = scmp.eq.s32.totalorder %s15, 0
    %p36 = por %p34, %p35
    %p37 = scmp.ne.s32.totalorder %s23, %s24
    %p38 = scmp.eq.s32.totalorder %s16, 1
    %p39 = por %p37, %p38
    %p41 = scmp.ne.s32.totalorder %s24, %s40
    %p42 = scmp.eq.s32.totalorder %s16, 0
    %p43 = por %p41, %p42
    %s45 = sadd.s32 %s44, 1
    %p48 = scmp.eq.s32.totalorder %s10, 1
    %p49 = scmp.ne.s32.totalorder %s44, %s46
    %p50 = scmp.eq.s32.totalorder %s10, 0
    %p51 = por %p49, %p50
    %p52 = scmp.ne.s32.totalorder %s44, %s46
    %p53 = scmp.eq.s32.totalorder %s15, 1
    %p54 = por %p52, %p53
    %p55 = scmp.ne.s32.totalorder %s46, %s47
    %p56 = scmp.eq.s32.totalorder %s15, 0
    %p57 = por %p55, %p56
    %p58 = scmp.ne.s32.totalorder %s46, %s47
    %p59 = scmp.eq.s32.totalorder %s16, 1
    %p60 = por %p58, %p59
    %p62 = scmp.ne.s32.totalorder %s47, %s61
    %p63 = scmp.eq.s32.totalorder %s16, 0
    %p64 = por %p62, %p63
    %s66 = sadd.s32 %s65, 1
    %p69 = scmp.eq.s32.totalorder %s10, 1
    %p70 = scmp.ne.s32.totalorder %s65, %s67
    %p71 = scmp.eq.s32.totalorder %s10, 0
    %p72 = por %p70, %p71
    %p73 = scmp.ne.s32.totalorder %s65, %s67
    %p74 = scmp.eq.s32.totalorder %s15, 1
    %p75 = por %p73, %p74
    %p76 = scmp.ne.s32.totalorder %s67, %s68
    %p77 = scmp.eq.s32.totalorder %s15, 0
    %p78 = por %p76, %p77
    %p79 = scmp.ne.s32.totalorder %s67, %s68
    %p80 = scmp.eq.s32.totalorder %s16, 1
    %p81 = por %p79, %p80
    %p83 = scmp.ne.s32.totalorder %s68, %s82
    %p84 = scmp.eq.s32.totalorder %s16, 0
    %p85 = por %p83, %p84
    %s86 = ssub.s32 %s10, %s17
    %p87 = scmp.eq.s32.totalorder %s86, 0
    %s89 = sadd.s32 %s88, 1
    %s90 = scalar_select %p87, %s88, %s89
    %p93 = pneg %p87
    %p94 = scmp.eq.s32.totalorder %s10, 1
    %p95 = por %p93, %p94
    %p96 = scmp.ne.s32.totalorder %s88, %s91
    %p97 = scmp.eq.s32.totalorder %s10, 0
    %p98 = por %p96, %p97
    %p99 = scmp.ne.s32.totalorder %s88, %s91
    %p100 = scmp.eq.s32.totalorder %s15, 1
    %p101 = por %p99, %p100
    %p102 = scmp.ne.s32.totalorder %s91, %s92
    %p103 = scmp.eq.s32.totalorder %s15, 0
    %p104 = por %p102, %p103
    %p105 = scmp.ne.s32.totalorder %s91, %s92
    %p106 = scmp.eq.s32.totalorder %s16, 1
    %p107 = por %p105, %p106
    %p109 = scmp.ne.s32.totalorder %s92, %s108
    %p110 = scmp.eq.s32.totalorder %s16, 0
    %p111 = por %p109, %p110
    %s112 = ssub.s32 %s10, %s17
    %p113 = scmp.eq.s32.totalorder %s112, 0
    %s115 = sadd.s32 %s114, 1
    %s116 = scalar_select %p113, %s114, %s115
    %p119 = pneg %p113
    %p120 = scmp.eq.s32.totalorder %s10, 1
    %p121 = por %p119, %p120
    %p122 = scmp.ne.s32.totalorder %s114, %s117
    %p123 = scmp.eq.s32.totalorder %s10, 0
    %p124 = por %p122, %p123
    %p125 = scmp.ne.s32.totalorder %s114, %s117
    %p126 = scmp.eq.s32.totalorder %s15, 1
    %p127 = por %p125, %p126
    %p128 = scmp.ne.s32.totalorder %s117, %s118
    %p129 = scmp.eq.s32.totalorder %s15, 0
    %p130 = por %p128, %p129
    %p131 = scmp.ne.s32.totalorder %s117, %s118
    %p132 = scmp.eq.s32.totalorder %s16, 1
    %p133 = por %p131, %p132
    %p135 = scmp.ne.s32.totalorder %s118, %s134
    %p136 = scmp.eq.s32.totalorder %s16, 0
    %p137 = por %p135, %p136
    %p138 = scmp.le.s32.totalorder 1, %s10
    %p139 = scmp.lt.s32.totalorder %s10, 3
    %p140 = pnand %p138, %p139
    %p141 = pneg %p140
    // Predicated region
    $region9: #{bottleneck_forward.7} parent=5 // pred_check
      _
    $region10: #{bottleneck_forward.7} parent=5 // pred_check_branch
      %143 = sbr.rel (%p140) target = $region12
    $region11: #{bottleneck_forward.7} parent=5 // pred_region
      %s144 = ssub.s32 %s10, 1
      // Predicated region
      $region13: #{bottleneck_forward.7} parent=11 // pred_check
        %p145 = pneg %p57
      $region14: #{bottleneck_forward.7} parent=11 // pred_check_branch
        %147 = sbr.rel (%p145) target = $region16
      $region15: #{bottleneck_forward.7} parent=11 // pred_region
        _
      $region16: #{bottleneck_forward.7} parent=11 // pred_fallthru
        _
      // Predicated region
      $region17: #{bottleneck_forward.7} parent=11 // pred_check
        %p148 = pneg %p78
      $region18: #{bottleneck_forward.7} parent=11 // pred_check_branch
        %150 = sbr.rel (%p148) target = $region20
      $region19: #{bottleneck_forward.7} parent=11 // pred_region
        _
      $region20: #{bottleneck_forward.7} parent=11 // pred_fallthru
        _
    $region12: #{bottleneck_forward.7} parent=5 // pred_fallthru
      _
    %p151 = scmp.lt.s32.totalorder %s10, 2
    // Predicated region
    $region21: #{bottleneck_forward.7} parent=5 // pred_check
      %p152 = pneg %p151
    $region22: #{bottleneck_forward.7} parent=5 // pred_check_branch
      %154 = sbr.rel (%p152) target = $region24
    $region23: #{bottleneck_forward.7} parent=5 // pred_region
      // Predicated region
      $region25: #{bottleneck_forward.7} parent=23 // pred_check
        %p155 = pneg %p30
      $region26: #{bottleneck_forward.7} parent=23 // pred_check_branch
        %157 = sbr.rel (%p155) target = $region28
      $region27: #{bottleneck_forward.7} parent=23 // pred_region
        %s158 = smul.u32 32, %s10
        %p159 = scmp.lt.s32.totalorder %s158, 63
        %s160 = scalar_select %p159, %s158, 63
        %s161 = smul.addr %s160, 4
        %s162 = scalar_lea.vmem %s0, %s161
        %s163 = smul.u32 32, %s10
      $region28: #{bottleneck_forward.7} parent=23 // pred_fallthru
        _
      // Predicated region
      $region29: #{bottleneck_forward.7} parent=23 // pred_check
        %p164 = pneg %p98
      $region30: #{bottleneck_forward.7} parent=23 // pred_check_branch
        %166 = sbr.rel (%p164) target = $region32
      $region31: #{bottleneck_forward.7} parent=23 // pred_region
        %s167 = smul.u32 32, %s10
        %p168 = scmp.lt.s32.totalorder %s167, 63
        %s169 = scalar_select %p168, %s167, 63
        %s170 = smul.addr %s169, 4
        %s171 = scalar_lea.vmem %s3, %s170
        %s172 = smul.u32 32, %s10
      $region32: #{bottleneck_forward.7} parent=23 // pred_fallthru
        _
    $region24: #{bottleneck_forward.7} parent=5 // pred_fallthru
      _
    %p173 = scmp.le.s32.totalorder 1, %s10
    %p174 = scmp.lt.s32.totalorder %s10, 3
    %p175 = pnand %p173, %p174
    %p176 = pneg %p175
    // Predicated region
    $region33: #{bottleneck_forward.7} parent=5 // pred_check
      _
    $region34: #{bottleneck_forward.7} parent=5 // pred_check_branch
      %178 = sbr.rel (%p175) target = $region36
    $region35: #{bottleneck_forward.7} parent=5 // pred_region
      %s179 = ssub.s32 %s10, 1
      %s180 = smul.u32 32, %s15
      %p181 = scmp.lt.s32.totalorder %s180, 63
      %s182 = scalar_select %p181, %s180, 63
      %s183 = smul.addr %s182, 4
      %s184 = scalar_lea.vmem %s0, %s183
      %p185 = pneg %p36
      %p186 = pneg %p33
      %p187 = pneg %p57
      %p188 = pneg %p54
      %p189 = pneg %p78
      %p190 = pneg %p75
      %s191 = smul.u32 32, %s15
      %p192 = scmp.lt.s32.totalorder %s191, 63
      %s193 = scalar_select %p192, %s191, 63
      %s194 = smul.addr %s193, 4
      %s195 = scalar_lea.vmem %s3, %s194
      %p196 = pneg %p104
      %p197 = pneg %p101
      %p198 = pneg %p130
      %p199 = pneg %p127
      %s200 = smul.u32 32, %s15
      %p201 = scmp.lt.s32.totalorder %s200, 63
      %s202 = scalar_select %p201, %s200, 63
      %s203 = smul.addr %s202, 8
      %s204 = scalar_lea.vmem %s4, %s203
      %s205 = smul.u32 32, %s15
      %p206 = scmp.lt.s32.totalorder %s205, 63
      %s207 = scalar_select %p206, %s205, 63
      %s208 = smul.addr %s207, 4
      %s209 = scalar_lea.vmem %s0, %s208
      %s210 = smul.u32 32, %s15
      %s211 = smul.u32 32, %s15
      %p212 = scmp.lt.s32.totalorder %s211, 63
      %s213 = scalar_select %p212, %s211, 63
      %s214 = smul.addr %s213, 4
      %s215 = scalar_lea.vmem %s3, %s214
      %s216 = smul.u32 32, %s15
      %s217 = smul.u32 32, %s15
      %p218 = scmp.lt.s32.totalorder %s217, 63
      %s219 = scalar_select %p218, %s217, 63
      %s220 = smul.addr %s219, 8
      %s221 = scalar_lea.vmem %s4, %s220
      %s222 = smul.u32 32, %s15
      %v224 = vld [vmem:[%s209] sm:$0xf]
      %v225 = vld [vmem:[%s209 + $0x4] sm:$0xf]
      %v226 = vld [vmem:[%s209 + $0x8] sm:$0xf]
      %v227 = vld [vmem:[%s209 + $0xc] sm:$0xf]
      %v228 = vld [vmem:[%s209 + $0x10] sm:$0xf]
      %v229 = vld [vmem:[%s209 + $0x14] sm:$0xf]
      %v230 = vld [vmem:[%s209 + $0x18] sm:$0xf]
      %v231 = vld [vmem:[%s209 + $0x1c] sm:$0xf]
      %v232 = vld [vmem:[%s209 + $0x20] sm:$0xf]
      %v233 = vld [vmem:[%s209 + $0x24] sm:$0xf]
      %v234 = vld [vmem:[%s209 + $0x28] sm:$0xf]
      %v235 = vld [vmem:[%s209 + $0x2c] sm:$0xf]
      %v236 = vld [vmem:[%s209 + $0x30] sm:$0xf]
      %v237 = vld [vmem:[%s209 + $0x34] sm:$0xf]
      %v238 = vld [vmem:[%s209 + $0x38] sm:$0xf]
      %v239 = vld [vmem:[%s209 + $0x3c] sm:$0xf]
      %v240 = vld [vmem:[%s209 + $0x40] sm:$0xf]
      %v241 = vld [vmem:[%s209 + $0x44] sm:$0xf]
      %v242 = vld [vmem:[%s209 + $0x48] sm:$0xf]
      %v243 = vld [vmem:[%s209 + $0x4c] sm:$0xf]
      %v244 = vld [vmem:[%s209 + $0x50] sm:$0xf]
      %v245 = vld [vmem:[%s209 + $0x54] sm:$0xf]
      %v246 = vld [vmem:[%s209 + $0x58] sm:$0xf]
      %v247 = vld [vmem:[%s209 + $0x5c] sm:$0xf]
      %v248 = vld [vmem:[%s209 + $0x60] sm:$0xf]
      %v249 = vld [vmem:[%s209 + $0x64] sm:$0xf]
      %v250 = vld [vmem:[%s209 + $0x68] sm:$0xf]
      %v251 = vld [vmem:[%s209 + $0x6c] sm:$0xf]
      %v252 = vld [vmem:[%s209 + $0x70] sm:$0xf]
      %v253 = vld [vmem:[%s209 + $0x74] sm:$0xf]
      %v254 = vld [vmem:[%s209 + $0x78] sm:$0xf]
      %v255 = vld [vmem:[%s209 + $0x7c] sm:$0xf]
      %v256 = vld [vmem:[%s1] sm:$0xf]
      %v257 = vld [vmem:[%s1 + $0x4] sm:$0xf]
      %v258 = vld [vmem:[%s1 + $0x8] sm:$0xf]
      %v259 = vld [vmem:[%s1 + $0xc] sm:$0xf]
      %v260 = vld [vmem:[%s1 + $0x10] sm:$0xf]
      %v261 = vld [vmem:[%s1 + $0x14] sm:$0xf]
      %v262 = vld [vmem:[%s1 + $0x18] sm:$0xf]
      %v263 = vld [vmem:[%s1 + $0x1c] sm:$0xf]
      %v264 = vld [vmem:[%s1 + $0x20] sm:$0xf]
      %v265 = vld [vmem:[%s1 + $0x24] sm:$0xf]
      %v266 = vld [vmem:[%s1 + $0x28] sm:$0xf]
      %v267 = vld [vmem:[%s1 + $0x2c] sm:$0xf]
      %v268 = vld [vmem:[%s1 + $0x30] sm:$0xf]
      %v269 = vld [vmem:[%s1 + $0x34] sm:$0xf]
      %v270 = vld [vmem:[%s1 + $0x38] sm:$0xf]
      %v271 = vld [vmem:[%s1 + $0x3c] sm:$0xf]
      %v272 = vld [vmem:[%s2] sm:$0x1]
      %v274 = vlaneseq
      %v275 = vshrl.u32 %v274, 7
      %v276 = vsub.s32 0, %v275
      %v277 = vrot.slane %v272, %v276
      %v311 = vunpack.c.l.b16 %v224
      %v312 = vunpack.c.l.b16 %v225
      %v313 = vunpack.c.l.b16 %v226
      %v314 = vunpack.c.l.b16 %v227
      %v315 = vunpack.c.l.b16 %v228
      %v316 = vunpack.c.l.b16 %v229
      %v317 = vunpack.c.l.b16 %v230
      %v318 = vunpack.c.l.b16 %v231
      %v319 = vunpack.c.l.b16 %v232
      %v320 = vunpack.c.l.b16 %v233
      %v321 = vunpack.c.l.b16 %v234
      %v322 = vunpack.c.l.b16 %v235
      %v323 = vunpack.c.l.b16 %v236
      %v324 = vunpack.c.l.b16 %v237
      %v325 = vunpack.c.l.b16 %v238
      %v326 = vunpack.c.l.b16 %v239
      %v327 = vunpack.c.l.b16 %v240
      %v328 = vunpack.c.l.b16 %v241
      %v329 = vunpack.c.l.b16 %v242
      %v330 = vunpack.c.l.b16 %v243
      %v331 = vunpack.c.l.b16 %v244
      %v332 = vunpack.c.l.b16 %v245
      %v333 = vunpack.c.l.b16 %v246
      %v334 = vunpack.c.l.b16 %v247
      %v335 = vunpack.c.l.b16 %v248
      %v336 = vunpack.c.l.b16 %v249
      %v337 = vunpack.c.l.b16 %v250
      %v338 = vunpack.c.l.b16 %v251
      %v339 = vunpack.c.l.b16 %v252
      %v340 = vunpack.c.l.b16 %v253
      %v341 = vunpack.c.l.b16 %v254
      %v342 = vunpack.c.l.b16 %v255
      %v343 = vpack.c.b16 %v312, %v311
      %v344 = vpack.c.b16 %v314, %v313
      %v345 = vpack.c.b16 %v316, %v315
      %v346 = vpack.c.b16 %v318, %v317
      %v347 = vpack.c.b16 %v320, %v319
      %v348 = vpack.c.b16 %v322, %v321
      %v349 = vpack.c.b16 %v324, %v323
      %v350 = vpack.c.b16 %v326, %v325
      %v351 = vpack.c.b16 %v328, %v327
      %v352 = vpack.c.b16 %v330, %v329
      %v353 = vpack.c.b16 %v332, %v331
      %v354 = vpack.c.b16 %v334, %v333
      %v355 = vpack.c.b16 %v336, %v335
      %v356 = vpack.c.b16 %v338, %v337
      %v357 = vpack.c.b16 %v340, %v339
      %v358 = vpack.c.b16 %v342, %v341
      %v391 = vunpack.c.l.b16 %v256
      %v392 = vunpack.c.l.b16 %v257
      %v393 = vunpack.c.l.b16 %v258
      %v394 = vunpack.c.l.b16 %v259
      %v395 = vunpack.c.l.b16 %v260
      %v396 = vunpack.c.l.b16 %v261
      %v397 = vunpack.c.l.b16 %v262
      %v398 = vunpack.c.l.b16 %v263
      %v399 = vunpack.c.l.b16 %v264
      %v400 = vunpack.c.l.b16 %v265
      %v401 = vunpack.c.l.b16 %v266
      %v402 = vunpack.c.l.b16 %v267
      %v403 = vunpack.c.l.b16 %v268
      %v404 = vunpack.c.l.b16 %v269
      %v405 = vunpack.c.l.b16 %v270
      %v406 = vunpack.c.l.b16 %v271
      %v407 = vpack.c.b16 %v392, %v391
      %v408 = vpack.c.b16 %v394, %v393
      %v409 = vpack.c.b16 %v396, %v395
      %v410 = vpack.c.b16 %v398, %v397
      %v411 = vpack.c.b16 %v400, %v399
      %v412 = vpack.c.b16 %v402, %v401
      %v413 = vpack.c.b16 %v404, %v403
      %v414 = vpack.c.b16 %v406, %v405
      %423 = vmatprep.subr.bf16.mxu0 0
      %424 = vmatpush1.bf16.msra.mxu0 %v407
      %425 = vmatprep.subr.bf16.mxu0 0
      %426 = vmatpush1.bf16.msra.mxu0 %v408
      %427 = vmatprep.subr.bf16.mxu0 0
      %428 = vmatpush1.bf16.msra.mxu0 %v409
      %429 = vmatprep.subr.bf16.mxu0 0
      %430 = vmatpush1.bf16.msra.mxu0 %v410
      %431 = vmatprep.subr.bf16.mxu0 0
      %432 = vmatpush1.bf16.msra.mxu0 %v411
      %433 = vmatprep.subr.bf16.mxu0 0
      %434 = vmatpush1.bf16.msra.mxu0 %v412
      %435 = vmatprep.subr.bf16.mxu0 0
      %436 = vmatpush1.bf16.msra.mxu0 %v413
      %437 = vmatprep.subr.bf16.mxu0 0
      %438 = vmatpush1.bf16.msra.mxu0 %v414
      %439 = vmatprep.subr.bf16.mxu0 0
      %440 = vmatpush1.bf16.msra.mxu0 0
      %441 = vmatprep.subr.bf16.mxu0 0
      %442 = vmatpush1.bf16.msra.mxu0 0
      %443 = vmatprep.subr.bf16.mxu0 0
      %444 = vmatpush1.bf16.msra.mxu0 0
      %445 = vmatprep.subr.bf16.mxu0 0
      %446 = vmatpush1.bf16.msra.mxu0 0
      %447 = vmatprep.subr.bf16.mxu0 0
      %448 = vmatpush1.bf16.msra.mxu0 0
      %449 = vmatprep.subr.bf16.mxu0 0
      %450 = vmatpush1.bf16.msra.mxu0 0
      %451 = vmatprep.subr.bf16.mxu0 0
      %452 = vmatpush1.bf16.msra.mxu0 0
      %453 = vmatprep.subr.bf16.mxu0 0
      %454 = vmatpush1.bf16.msra.mxu0 0
      %455 = vmatprep.mubr.bf16.mxu0 0
      %456 = vmatmul.mubr.bf16.gmra.mrb[0].mxu0 %v343
      %v457 = vpop.f32.mrb[0].mxu0
      %v458 = vadd.f32 %v277, %v457
      %v459 = vpop.f32.mrb[0].mxu0
      %v460 = vpop.f32.mrb[0].mxu0
      %v461 = vadd.f32 %v277, %v460
      %v462 = vpop.f32.mrb[0].mxu0
      %463 = vmatprep.mubr.bf16.mxu0 0
      %464 = vmatmul.mubr.bf16.gmra.mrb[0].mxu0 %v344
      %v465 = vpop.f32.mrb[0].mxu0
      %v466 = vadd.f32 %v277, %v465
      %v467 = vpop.f32.mrb[0].mxu0
      %v468 = vpop.f32.mrb[0].mxu0
      %v469 = vadd.f32 %v277, %v468
      %v470 = vpop.f32.mrb[0].mxu0
      %471 = vmatprep.mubr.bf16.mxu0 0
      %472 = vmatmul.mubr.bf16.gmra.mrb[0].mxu0 %v345
      %v473 = vpop.f32.mrb[0].mxu0
      %v474 = vadd.f32 %v277, %v473
      %v475 = vpop.f32.mrb[0].mxu0
      %v476 = vpop.f32.mrb[0].mxu0
      %v477 = vadd.f32 %v277, %v476
      %v478 = vpop.f32.mrb[0].mxu0
      %479 = vmatprep.mubr.bf16.mxu0 0
      %480 = vmatmul.mubr.bf16.gmra.mrb[0].mxu0 %v346
      %v481 = vpop.f32.mrb[0].mxu0
      %v482 = vadd.f32 %v277, %v481
      %v483 = vpop.f32.mrb[0].mxu0
      %v484 = vpop.f32.mrb[0].mxu0
      %v485 = vadd.f32 %v277, %v484
      %v486 = vpop.f32.mrb[0].mxu0
      %487 = vmatprep.mubr.bf16.mxu0 0
      %488 = vmatmul.mubr.bf16.gmra.mrb[0].mxu0 %v347
      %v489 = vpop.f32.mrb[0].mxu0
      %v490 = vadd.f32 %v277, %v489
      %v491 = vpop.f32.mrb[0].mxu0
      %v492 = vpop.f32.mrb[0].mxu0
      %v493 = vadd.f32 %v277, %v492
      %v494 = vpop.f32.mrb[0].mxu0
      %495 = vmatprep.mubr.bf16.mxu0 0
      %496 = vmatmul.mubr.bf16.gmra.mrb[0].mxu0 %v348
      %v497 = vpop.f32.mrb[0].mxu0
      %v498 = vadd.f32 %v277, %v497
      %v499 = vpop.f32.mrb[0].mxu0
      %v500 = vpop.f32.mrb[0].mxu0
      %v501 = vadd.f32 %v277, %v500
      %v502 = vpop.f32.mrb[0].mxu0
      %503 = vmatprep.mubr.bf16.mxu0 0
      %504 = vmatmul.mubr.bf16.gmra.mrb[0].mxu0 %v349
      %v505 = vpop.f32.mrb[0].mxu0
      %v506 = vadd.f32 %v277, %v505
      %v507 = vpop.f32.mrb[0].mxu0
      %v508 = vpop.f32.mrb[0].mxu0
      %v509 = vadd.f32 %v277, %v508
      %v510 = vpop.f32.mrb[0].mxu0
      %511 = vmatprep.mubr.bf16.mxu0 0
      %512 = vmatmul.mubr.bf16.gmra.mrb[0].mxu0 %v350
      %v513 = vpop.f32.mrb[0].mxu0
      %v514 = vadd.f32 %v277, %v513
      %v515 = vpop.f32.mrb[0].mxu0
      %v516 = vpop.f32.mrb[0].mxu0
      %v517 = vadd.f32 %v277, %v516
      %v518 = vpop.f32.mrb[0].mxu0
      %519 = vmatprep.mubr.bf16.mxu0 0
      %520 = vmatmul.mubr.bf16.gmra.mrb[0].mxu0 %v351
      %v521 = vpop.f32.mrb[0].mxu0
      %v522 = vadd.f32 %v277, %v521
      %v523 = vpop.f32.mrb[0].mxu0
      %v524 = vpop.f32.mrb[0].mxu0
      %v525 = vadd.f32 %v277, %v524
      %v526 = vpop.f32.mrb[0].mxu0
      %527 = vmatprep.mubr.bf16.mxu0 0
      %528 = vmatmul.mubr.bf16.gmra.mrb[0].mxu0 %v352
      %v529 = vpop.f32.mrb[0].mxu0
      %v530 = vadd.f32 %v277, %v529
      %v531 = vpop.f32.mrb[0].mxu0
      %v532 = vpop.f32.mrb[0].mxu0
      %v533 = vadd.f32 %v277, %v532
      %v534 = vpop.f32.mrb[0].mxu0
      %535 = vmatprep.mubr.bf16.mxu0 0
      %536 = vmatmul.mubr.bf16.gmra.mrb[0].mxu0 %v353
      %v537 = vpop.f32.mrb[0].mxu0
      %v538 = vadd.f32 %v277, %v537
      %v539 = vpop.f32.mrb[0].mxu0
      %v540 = vpop.f32.mrb[0].mxu0
      %v541 = vadd.f32 %v277, %v540
      %v542 = vpop.f32.mrb[0].mxu0
      %543 = vmatprep.mubr.bf16.mxu0 0
      %544 = vmatmul.mubr.bf16.gmra.mrb[0].mxu0 %v354
      %v545 = vpop.f32.mrb[0].mxu0
      %v546 = vadd.f32 %v277, %v545
      %v547 = vpop.f32.mrb[0].mxu0
      %v548 = vpop.f32.mrb[0].mxu0
      %v549 = vadd.f32 %v277, %v548
      %v550 = vpop.f32.mrb[0].mxu0
      %551 = vmatprep.mubr.bf16.mxu0 0
      %552 = vmatmul.mubr.bf16.gmra.mrb[0].mxu0 %v355
      %v553 = vpop.f32.mrb[0].mxu0
      %v554 = vadd.f32 %v277, %v553
      %v555 = vpop.f32.mrb[0].mxu0
      %v556 = vpop.f32.mrb[0].mxu0
      %v557 = vadd.f32 %v277, %v556
      %v558 = vpop.f32.mrb[0].mxu0
      %559 = vmatprep.mubr.bf16.mxu0 0
      %560 = vmatmul.mubr.bf16.gmra.mrb[0].mxu0 %v356
      %v561 = vpop.f32.mrb[0].mxu0
      %v562 = vadd.f32 %v277, %v561
      %v563 = vpop.f32.mrb[0].mxu0
      %v564 = vpop.f32.mrb[0].mxu0
      %v565 = vadd.f32 %v277, %v564
      %v566 = vpop.f32.mrb[0].mxu0
      %567 = vmatprep.mubr.bf16.mxu0 0
      %568 = vmatmul.mubr.bf16.gmra.mrb[0].mxu0 %v357
      %v569 = vpop.f32.mrb[0].mxu0
      %v570 = vadd.f32 %v277, %v569
      %v571 = vpop.f32.mrb[0].mxu0
      %v572 = vpop.f32.mrb[0].mxu0
      %v573 = vadd.f32 %v277, %v572
      %v574 = vpop.f32.mrb[0].mxu0
      %575 = vmatprep.mubr.bf16.mxu0 0
      %576 = vmatmul.mubr.bf16.gmra.mrb[0].mxu0 %v358
      %v577 = vpop.f32.mrb[0].mxu0
      %v578 = vadd.f32 %v277, %v577
      %v579 = vpop.f32.mrb[0].mxu0
      %v580 = vpop.f32.mrb[0].mxu0
      %v581 = vadd.f32 %v277, %v580
      %v582 = vpop.f32.mrb[0].mxu0
      %583 = vdwg.mxu0
      %v584 = vld [vmem:[%s215] sm:$0xf]
      %v585 = vld [vmem:[%s215 + $0x4] sm:$0xf]
      %v586 = vld [vmem:[%s215 + $0x8] sm:$0xf]
      %v587 = vld [vmem:[%s215 + $0xc] sm:$0xf]
      %v588 = vld [vmem:[%s215 + $0x10] sm:$0xf]
      %v589 = vld [vmem:[%s215 + $0x14] sm:$0xf]
      %v590 = vld [vmem:[%s215 + $0x18] sm:$0xf]
      %v591 = vld [vmem:[%s215 + $0x1c] sm:$0xf]
      %v592 = vld [vmem:[%s215 + $0x20] sm:$0xf]
      %v593 = vld [vmem:[%s215 + $0x24] sm:$0xf]
      %v594 = vld [vmem:[%s215 + $0x28] sm:$0xf]
      %v595 = vld [vmem:[%s215 + $0x2c] sm:$0xf]
      %v596 = vld [vmem:[%s215 + $0x30] sm:$0xf]
      %v597 = vld [vmem:[%s215 + $0x34] sm:$0xf]
      %v598 = vld [vmem:[%s215 + $0x38] sm:$0xf]
      %v599 = vld [vmem:[%s215 + $0x3c] sm:$0xf]
      %v600 = vld [vmem:[%s215 + $0x40] sm:$0xf]
      %v601 = vld [vmem:[%s215 + $0x44] sm:$0xf]
      %v602 = vld [vmem:[%s215 + $0x48] sm:$0xf]
      %v603 = vld [vmem:[%s215 + $0x4c] sm:$0xf]
      %v604 = vld [vmem:[%s215 + $0x50] sm:$0xf]
      %v605 = vld [vmem:[%s215 + $0x54] sm:$0xf]
      %v606 = vld [vmem:[%s215 + $0x58] sm:$0xf]
      %v607 = vld [vmem:[%s215 + $0x5c] sm:$0xf]
      %v608 = vld [vmem:[%s215 + $0x60] sm:$0xf]
      %v609 = vld [vmem:[%s215 + $0x64] sm:$0xf]
      %v610 = vld [vmem:[%s215 + $0x68] sm:$0xf]
      %v611 = vld [vmem:[%s215 + $0x6c] sm:$0xf]
      %v612 = vld [vmem:[%s215 + $0x70] sm:$0xf]
      %v613 = vld [vmem:[%s215 + $0x74] sm:$0xf]
      %v614 = vld [vmem:[%s215 + $0x78] sm:$0xf]
      %v615 = vld [vmem:[%s215 + $0x7c] sm:$0xf]
      %v616 = vunpack.c.l.bf16 %v584
      %v617 = vunpack.c.l.bf16 %v585
      %v618 = vunpack.c.l.bf16 %v586
      %v619 = vunpack.c.l.bf16 %v587
      %v620 = vunpack.c.l.bf16 %v588
      %v621 = vunpack.c.l.bf16 %v589
      %v622 = vunpack.c.l.bf16 %v590
      %v623 = vunpack.c.l.bf16 %v591
      %v624 = vunpack.c.l.bf16 %v592
      %v625 = vunpack.c.l.bf16 %v593
      %v626 = vunpack.c.l.bf16 %v594
      %v627 = vunpack.c.l.bf16 %v595
      %v628 = vunpack.c.l.bf16 %v596
      %v629 = vunpack.c.l.bf16 %v597
      %v630 = vunpack.c.l.bf16 %v598
      %v631 = vunpack.c.l.bf16 %v599
      %v632 = vunpack.c.l.bf16 %v600
      %v633 = vunpack.c.l.bf16 %v601
      %v634 = vunpack.c.l.bf16 %v602
      %v635 = vunpack.c.l.bf16 %v603
      %v636 = vunpack.c.l.bf16 %v604
      %v637 = vunpack.c.l.bf16 %v605
      %v638 = vunpack.c.l.bf16 %v606
      %v639 = vunpack.c.l.bf16 %v607
      %v640 = vunpack.c.l.bf16 %v608
      %v641 = vunpack.c.l.bf16 %v609
      %v642 = vunpack.c.l.bf16 %v610
      %v643 = vunpack.c.l.bf16 %v611
      %v644 = vunpack.c.l.bf16 %v612
      %v645 = vunpack.c.l.bf16 %v613
      %v646 = vunpack.c.l.bf16 %v614
      %v647 = vunpack.c.l.bf16 %v615
      %v648 = vadd.f32 %v458, %v616
      %v649 = vadd.f32 %v461, %v617
      %v650 = vadd.f32 %v466, %v618
      %v651 = vadd.f32 %v469, %v619
      %v652 = vadd.f32 %v474, %v620
      %v653 = vadd.f32 %v477, %v621
      %v654 = vadd.f32 %v482, %v622
      %v655 = vadd.f32 %v485, %v623
      %v656 = vadd.f32 %v490, %v624
      %v657 = vadd.f32 %v493, %v625
      %v658 = vadd.f32 %v498, %v626
      %v659 = vadd.f32 %v501, %v627
      %v660 = vadd.f32 %v506, %v628
      %v661 = vadd.f32 %v509, %v629
      %v662 = vadd.f32 %v514, %v630
      %v663 = vadd.f32 %v517, %v631
      %v664 = vadd.f32 %v522, %v632
      %v665 = vadd.f32 %v525, %v633
      %v666 = vadd.f32 %v530, %v634
      %v667 = vadd.f32 %v533, %v635
      %v668 = vadd.f32 %v538, %v636
      %v669 = vadd.f32 %v541, %v637
      %v670 = vadd.f32 %v546, %v638
      %v671 = vadd.f32 %v549, %v639
      %v672 = vadd.f32 %v554, %v640
      %v673 = vadd.f32 %v557, %v641
      %v674 = vadd.f32 %v562, %v642
      %v675 = vadd.f32 %v565, %v643
      %v676 = vadd.f32 %v570, %v644
      %v677 = vadd.f32 %v573, %v645
      %v678 = vadd.f32 %v578, %v646
      %v679 = vadd.f32 %v581, %v647
      %v680 = vmax.f32 %v648, 0.0
      %v681 = vmax.f32 %v649, 0.0
      %v682 = vmax.f32 %v650, 0.0
      %v683 = vmax.f32 %v651, 0.0
      %v684 = vmax.f32 %v652, 0.0
      %v685 = vmax.f32 %v653, 0.0
      %v686 = vmax.f32 %v654, 0.0
      %v687 = vmax.f32 %v655, 0.0
      %v688 = vmax.f32 %v656, 0.0
      %v689 = vmax.f32 %v657, 0.0
      %v690 = vmax.f32 %v658, 0.0
      %v691 = vmax.f32 %v659, 0.0
      %v692 = vmax.f32 %v660, 0.0
      %v693 = vmax.f32 %v661, 0.0
      %v694 = vmax.f32 %v662, 0.0
      %v695 = vmax.f32 %v663, 0.0
      %v696 = vmax.f32 %v664, 0.0
      %v697 = vmax.f32 %v665, 0.0
      %v698 = vmax.f32 %v666, 0.0
      %v699 = vmax.f32 %v667, 0.0
      %v700 = vmax.f32 %v668, 0.0
      %v701 = vmax.f32 %v669, 0.0
      %v702 = vmax.f32 %v670, 0.0
      %v703 = vmax.f32 %v671, 0.0
      %v704 = vmax.f32 %v672, 0.0
      %v705 = vmax.f32 %v673, 0.0
      %v706 = vmax.f32 %v674, 0.0
      %v707 = vmax.f32 %v675, 0.0
      %v708 = vmax.f32 %v676, 0.0
      %v709 = vmax.f32 %v677, 0.0
      %v710 = vmax.f32 %v678, 0.0
      %v711 = vmax.f32 %v679, 0.0
      %712 = vst [vmem:[%s221] sm:$0xff] %v680
      %713 = vst [vmem:[%s221 + $0x8] sm:$0xff] %v681
      %714 = vst [vmem:[%s221 + $0x10] sm:$0xff] %v682
      %715 = vst [vmem:[%s221 + $0x18] sm:$0xff] %v683
      %716 = vst [vmem:[%s221 + $0x20] sm:$0xff] %v684
      %717 = vst [vmem:[%s221 + $0x28] sm:$0xff] %v685
      %718 = vst [vmem:[%s221 + $0x30] sm:$0xff] %v686
      %719 = vst [vmem:[%s221 + $0x38] sm:$0xff] %v687
      %720 = vst [vmem:[%s221 + $0x40] sm:$0xff] %v688
      %721 = vst [vmem:[%s221 + $0x48] sm:$0xff] %v689
      %722 = vst [vmem:[%s221 + $0x50] sm:$0xff] %v690
      %723 = vst [vmem:[%s221 + $0x58] sm:$0xff] %v691
      %724 = vst [vmem:[%s221 + $0x60] sm:$0xff] %v692
      %725 = vst [vmem:[%s221 + $0x68] sm:$0xff] %v693
      %726 = vst [vmem:[%s221 + $0x70] sm:$0xff] %v694
      %727 = vst [vmem:[%s221 + $0x78] sm:$0xff] %v695
      %728 = vst [vmem:[%s221 + $0x80] sm:$0xff] %v696
      %729 = vst [vmem:[%s221 + $0x88] sm:$0xff] %v697
      %730 = vst [vmem:[%s221 + $0x90] sm:$0xff] %v698
      %731 = vst [vmem:[%s221 + $0x98] sm:$0xff] %v699
      %732 = vst [vmem:[%s221 + $0xa0] sm:$0xff] %v700
      %733 = vst [vmem:[%s221 + $0xa8] sm:$0xff] %v701
      %734 = vst [vmem:[%s221 + $0xb0] sm:$0xff] %v702
      %735 = vst [vmem:[%s221 + $0xb8] sm:$0xff] %v703
      %736 = vst [vmem:[%s221 + $0xc0] sm:$0xff] %v704
      %737 = vst [vmem:[%s221 + $0xc8] sm:$0xff] %v705
      %738 = vst [vmem:[%s221 + $0xd0] sm:$0xff] %v706
      %739 = vst [vmem:[%s221 + $0xd8] sm:$0xff] %v707
      %740 = vst [vmem:[%s221 + $0xe0] sm:$0xff] %v708
      %741 = vst [vmem:[%s221 + $0xe8] sm:$0xff] %v709
      %742 = vst [vmem:[%s221 + $0xf0] sm:$0xff] %v710
      %743 = vst [vmem:[%s221 + $0xf8] sm:$0xff] %v711
      %s744 = smul.u32 32, %s15
      %p745 = scmp.lt.s32.totalorder %s744, 63
      %s746 = scalar_select %p745, %s744, 63
      %s747 = smul.addr %s746, 8
      %s748 = scalar_lea.vmem %s4, %s747
      // Predicated region
      $region37: #{bottleneck_forward.7} parent=35 // pred_check
        %p749 = pneg %p127
      $region38: #{bottleneck_forward.7} parent=35 // pred_check_branch
        %751 = sbr.rel (%p749) target = $region40
      $region39: #{bottleneck_forward.7} parent=35 // pred_region
        %s752 = smul.u32 32, %s15
      $region40: #{bottleneck_forward.7} parent=35 // pred_fallthru
        _
    $region36: #{bottleneck_forward.7} parent=5 // pred_fallthru
      _
    %p753 = scmp.le.s32.totalorder 2, %s10
    // Predicated region
    $region41: #{bottleneck_forward.7} parent=5 // pred_check
      %p754 = pneg %p753
    $region42: #{bottleneck_forward.7} parent=5 // pred_check_branch
      %756 = sbr.rel (%p754) target = $region44
    $region43: #{bottleneck_forward.7} parent=5 // pred_region
      %s757 = ssub.s32 %s10, 2
      // Predicated region
      $region45: #{bottleneck_forward.7} parent=43 // pred_check
        %p758 = pneg %p133
      $region46: #{bottleneck_forward.7} parent=43 // pred_check_branch
        %760 = sbr.rel (%p758) target = $region48
      $region47: #{bottleneck_forward.7} parent=43 // pred_region
        %s761 = smul.u32 32, %s16
        %p762 = scmp.lt.s32.totalorder %s761, 63
        %s763 = scalar_select %p762, %s761, 63
        %s764 = smul.addr %s763, 8
        %s765 = scalar_lea.vmem %s4, %s764
      $region48: #{bottleneck_forward.7} parent=43 // pred_fallthru
        _
    $region44: #{bottleneck_forward.7} parent=5 // pred_fallthru
      _
  $region6: #{bottleneck_forward.7} parent=0 // loop_footer
    %s14 = sadd.s32 1, %s10
  $region7: #{bottleneck_forward.7} parent=0 // loop_footer_branch
    %9 = sbr.rel target = $region3
  $region8: #{bottleneck_forward.7} parent=0 // loop_exit
    _

// kernel: bottleneck_forward.5
$region0: #{bottleneck_forward.5}
  #allocation0 [shape = 'u32[]', space=smem, size = 0x4, offset = 0x4, fixed_abs, tag = 'smem constant byte address 0x4 - core index']
  #allocation1 [shape = 'u32[144,128]{1,0:T(1,128)}', space=vmem, size = 0x12000, scoped, tag = 'internal scratch']
  %s0 = inlined_call_operand.vmem [shape: bf16[2,18,18,128], index: 0, kind: input, shape index: {}]
  %s1 = inlined_call_operand.vmem [shape: bf16[9,128,128], index: 1, kind: input, shape index: {}]
  %s2 = inlined_call_operand.vmem [shape: f32[1,128], index: 2, kind: input, shape index: {}]
  %s3 = inlined_call_operand.vmem [shape: bf16[2,16,16,128], index: 3, kind: output, shape index: {}]
  %s4 = sld [smem:[#allocation0]]
  $region45: #{bottleneck_forward.5} parent=0
    _
  %s6 = ssub.s32 1, %s4
  %s7 = scalar_select 0, %s6, %s4
  loop: start=0, step=1, limit=4
  $region2: #{bottleneck_forward.5} parent=0 // loop_pre_header
    _
  $region3: #{bottleneck_forward.5} parent=0 // loop_header
    %s9 = sphi 0, %s13
    %p10 = scmp.ge.s32.totalorder %s9, 4
    %s19 = sphi 0, %s21
    %s22 = sphi 0, %s19
    %s23 = sphi 0, %s22
    %s39 = sphi 0, %s23
    %s43 = sphi 0, %s43
    %s45 = sphi 0, %s43
    %s46 = sphi 0, %s45
    %s60 = sphi 0, %s46
    %s64 = sphi 0, %s64
    %s66 = sphi 0, %s64
    %s67 = sphi 0, %s66
    %s81 = sphi 0, %s67
    %s87 = sphi 0, %s89
    %s90 = sphi 0, %s87
    %s91 = sphi 0, %s90
    %s107 = sphi 0, %s91
  $region4: #{bottleneck_forward.5} parent=0 // loop_header_branch
    %12 = sbr.rel (%p10) target = $region8
  $region5: #{bottleneck_forward.5} parent=0 // loop_body
    %s14 = ssub.s32 %s9, 1
    %s15 = ssub.s32 %s9, 2
    %s16 = sadd.s32 %s9, 1
    %s17 = ssub.s32 %s9, %s16
    %p18 = scmp.eq.s32.totalorder %s17, 0
    %s20 = sadd.s32 %s19, 1
    %s21 = scalar_select %p18, %s19, %s20
    %p24 = pneg %p18
    %p25 = scmp.eq.s32.totalorder %s9, 1
    %p26 = por %p24, %p25
    %p27 = scmp.ne.s32.totalorder %s19, %s22
    %p28 = scmp.eq.s32.totalorder %s9, 0
    %p29 = por %p27, %p28
    %p30 = scmp.ne.s32.totalorder %s19, %s22
    %p31 = scmp.eq.s32.totalorder %s14, 1
    %p32 = por %p30, %p31
    %p33 = scmp.ne.s32.totalorder %s22, %s23
    %p34 = scmp.eq.s32.totalorder %s14, 0
    %p35 = por %p33, %p34
    %p36 = scmp.ne.s32.totalorder %s22, %s23
    %p37 = scmp.eq.s32.totalorder %s15, 1
    %p38 = por %p36, %p37
    %p40 = scmp.ne.s32.totalorder %s23, %s39
    %p41 = scmp.eq.s32.totalorder %s15, 0
    %p42 = por %p40, %p41
    %s44 = sadd.s32 %s43, 1
    %p47 = scmp.eq.s32.totalorder %s9, 1
    %p48 = scmp.ne.s32.totalorder %s43, %s45
    %p49 = scmp.eq.s32.totalorder %s9, 0
    %p50 = por %p48, %p49
    %p51 = scmp.ne.s32.totalorder %s43, %s45
    %p52 = scmp.eq.s32.totalorder %s14, 1
    %p53 = por %p51, %p52
    %p54 = scmp.ne.s32.totalorder %s45, %s46
    %p55 = scmp.eq.s32.totalorder %s14, 0
    %p56 = por %p54, %p55
    %p57 = scmp.ne.s32.totalorder %s45, %s46
    %p58 = scmp.eq.s32.totalorder %s15, 1
    %p59 = por %p57, %p58
    %p61 = scmp.ne.s32.totalorder %s46, %s60
    %p62 = scmp.eq.s32.totalorder %s15, 0
    %p63 = por %p61, %p62
    %s65 = sadd.s32 %s64, 1
    %p68 = scmp.eq.s32.totalorder %s9, 1
    %p69 = scmp.ne.s32.totalorder %s64, %s66
    %p70 = scmp.eq.s32.totalorder %s9, 0
    %p71 = por %p69, %p70
    %p72 = scmp.ne.s32.totalorder %s64, %s66
    %p73 = scmp.eq.s32.totalorder %s14, 1
    %p74 = por %p72, %p73
    %p75 = scmp.ne.s32.totalorder %s66, %s67
    %p76 = scmp.eq.s32.totalorder %s14, 0
    %p77 = por %p75, %p76
    %p78 = scmp.ne.s32.totalorder %s66, %s67
    %p79 = scmp.eq.s32.totalorder %s15, 1
    %p80 = por %p78, %p79
    %p82 = scmp.ne.s32.totalorder %s67, %s81
    %p83 = scmp.eq.s32.totalorder %s15, 0
    %p84 = por %p82, %p83
    %s85 = ssub.s32 %s9, %s16
    %p86 = scmp.eq.s32.totalorder %s85, 0
    %s88 = sadd.s32 %s87, 1
    %s89 = scalar_select %p86, %s87, %s88
    %p92 = pneg %p86
    %p93 = scmp.eq.s32.totalorder %s9, 1
    %p94 = por %p92, %p93
    %p95 = scmp.ne.s32.totalorder %s87, %s90
    %p96 = scmp.eq.s32.totalorder %s9, 0
    %p97 = por %p95, %p96
    %p98 = scmp.ne.s32.totalorder %s87, %s90
    %p99 = scmp.eq.s32.totalorder %s14, 1
    %p100 = por %p98, %p99
    %p101 = scmp.ne.s32.totalorder %s90, %s91
    %p102 = scmp.eq.s32.totalorder %s14, 0
    %p103 = por %p101, %p102
    %p104 = scmp.ne.s32.totalorder %s90, %s91
    %p105 = scmp.eq.s32.totalorder %s15, 1
    %p106 = por %p104, %p105
    %p108 = scmp.ne.s32.totalorder %s91, %s107
    %p109 = scmp.eq.s32.totalorder %s15, 0
    %p110 = por %p108, %p109
    %p111 = scmp.le.s32.totalorder 1, %s9
    %p112 = scmp.lt.s32.totalorder %s9, 3
    %p113 = pnand %p111, %p112
    %p114 = pneg %p113
    // Predicated region
    $region9: #{bottleneck_forward.5} parent=5 // pred_check
      _
    $region10: #{bottleneck_forward.5} parent=5 // pred_check_branch
      %116 = sbr.rel (%p113) target = $region12
    $region11: #{bottleneck_forward.5} parent=5 // pred_region
      %s117 = ssub.s32 %s9, 1
      // Predicated region
      $region13: #{bottleneck_forward.5} parent=11 // pred_check
        %p118 = pneg %p56
      $region14: #{bottleneck_forward.5} parent=11 // pred_check_branch
        %120 = sbr.rel (%p118) target = $region16
      $region15: #{bottleneck_forward.5} parent=11 // pred_region
        _
      $region16: #{bottleneck_forward.5} parent=11 // pred_fallthru
        _
      // Predicated region
      $region17: #{bottleneck_forward.5} parent=11 // pred_check
        %p121 = pneg %p77
      $region18: #{bottleneck_forward.5} parent=11 // pred_check_branch
        %123 = sbr.rel (%p121) target = $region20
      $region19: #{bottleneck_forward.5} parent=11 // pred_region
        _
      $region20: #{bottleneck_forward.5} parent=11 // pred_fallthru
        _
    $region12: #{bottleneck_forward.5} parent=5 // pred_fallthru
      _
    %p124 = scmp.lt.s32.totalorder %s9, 2
    // Predicated region
    $region21: #{bottleneck_forward.5} parent=5 // pred_check
      %p125 = pneg %p124
    $region22: #{bottleneck_forward.5} parent=5 // pred_check_branch
      %127 = sbr.rel (%p125) target = $region24
    $region23: #{bottleneck_forward.5} parent=5 // pred_region
      // Predicated region
      $region25: #{bottleneck_forward.5} parent=23 // pred_check
        %p128 = pneg %p29
      $region26: #{bottleneck_forward.5} parent=23 // pred_check_branch
        %130 = sbr.rel (%p128) target = $region28
      $region27: #{bottleneck_forward.5} parent=23 // pred_region
        %p131 = scmp.lt.s32.totalorder %s9, 1
        %s132 = scalar_select %p131, %s9, 1
        %s133 = smul.addr %s132, 54
        %s134 = smul.addr %s133, 4
        %s135 = scalar_lea.vmem %s0, %s134
      $region28: #{bottleneck_forward.5} parent=23 // pred_fallthru
        _
    $region24: #{bottleneck_forward.5} parent=5 // pred_fallthru
      _
    %p136 = scmp.le.s32.totalorder 1, %s9
    %p137 = scmp.lt.s32.totalorder %s9, 3
    %p138 = pnand %p136, %p137
    %p139 = pneg %p138
    // Predicated region
    $region29: #{bottleneck_forward.5} parent=5 // pred_check
      _
    $region30: #{bottleneck_forward.5} parent=5 // pred_check_branch
      %141 = sbr.rel (%p138) target = $region32
    $region31: #{bottleneck_forward.5} parent=5 // pred_region
      %s142 = ssub.s32 %s9, 1
      %p143 = scmp.lt.s32.totalorder %s14, 1
      %s144 = scalar_select %p143, %s14, 1
      %s145 = smul.addr %s144, 54
      %s146 = smul.addr %s145, 4
      %s147 = scalar_lea.vmem %s0, %s146
      %p148 = pneg %p35
      %p149 = pneg %p32
      %p150 = pneg %p56
      %p151 = pneg %p53
      %p152 = pneg %p77
      %p153 = pneg %p74
      %p154 = pneg %p103
      %p155 = pneg %p100
      %p156 = scmp.lt.s32.totalorder %s14, 1
      %s157 = scalar_select %p156, %s14, 1
      %s158 = smul.addr %s157, 32
      %s159 = smul.addr %s158, 4
      %s160 = scalar_lea.vmem %s3, %s159
      %p161 = scmp.lt.s32.totalorder %s14, 1
      %s162 = scalar_select %p161, %s14, 1
      %s163 = smul.addr %s162, 54
      %s164 = smul.addr %s163, 4
      %s165 = scalar_lea.vmem %s0, %s164
      %p166 = scmp.lt.s32.totalorder %s14, 1
      %s167 = scalar_select %p166, %s14, 1
      %s168 = smul.addr %s167, 32
      %s169 = smul.addr %s168, 4
      %s170 = scalar_lea.vmem %s3, %s169
      %v172 = vld [vmem:[%s165] sm:$0xf]
      %v173 = vld [vmem:[%s165 + $0x4] sm:$0xf]
      %v174 = vld [vmem:[%s165 + $0x8] sm:$0x1]
      %v175 = vld [vmem:[%s165 + $0xc] sm:$0xf]
      %v176 = vld [vmem:[%s165 + $0x10] sm:$0xf]
      %v177 = vld [vmem:[%s165 + $0x14] sm:$0x1]
      %v178 = vld [vmem:[%s165 + $0x18] sm:$0xf]
      %v179 = vld [vmem:[%s165 + $0x1c] sm:$0xf]
      %v180 = vld [vmem:[%s165 + $0x20] sm:$0x1]
      %v181 = vld [vmem:[%s165 + $0x24] sm:$0xf]
      %v182 = vld [vmem:[%s165 + $0x28] sm:$0xf]
      %v183 = vld [vmem:[%s165 + $0x2c] sm:$0x1]
      %v184 = vld [vmem:[%s165 + $0x30] sm:$0xf]
      %v185 = vld [vmem:[%s165 + $0x34] sm:$0xf]
      %v186 = vld [vmem:[%s165 + $0x38] sm:$0x1]
      %v187 = vld [vmem:[%s165 + $0x3c] sm:$0xf]
      %v188 = vld [vmem:[%s165 + $0x40] sm:$0xf]
      %v189 = vld [vmem:[%s165 + $0x44] sm:$0x1]
      %v190 = vld [vmem:[%s165 + $0x48] sm:$0xf]
      %v191 = vld [vmem:[%s165 + $0x4c] sm:$0xf]
      %v192 = vld [vmem:[%s165 + $0x50] sm:$0x1]
      %v193 = vld [vmem:[%s165 + $0x54] sm:$0xf]
      %v194 = vld [vmem:[%s165 + $0x58] sm:$0xf]
      %v195 = vld [vmem:[%s165 + $0x5c] sm:$0x1]
      %v196 = vld [vmem:[%s165 + $0x60] sm:$0xf]
      %v197 = vld [vmem:[%s165 + $0x64] sm:$0xf]
      %v198 = vld [vmem:[%s165 + $0x68] sm:$0x1]
      %v199 = vld [vmem:[%s165 + $0x6c] sm:$0xf]
      %v200 = vld [vmem:[%s165 + $0x70] sm:$0xf]
      %v201 = vld [vmem:[%s165 + $0x74] sm:$0x1]
      %v202 = vld [vmem:[%s165 + $0x78] sm:$0xf]
      %v203 = vld [vmem:[%s165 + $0x7c] sm:$0xf]
      %v204 = vld [vmem:[%s165 + $0x80] sm:$0x1]
      %v205 = vld [vmem:[%s165 + $0x84] sm:$0xf]
      %v206 = vld [vmem:[%s165 + $0x88] sm:$0xf]
      %v207 = vld [vmem:[%s165 + $0x8c] sm:$0x1]
      %v208 = vld [vmem:[%s165 + $0x90] sm:$0xf]
      %v209 = vld [vmem:[%s165 + $0x94] sm:$0xf]
      %v210 = vld [vmem:[%s165 + $0x98] sm:$0x1]
      %v211 = vld [vmem:[%s165 + $0x9c] sm:$0xf]
      %v212 = vld [vmem:[%s165 + $0xa0] sm:$0xf]
      %v213 = vld [vmem:[%s165 + $0xa4] sm:$0x1]
      %v214 = vld [vmem:[%s165 + $0xa8] sm:$0xf]
      %v215 = vld [vmem:[%s165 + $0xac] sm:$0xf]
      %v216 = vld [vmem:[%s165 + $0xb0] sm:$0x1]
      %v217 = vld [vmem:[%s165 + $0xb4] sm:$0xf]
      %v218 = vld [vmem:[%s165 + $0xb8] sm:$0xf]
      %v219 = vld [vmem:[%s165 + $0xbc] sm:$0x1]
      %v220 = vld [vmem:[%s165 + $0xc0] sm:$0xf]
      %v221 = vld [vmem:[%s165 + $0xc4] sm:$0xf]
      %v222 = vld [vmem:[%s165 + $0xc8] sm:$0x1]
      %v223 = vld [vmem:[%s165 + $0xcc] sm:$0xf]
      %v224 = vld [vmem:[%s165 + $0xd0] sm:$0xf]
      %v225 = vld [vmem:[%s165 + $0xd4] sm:$0x1]
      %v226 = vld [vmem:[%s1] sm:$0xf]
      %v227 = vld [vmem:[%s1 + $0x4] sm:$0xf]
      %v228 = vld [vmem:[%s1 + $0x8] sm:$0xf]
      %v229 = vld [vmem:[%s1 + $0xc] sm:$0xf]
      %v230 = vld [vmem:[%s1 + $0x10] sm:$0xf]
      %v231 = vld [vmem:[%s1 + $0x14] sm:$0xf]
      %v232 = vld [vmem:[%s1 + $0x18] sm:$0xf]
      %v233 = vld [vmem:[%s1 + $0x1c] sm:$0xf]
      %v234 = vld [vmem:[%s1 + $0x20] sm:$0xf]
      %v235 = vld [vmem:[%s1 + $0x24] sm:$0xf]
      %v236 = vld [vmem:[%s1 + $0x28] sm:$0xf]
      %v237 = vld [vmem:[%s1 + $0x2c] sm:$0xf]
      %v238 = vld [vmem:[%s1 + $0x30] sm:$0xf]
      %v239 = vld [vmem:[%s1 + $0x34] sm:$0xf]
      %v240 = vld [vmem:[%s1 + $0x38] sm:$0xf]
      %v241 = vld [vmem:[%s1 + $0x3c] sm:$0xf]
      %v242 = vld [vmem:[%s1 + $0x40] sm:$0xf]
      %v243 = vld [vmem:[%s1 + $0x44] sm:$0xf]
      %v244 = vld [vmem:[%s1 + $0x48] sm:$0xf]
      %v245 = vld [vmem:[%s1 + $0x4c] sm:$0xf]
      %v246 = vld [vmem:[%s1 + $0x50] sm:$0xf]
      %v247 = vld [vmem:[%s1 + $0x54] sm:$0xf]
      %v248 = vld [vmem:[%s1 + $0x58] sm:$0xf]
      %v249 = vld [vmem:[%s1 + $0x5c] sm:$0xf]
      %v250 = vld [vmem:[%s1 + $0x60] sm:$0xf]
      %v251 = vld [vmem:[%s1 + $0x64] sm:$0xf]
      %v252 = vld [vmem:[%s1 + $0x68] sm:$0xf]
      %v253 = vld [vmem:[%s1 + $0x6c] sm:$0xf]
      %v254 = vld [vmem:[%s1 + $0x70] sm:$0xf]
      %v255 = vld [vmem:[%s1 + $0x74] sm:$0xf]
      %v256 = vld [vmem:[%s1 + $0x78] sm:$0xf]
      %v257 = vld [vmem:[%s1 + $0x7c] sm:$0xf]
      %v258 = vld [vmem:[%s1 + $0x80] sm:$0xf]
      %v259 = vld [vmem:[%s1 + $0x84] sm:$0xf]
      %v260 = vld [vmem:[%s1 + $0x88] sm:$0xf]
      %v261 = vld [vmem:[%s1 + $0x8c] sm:$0xf]
      %v262 = vld [vmem:[%s1 + $0x90] sm:$0xf]
      %v263 = vld [vmem:[%s1 + $0x94] sm:$0xf]
      %v264 = vld [vmem:[%s1 + $0x98] sm:$0xf]
      %v265 = vld [vmem:[%s1 + $0x9c] sm:$0xf]
      %v266 = vld [vmem:[%s1 + $0xa0] sm:$0xf]
      %v267 = vld [vmem:[%s1 + $0xa4] sm:$0xf]
      %v268 = vld [vmem:[%s1 + $0xa8] sm:$0xf]
      %v269 = vld [vmem:[%s1 + $0xac] sm:$0xf]
      %v270 = vld [vmem:[%s1 + $0xb0] sm:$0xf]
      %v271 = vld [vmem:[%s1 + $0xb4] sm:$0xf]
      %v272 = vld [vmem:[%s1 + $0xb8] sm:$0xf]
      %v273 = vld [vmem:[%s1 + $0xbc] sm:$0xf]
      %v274 = vld [vmem:[%s1 + $0xc0] sm:$0xf]
      %v275 = vld [vmem:[%s1 + $0xc4] sm:$0xf]
      %v276 = vld [vmem:[%s1 + $0xc8] sm:$0xf]
      %v277 = vld [vmem:[%s1 + $0xcc] sm:$0xf]
      %v278 = vld [vmem:[%s1 + $0xd0] sm:$0xf]
      %v279 = vld [vmem:[%s1 + $0xd4] sm:$0xf]
      %v280 = vld [vmem:[%s1 + $0xd8] sm:$0xf]
      %v281 = vld [vmem:[%s1 + $0xdc] sm:$0xf]
      %v282 = vld [vmem:[%s1 + $0xe0] sm:$0xf]
      %v283 = vld [vmem:[%s1 + $0xe4] sm:$0xf]
      %v284 = vld [vmem:[%s1 + $0xe8] sm:$0xf]
      %v285 = vld [vmem:[%s1 + $0xec] sm:$0xf]
      %v286 = vld [vmem:[%s1 + $0xf0] sm:$0xf]
      %v287 = vld [vmem:[%s1 + $0xf4] sm:$0xf]
      %v288 = vld [vmem:[%s1 + $0xf8] sm:$0xf]
      %v289 = vld [vmem:[%s1 + $0xfc] sm:$0xf]
      %v290 = vld [vmem:[%s1 + $0x100] sm:$0xf]
      %v291 = vld [vmem:[%s1 + $0x104] sm:$0xf]
      %v292 = vld [vmem:[%s1 + $0x108] sm:$0xf]
      %v293 = vld [vmem:[%s1 + $0x10c] sm:$0xf]
      %v294 = vld [vmem:[%s1 + $0x110] sm:$0xf]
      %v295 = vld [vmem:[%s1 + $0x114] sm:$0xf]
      %v296 = vld [vmem:[%s1 + $0x118] sm:$0xf]
      %v297 = vld [vmem:[%s1 + $0x11c] sm:$0xf]
      %v298 = vld [vmem:[%s1 + $0x120] sm:$0xf]
      %v299 = vld [vmem:[%s1 + $0x124] sm:$0xf]
      %v300 = vld [vmem:[%s1 + $0x128] sm:$0xf]
      %v301 = vld [vmem:[%s1 + $0x12c] sm:$0xf]
      %v302 = vld [vmem:[%s1 + $0x130] sm:$0xf]
      %v303 = vld [vmem:[%s1 + $0x134] sm:$0xf]
      %v304 = vld [vmem:[%s1 + $0x138] sm:$0xf]
      %v305 = vld [vmem:[%s1 + $0x13c] sm:$0xf]
      %v306 = vld [vmem:[%s1 + $0x140] sm:$0xf]
      %v307 = vld [vmem:[%s1 + $0x144] sm:$0xf]
      %v308 = vld [vmem:[%s1 + $0x148] sm:$0xf]
      %v309 = vld [vmem:[%s1 + $0x14c] sm:$0xf]
      %v310 = vld [vmem:[%s1 + $0x150] sm:$0xf]
      %v311 = vld [vmem:[%s1 + $0x154] sm:$0xf]
      %v312 = vld [vmem:[%s1 + $0x158] sm:$0xf]
      %v313 = vld [vmem:[%s1 + $0x15c] sm:$0xf]
      %v314 = vld [vmem:[%s1 + $0x160] sm:$0xf]
      %v315 = vld [vmem:[%s1 + $0x164] sm:$0xf]
      %v316 = vld [vmem:[%s1 + $0x168] sm:$0xf]
      %v317 = vld [vmem:[%s1 + $0x16c] sm:$0xf]
      %v318 = vld [vmem:[%s1 + $0x170] sm:$0xf]
      %v319 = vld [vmem:[%s1 + $0x174] sm:$0xf]
      %v320 = vld [vmem:[%s1 + $0x178] sm:$0xf]
      %v321 = vld [vmem:[%s1 + $0x17c] sm:$0xf]
      %v322 = vld [vmem:[%s1 + $0x180] sm:$0xf]
      %v323 = vld [vmem:[%s1 + $0x184] sm:$0xf]
      %v324 = vld [vmem:[%s1 + $0x188] sm:$0xf]
      %v325 = vld [vmem:[%s1 + $0x18c] sm:$0xf]
      %v326 = vld [vmem:[%s1 + $0x190] sm:$0xf]
      %v327 = vld [vmem:[%s1 + $0x194] sm:$0xf]
      %v328 = vld [vmem:[%s1 + $0x198] sm:$0xf]
      %v329 = vld [vmem:[%s1 + $0x19c] sm:$0xf]
      %v330 = vld [vmem:[%s1 + $0x1a0] sm:$0xf]
      %v331 = vld [vmem:[%s1 + $0x1a4] sm:$0xf]
      %v332 = vld [vmem:[%s1 + $0x1a8] sm:$0xf]
      %v333 = vld [vmem:[%s1 + $0x1ac] sm:$0xf]
      %v334 = vld [vmem:[%s1 + $0x1b0] sm:$0xf]
      %v335 = vld [vmem:[%s1 + $0x1b4] sm:$0xf]
      %v336 = vld [vmem:[%s1 + $0x1b8] sm:$0xf]
      %v337 = vld [vmem:[%s1 + $0x1bc] sm:$0xf]
      %v338 = vld [vmem:[%s1 + $0x1c0] sm:$0xf]
      %v339 = vld [vmem:[%s1 + $0x1c4] sm:$0xf]
      %v340 = vld [vmem:[%s1 + $0x1c8] sm:$0xf]
      %v341 = vld [vmem:[%s1 + $0x1cc] sm:$0xf]
      %v342 = vld [vmem:[%s1 + $0x1d0] sm:$0xf]
      %v343 = vld [vmem:[%s1 + $0x1d4] sm:$0xf]
      %v344 = vld [vmem:[%s1 + $0x1d8] sm:$0xf]
      %v345 = vld [vmem:[%s1 + $0x1dc] sm:$0xf]
      %v346 = vld [vmem:[%s1 + $0x1e0] sm:$0xf]
      %v347 = vld [vmem:[%s1 + $0x1e4] sm:$0xf]
      %v348 = vld [vmem:[%s1 + $0x1e8] sm:$0xf]
      %v349 = vld [vmem:[%s1 + $0x1ec] sm:$0xf]
      %v350 = vld [vmem:[%s1 + $0x1f0] sm:$0xf]
      %v351 = vld [vmem:[%s1 + $0x1f4] sm:$0xf]
      %v352 = vld [vmem:[%s1 + $0x1f8] sm:$0xf]
      %v353 = vld [vmem:[%s1 + $0x1fc] sm:$0xf]
      %v354 = vld [vmem:[%s1 + $0x200] sm:$0xf]
      %v355 = vld [vmem:[%s1 + $0x204] sm:$0xf]
      %v356 = vld [vmem:[%s1 + $0x208] sm:$0xf]
      %v357 = vld [vmem:[%s1 + $0x20c] sm:$0xf]
      %v358 = vld [vmem:[%s1 + $0x210] sm:$0xf]
      %v359 = vld [vmem:[%s1 + $0x214] sm:$0xf]
      %v360 = vld [vmem:[%s1 + $0x218] sm:$0xf]
      %v361 = vld [vmem:[%s1 + $0x21c] sm:$0xf]
      %v362 = vld [vmem:[%s1 + $0x220] sm:$0xf]
      %v363 = vld [vmem:[%s1 + $0x224] sm:$0xf]
      %v364 = vld [vmem:[%s1 + $0x228] sm:$0xf]
      %v365 = vld [vmem:[%s1 + $0x22c] sm:$0xf]
      %v366 = vld [vmem:[%s1 + $0x230] sm:$0xf]
      %v367 = vld [vmem:[%s1 + $0x234] sm:$0xf]
      %v368 = vld [vmem:[%s1 + $0x238] sm:$0xf]
      %v369 = vld [vmem:[%s1 + $0x23c] sm:$0xf]
      %vm370 = vsmask.f32 3328
      %vm371 = vsmask.f32 7440
      %vm372 = vmor %vm370, %vm371
      %v374 = vshrl.u32 %v172, 16
      %v376 = vrot.slane %v374, 4
      %v377 = vshll.u32 %v172, 16
      %v379 = vrot.slane %v377, 5
      %v380 = vor.u32 %v376, %v379
      %v381 = vrot.slane %v380, 4
      %v383 = vshll.u32 %v173, 16
      %v385 = vrot.slane %v383, 5
      %v386 = vsel %vm372, %v381, %v385
      %v387 = vshrl.u32 %v173, 16
      %v389 = vrot.slane %v387, 4
      %v390 = vor.u32 %v389, %v385
      %v391 = vrot.slane %v390, 4
      %v393 = vshll.u32 %v174, 16
      %v395 = vrot.slane %v393, 5
      %v396 = vsel %vm372, %v391, %v395
      %v398 = vshrl.u32 %v175, 16
      %v400 = vrot.slane %v398, 4
      %v401 = vshll.u32 %v175, 16
      %v403 = vrot.slane %v401, 5
      %v404 = vor.u32 %v400, %v403
      %v405 = vrot.slane %v404, 4
      %v407 = vshll.u32 %v176, 16
      %v409 = vrot.slane %v407, 5
      %v410 = vsel %vm372, %v405, %v409
      %v411 = vshrl.u32 %v176, 16
      %v413 = vrot.slane %v411, 4
      %v414 = vor.u32 %v413, %v409
      %v415 = vrot.slane %v414, 4
      %v417 = vshll.u32 %v177, 16
      %v419 = vrot.slane %v417, 5
      %v420 = vsel %vm372, %v415, %v419
      %v422 = vshrl.u32 %v178, 16
      %v424 = vrot.slane %v422, 4
      %v425 = vshll.u32 %v178, 16
      %v427 = vrot.slane %v425, 5
      %v428 = vor.u32 %v424, %v427
      %v429 = vrot.slane %v428, 4
      %v431 = vshll.u32 %v179, 16
      %v433 = vrot.slane %v431, 5
      %v434 = vsel %vm372, %v429, %v433
      %v435 = vshrl.u32 %v179, 16
      %v437 = vrot.slane %v435, 4
      %v438 = vor.u32 %v437, %v433
      %v439 = vrot.slane %v438, 4
      %v441 = vshll.u32 %v180, 16
      %v443 = vrot.slane %v441, 5
      %v444 = vsel %vm372, %v439, %v443
      %v446 = vshrl.u32 %v181, 16
      %v448 = vrot.slane %v446, 4
      %v449 = vshll.u32 %v181, 16
      %v451 = vrot.slane %v449, 5
      %v452 = vor.u32 %v448, %v451
      %v453 = vrot.slane %v452, 4
      %v455 = vshll.u32 %v182, 16
      %v457 = vrot.slane %v455, 5
      %v458 = vsel %vm372, %v453, %v457
      %v459 = vshrl.u32 %v182, 16
      %v461 = vrot.slane %v459, 4
      %v462 = vor.u32 %v461, %v457
      %v463 = vrot.slane %v462, 4
      %v465 = vshll.u32 %v183, 16
      %v467 = vrot.slane %v465, 5
      %v468 = vsel %vm372, %v463, %v467
      %v470 = vshrl.u32 %v184, 16
      %v472 = vrot.slane %v470, 4
      %v473 = vshll.u32 %v184, 16
      %v475 = vrot.slane %v473, 5
      %v476 = vor.u32 %v472, %v475
      %v477 = vrot.slane %v476, 4
      %v479 = vshll.u32 %v185, 16
      %v481 = vrot.slane %v479, 5
      %v482 = vsel %vm372, %v477, %v481
      %v483 = vshrl.u32 %v185, 16
      %v485 = vrot.slane %v483, 4
      %v486 = vor.u32 %v485, %v481
      %v487 = vrot.slane %v486, 4
      %v489 = vshll.u32 %v186, 16
      %v491 = vrot.slane %v489, 5
      %v492 = vsel %vm372, %v487, %v491
      %v494 = vshrl.u32 %v187, 16
      %v496 = vrot.slane %v494, 4
      %v497 = vshll.u32 %v187, 16
      %v499 = vrot.slane %v497, 5
      %v500 = vor.u32 %v496, %v499
      %v501 = vrot.slane %v500, 4
      %v503 = vshll.u32 %v188, 16
      %v505 = vrot.slane %v503, 5
      %v506 = vsel %vm372, %v501, %v505
      %v507 = vshrl.u32 %v188, 16
      %v509 = vrot.slane %v507, 4
      %v510 = vor.u32 %v509, %v505
      %v511 = vrot.slane %v510, 4
      %v513 = vshll.u32 %v189, 16
      %v515 = vrot.slane %v513, 5
      %v516 = vsel %vm372, %v511, %v515
      %v518 = vshrl.u32 %v190, 16
      %v520 = vrot.slane %v518, 4
      %v521 = vshll.u32 %v190, 16
      %v523 = vrot.slane %v521, 5
      %v524 = vor.u32 %v520, %v523
      %v525 = vrot.slane %v524, 4
      %v527 = vshll.u32 %v191, 16
      %v529 = vrot.slane %v527, 5
      %v530 = vsel %vm372, %v525, %v529
      %v531 = vshrl.u32 %v191, 16
      %v533 = vrot.slane %v531, 4
      %v534 = vor.u32 %v533, %v529
      %v535 = vrot.slane %v534, 4
      %v537 = vshll.u32 %v192, 16
      %v539 = vrot.slane %v537, 5
      %v540 = vsel %vm372, %v535, %v539
      %v542 = vshrl.u32 %v193, 16
      %v544 = vrot.slane %v542, 4
      %v545 = vshll.u32 %v193, 16
      %v547 = vrot.slane %v545, 5
      %v548 = vor.u32 %v544, %v547
      %v549 = vrot.slane %v548, 4
      %v551 = vshll.u32 %v194, 16
      %v553 = vrot.slane %v551, 5
      %v554 = vsel %vm372, %v549, %v553
      %v555 = vshrl.u32 %v194, 16
      %v557 = vrot.slane %v555, 4
      %v558 = vor.u32 %v557, %v553
      %v559 = vrot.slane %v558, 4
      %v561 = vshll.u32 %v195, 16
      %v563 = vrot.slane %v561, 5
      %v564 = vsel %vm372, %v559, %v563
      %v566 = vshrl.u32 %v196, 16
      %v568 = vrot.slane %v566, 4
      %v569 = vshll.u32 %v196, 16
      %v571 = vrot.slane %v569, 5
      %v572 = vor.u32 %v568, %v571
      %v573 = vrot.slane %v572, 4
      %v575 = vshll.u32 %v197, 16
      %v577 = vrot.slane %v575, 5
      %v578 = vsel %vm372, %v573, %v577
      %v579 = vshrl.u32 %v197, 16
      %v581 = vrot.slane %v579, 4
      %v582 = vor.u32 %v581, %v577
      %v583 = vrot.slane %v582, 4
      %v585 = vshll.u32 %v198, 16
      %v587 = vrot.slane %v585, 5
      %v588 = vsel %vm372, %v583, %v587
      %v590 = vshrl.u32 %v199, 16
      %v592 = vrot.slane %v590, 4
      %v593 = vshll.u32 %v199, 16
      %v595 = vrot.slane %v593, 5
      %v596 = vor.u32 %v592, %v595
      %v597 = vrot.slane %v596, 4
      %v599 = vshll.u32 %v200, 16
      %v601 = vrot.slane %v599, 5
      %v602 = vsel %vm372, %v597, %v601
      %v603 = vshrl.u32 %v200, 16
      %v605 = vrot.slane %v603, 4
      %v606 = vor.u32 %v605, %v601
      %v607 = vrot.slane %v606, 4
      %v609 = vshll.u32 %v201, 16
      %v611 = vrot.slane %v609, 5
      %v612 = vsel %vm372, %v607, %v611
      %v614 = vshrl.u32 %v202, 16
      %v616 = vrot.slane %v614, 4
      %v617 = vshll.u32 %v202, 16
      %v619 = vrot.slane %v617, 5
      %v620 = vor.u32 %v616, %v619
      %v621 = vrot.slane %v620, 4
      %v623 = vshll.u32 %v203, 16
      %v625 = vrot.slane %v623, 5
      %v626 = vsel %vm372, %v621, %v625
      %v627 = vshrl.u32 %v203, 16
      %v629 = vrot.slane %v627, 4
      %v630 = vor.u32 %v629, %v625
      %v631 = vrot.slane %v630, 4
      %v633 = vshll.u32 %v204, 16
      %v635 = vrot.slane %v633, 5
      %v636 = vsel %vm372, %v631, %v635
      %v638 = vshrl.u32 %v205, 16
      %v640 = vrot.slane %v638, 4
      %v641 = vshll.u32 %v205, 16
      %v643 = vrot.slane %v641, 5
      %v644 = vor.u32 %v640, %v643
      %v645 = vrot.slane %v644, 4
      %v647 = vshll.u32 %v206, 16
      %v649 = vrot.slane %v647, 5
      %v650 = vsel %vm372, %v645, %v649
      %v651 = vshrl.u32 %v206, 16
      %v653 = vrot.slane %v651, 4
      %v654 = vor.u32 %v653, %v649
      %v655 = vrot.slane %v654, 4
      %v657 = vshll.u32 %v207, 16
      %v659 = vrot.slane %v657, 5
      %v660 = vsel %vm372, %v655, %v659
      %v662 = vshrl.u32 %v208, 16
      %v664 = vrot.slane %v662, 4
      %v665 = vshll.u32 %v208, 16
      %v667 = vrot.slane %v665, 5
      %v668 = vor.u32 %v664, %v667
      %v669 = vrot.slane %v668, 4
      %v671 = vshll.u32 %v209, 16
      %v673 = vrot.slane %v671, 5
      %v674 = vsel %vm372, %v669, %v673
      %v675 = vshrl.u32 %v209, 16
      %v677 = vrot.slane %v675, 4
      %v678 = vor.u32 %v677, %v673
      %v679 = vrot.slane %v678, 4
      %v681 = vshll.u32 %v210, 16
      %v683 = vrot.slane %v681, 5
      %v684 = vsel %vm372, %v679, %v683
      %v686 = vshrl.u32 %v211, 16
      %v688 = vrot.slane %v686, 4
      %v689 = vshll.u32 %v211, 16
      %v691 = vrot.slane %v689, 5
      %v692 = vor.u32 %v688, %v691
      %v693 = vrot.slane %v692, 4
      %v695 = vshll.u32 %v212, 16
      %v697 = vrot.slane %v695, 5
      %v698 = vsel %vm372, %v693, %v697
      %v699 = vshrl.u32 %v212, 16
      %v701 = vrot.slane %v699, 4
      %v702 = vor.u32 %v701, %v697
      %v703 = vrot.slane %v702, 4
      %v705 = vshll.u32 %v213, 16
      %v707 = vrot.slane %v705, 5
      %v708 = vsel %vm372, %v703, %v707
      %v710 = vshrl.u32 %v214, 16
      %v712 = vrot.slane %v710, 4
      %v713 = vshll.u32 %v214, 16
      %v715 = vrot.slane %v713, 5
      %v716 = vor.u32 %v712, %v715
      %v717 = vrot.slane %v716, 4
      %v719 = vshll.u32 %v215, 16
      %v721 = vrot.slane %v719, 5
      %v722 = vsel %vm372, %v717, %v721
      %v723 = vshrl.u32 %v215, 16
      %v725 = vrot.slane %v723, 4
      %v726 = vor.u32 %v725, %v721
      %v727 = vrot.slane %v726, 4
      %v729 = vshll.u32 %v216, 16
      %v731 = vrot.slane %v729, 5
      %v732 = vsel %vm372, %v727, %v731
      %v734 = vshrl.u32 %v217, 16
      %v736 = vrot.slane %v734, 4
      %v737 = vshll.u32 %v217, 16
      %v739 = vrot.slane %v737, 5
      %v740 = vor.u32 %v736, %v739
      %v741 = vrot.slane %v740, 4
      %v743 = vshll.u32 %v218, 16
      %v745 = vrot.slane %v743, 5
      %v746 = vsel %vm372, %v741, %v745
      %v747 = vshrl.u32 %v218, 16
      %v749 = vrot.slane %v747, 4
      %v750 = vor.u32 %v749, %v745
      %v751 = vrot.slane %v750, 4
      %v753 = vshll.u32 %v219, 16
      %v755 = vrot.slane %v753, 5
      %v756 = vsel %vm372, %v751, %v755
      %v757 = vunpack.c.l.b16 %v386
      %v758 = vunpack.c.l.b16 %v396
      %v759 = vunpack.c.l.b16 %v410
      %v760 = vunpack.c.l.b16 %v420
      %v761 = vunpack.c.l.b16 %v434
      %v762 = vunpack.c.l.b16 %v444
      %v763 = vunpack.c.l.b16 %v458
      %v764 = vunpack.c.l.b16 %v468
      %v765 = vunpack.c.l.b16 %v482
      %v766 = vunpack.c.l.b16 %v492
      %v767 = vunpack.c.l.b16 %v506
      %v768 = vunpack.c.l.b16 %v516
      %v769 = vunpack.c.l.b16 %v530
      %v770 = vunpack.c.l.b16 %v540
      %v771 = vunpack.c.l.b16 %v554
      %v772 = vunpack.c.l.b16 %v564
      %v773 = vunpack.c.l.b16 %v578
      %v774 = vunpack.c.l.b16 %v588
      %v775 = vunpack.c.l.b16 %v602
      %v776 = vunpack.c.l.b16 %v612
      %v777 = vunpack.c.l.b16 %v626
      %v778 = vunpack.c.l.b16 %v636
      %v779 = vunpack.c.l.b16 %v650
      %v780 = vunpack.c.l.b16 %v660
      %v781 = vunpack.c.l.b16 %v674
      %v782 = vunpack.c.l.b16 %v684
      %v783 = vunpack.c.l.b16 %v698
      %v784 = vunpack.c.l.b16 %v708
      %v785 = vunpack.c.l.b16 %v722
      %v786 = vunpack.c.l.b16 %v732
      %v787 = vunpack.c.l.b16 %v746
      %v788 = vunpack.c.l.b16 %v756
      %v789 = vpack.c.b16 %v758, %v757
      %v790 = vpack.c.b16 %v760, %v759
      %v791 = vpack.c.b16 %v762, %v761
      %v792 = vpack.c.b16 %v764, %v763
      %v793 = vpack.c.b16 %v766, %v765
      %v794 = vpack.c.b16 %v768, %v767
      %v795 = vpack.c.b16 %v770, %v769
      %v796 = vpack.c.b16 %v772, %v771
      %v797 = vpack.c.b16 %v774, %v773
      %v798 = vpack.c.b16 %v776, %v775
      %v799 = vpack.c.b16 %v778, %v777
      %v800 = vpack.c.b16 %v780, %v779
      %v801 = vpack.c.b16 %v782, %v781
      %v802 = vpack.c.b16 %v784, %v783
      %v803 = vpack.c.b16 %v786, %v785
      %v804 = vpack.c.b16 %v788, %v787
      %v837 = vunpack.c.l.b16 %v242
      %v838 = vunpack.c.l.b16 %v243
      %v839 = vunpack.c.l.b16 %v244
      %v840 = vunpack.c.l.b16 %v245
      %v841 = vunpack.c.l.b16 %v246
      %v842 = vunpack.c.l.b16 %v247
      %v843 = vunpack.c.l.b16 %v248
      %v844 = vunpack.c.l.b16 %v249
      %v845 = vunpack.c.l.b16 %v250
      %v846 = vunpack.c.l.b16 %v251
      %v847 = vunpack.c.l.b16 %v252
      %v848 = vunpack.c.l.b16 %v253
      %v849 = vunpack.c.l.b16 %v254
      %v850 = vunpack.c.l.b16 %v255
      %v851 = vunpack.c.l.b16 %v256
      %v852 = vunpack.c.l.b16 %v257
      %v853 = vpack.c.b16 %v838, %v837
      %v854 = vpack.c.b16 %v840, %v839
      %v855 = vpack.c.b16 %v842, %v841
      %v856 = vpack.c.b16 %v844, %v843
      %v857 = vpack.c.b16 %v846, %v845
      %v858 = vpack.c.b16 %v848, %v847
      %v859 = vpack.c.b16 %v850, %v849
      %v860 = vpack.c.b16 %v852, %v851
      %869 = vmatprep.subr.bf16.mxu0 0
      %870 = vmatpush1.bf16.msra.mxu0 %v853
      %871 = vmatprep.subr.bf16.mxu0 0
      %872 = vmatpush1.bf16.msra.mxu0 %v854
      %873 = vmatprep.subr.bf16.mxu0 0
      %874 = vmatpush1.bf16.msra.mxu0 %v855
      %875 = vmatprep.subr.bf16.mxu0 0
      %876 = vmatpush1.bf16.msra.mxu0 %v856
      %877 = vmatprep.subr.bf16.mxu0 0
      %878 = vmatpush1.bf16.msra.mxu0 %v857
      %879 = vmatprep.subr.bf16.mxu0 0
      %880 = vmatpush1.bf16.msra.mxu0 %v858
      %881 = vmatprep.subr.bf16.mxu0 0
      %882 = vmatpush1.bf16.msra.mxu0 %v859
      %883 = vmatprep.subr.bf16.mxu0 0
      %884 = vmatpush1.bf16.msra.mxu0 %v860
      %885 = vmatprep.subr.bf16.mxu0 0
      %886 = vmatpush1.bf16.msra.mxu0 0
      %887 = vmatprep.subr.bf16.mxu0 0
      %888 = vmatpush1.bf16.msra.mxu0 0
      %889 = vmatprep.subr.bf16.mxu0 0
      %890 = vmatpush1.bf16.msra.mxu0 0
      %891 = vmatprep.subr.bf16.mxu0 0
      %892 = vmatpush1.bf16.msra.mxu0 0
      %893 = vmatprep.subr.bf16.mxu0 0
      %894 = vmatpush1.bf16.msra.mxu0 0
      %895 = vmatprep.subr.bf16.mxu0 0
      %896 = vmatpush1.bf16.msra.mxu0 0
      %897 = vmatprep.subr.bf16.mxu0 0
      %898 = vmatpush1.bf16.msra.mxu0 0
      %899 = vmatprep.subr.bf16.mxu0 0
      %900 = vmatpush1.bf16.msra.mxu0 0
      %901 = vmatprep.mubr.bf16.mxu0 0
      %902 = vmatmul.mubr.bf16.gmra.mrb[0].mxu0 %v789
      %v903 = vpop.f32.mrb[0].mxu0
      %v904 = vadd.f32 0.0, %v903
      %v905 = vpop.f32.mrb[0].mxu0
      %v906 = vpop.f32.mrb[0].mxu0
      %v907 = vadd.f32 0.0, %v906
      %v908 = vpop.f32.mrb[0].mxu0
      %909 = vmatprep.mubr.bf16.mxu0 0
      %910 = vmatmul.mubr.bf16.gmra.mrb[0].mxu0 %v790
      %v911 = vpop.f32.mrb[0].mxu0
      %v912 = vadd.f32 0.0, %v911
      %v913 = vpop.f32.mrb[0].mxu0
      %v914 = vpop.f32.mrb[0].mxu0
      %v915 = vadd.f32 0.0, %v914
      %v916 = vpop.f32.mrb[0].mxu0
      %917 = vmatprep.mubr.bf16.mxu0 0
      %918 = vmatmul.mubr.bf16.gmra.mrb[0].mxu0 %v791
      %v919 = vpop.f32.mrb[0].mxu0
      %v920 = vadd.f32 0.0, %v919
      %v921 = vpop.f32.mrb[0].mxu0
      %v922 = vpop.f32.mrb[0].mxu0
      %v923 = vadd.f32 0.0, %v922
      %v924 = vpop.f32.mrb[0].mxu0
      %925 = vmatprep.mubr.bf16.mxu0 0
      %926 = vmatmul.mubr.bf16.gmra.mrb[0].mxu0 %v792
      %v927 = vpop.f32.mrb[0].mxu0
      %v928 = vadd.f32 0.0, %v927
      %v929 = vpop.f32.mrb[0].mxu0
      %v930 = vpop.f32.mrb[0].mxu0
      %v931 = vadd.f32 0.0, %v930
      %v932 = vpop.f32.mrb[0].mxu0
      %933 = vmatprep.mubr.bf16.mxu0 0
      %934 = vmatmul.mubr.bf16.gmra.mrb[0].mxu0 %v793
      %v935 = vpop.f32.mrb[0].mxu0
      %v936 = vadd.f32 0.0, %v935
      %v937 = vpop.f32.mrb[0].mxu0
      %v938 = vpop.f32.mrb[0].mxu0
      %v939 = vadd.f32 0.0, %v938
      %v940 = vpop.f32.mrb[0].mxu0
      %941 = vmatprep.mubr.bf16.mxu0 0
      %942 = vmatmul.mubr.bf16.gmra.mrb[0].mxu0 %v794
      %v943 = vpop.f32.mrb[0].mxu0
      %v944 = vadd.f32 0.0, %v943
      %v945 = vpop.f32.mrb[0].mxu0
      %v946 = vpop.f32.mrb[0].mxu0
      %v947 = vadd.f32 0.0, %v946
      %v948 = vpop.f32.mrb[0].mxu0
      %949 = vmatprep.mubr.bf16.mxu0 0
      %950 = vmatmul.mubr.bf16.gmra.mrb[0].mxu0 %v795
      %v951 = vpop.f32.mrb[0].mxu0
      %v952 = vadd.f32 0.0, %v951
      %v953 = vpop.f32.mrb[0].mxu0
      %v954 = vpop.f32.mrb[0].mxu0
      %v955 = vadd.f32 0.0, %v954
      %v956 = vpop.f32.mrb[0].mxu0
      %957 = vmatprep.mubr.bf16.mxu0 0
      %958 = vmatmul.mubr.bf16.gmra.mrb[0].mxu0 %v796
      %v959 = vpop.f32.mrb[0].mxu0
      %v960 = vadd.f32 0.0, %v959
      %v961 = vpop.f32.mrb[0].mxu0
      %v962 = vpop.f32.mrb[0].mxu0
      %v963 = vadd.f32 0.0, %v962
      %v964 = vpop.f32.mrb[0].mxu0
      %965 = vmatprep.mubr.bf16.mxu0 0
      %966 = vmatmul.mubr.bf16.gmra.mrb[0].mxu0 %v797
      %v967 = vpop.f32.mrb[0].mxu0
      %v968 = vadd.f32 0.0, %v967
      %v969 = vpop.f32.mrb[0].mxu0
      %v970 = vpop.f32.mrb[0].mxu0
      %v971 = vadd.f32 0.0, %v970
      %v972 = vpop.f32.mrb[0].mxu0
      %973 = vmatprep.mubr.bf16.mxu0 0
      %974 = vmatmul.mubr.bf16.gmra.mrb[0].mxu0 %v798
      %v975 = vpop.f32.mrb[0].mxu0
      %v976 = vadd.f32 0.0, %v975
      %v977 = vpop.f32.mrb[0].mxu0
      %v978 = vpop.f32.mrb[0].mxu0
      %v979 = vadd.f32 0.0, %v978
      %v980 = vpop.f32.mrb[0].mxu0
      %981 = vmatprep.mubr.bf16.mxu0 0
      %982 = vmatmul.mubr.bf16.gmra.mrb[0].mxu0 %v799
      %v983 = vpop.f32.mrb[0].mxu0
      %v984 = vadd.f32 0.0, %v983
      %v985 = vpop.f32.mrb[0].mxu0
      %v986 = vpop.f32.mrb[0].mxu0
      %v987 = vadd.f32 0.0, %v986
      %v988 = vpop.f32.mrb[0].mxu0
      %989 = vmatprep.mubr.bf16.mxu0 0
      %990 = vmatmul.mubr.bf16.gmra.mrb[0].mxu0 %v800
      %v991 = vpop.f32.mrb[0].mxu0
      %v992 = vadd.f32 0.0, %v991
      %v993 = vpop.f32.mrb[0].mxu0
      %v994 = vpop.f32.mrb[0].mxu0
      %v995 = vadd.f32 0.0, %v994
      %v996 = vpop.f32.mrb[0].mxu0
      %997 = vmatprep.mubr.bf16.mxu0 0
      %998 = vmatmul.mubr.bf16.gmra.mrb[0].mxu0 %v801
      %v999 = vpop.f32.mrb[0].mxu0
      %v1000 = vadd.f32 0.0, %v999
      %v1001 = vpop.f32.mrb[0].mxu0
      %v1002 = vpop.f32.mrb[0].mxu0
      %v1003 = vadd.f32 0.0, %v1002
      %v1004 = vpop.f32.mrb[0].mxu0
      %1005 = vmatprep.mubr.bf16.mxu0 0
      %1006 = vmatmul.mubr.bf16.gmra.mrb[0].mxu0 %v802
      %v1007 = vpop.f32.mrb[0].mxu0
      %v1008 = vadd.f32 0.0, %v1007
      %v1009 = vpop.f32.mrb[0].mxu0
      %v1010 = vpop.f32.mrb[0].mxu0
      %v1011 = vadd.f32 0.0, %v1010
      %v1012 = vpop.f32.mrb[0].mxu0
      %1013 = vmatprep.mubr.bf16.mxu0 0
      %1014 = vmatmul.mubr.bf16.gmra.mrb[0].mxu0 %v803
      %v1015 = vpop.f32.mrb[0].mxu0
      %v1016 = vadd.f32 0.0, %v1015
      %v1017 = vpop.f32.mrb[0].mxu0
      %v1018 = vpop.f32.mrb[0].mxu0
      %v1019 = vadd.f32 0.0, %v1018
      %v1020 = vpop.f32.mrb[0].mxu0
      %1021 = vmatprep.mubr.bf16.mxu0 0
      %1022 = vmatmul.mubr.bf16.gmra.mrb[0].mxu0 %v804
      %v1023 = vpop.f32.mrb[0].mxu0
      %v1024 = vadd.f32 0.0, %v1023
      %v1025 = vpop.f32.mrb[0].mxu0
      %v1026 = vpop.f32.mrb[0].mxu0
      %v1027 = vadd.f32 0.0, %v1026
      %v1028 = vpop.f32.mrb[0].mxu0
      %1029 = vdwg.mxu0
      %v1062 = vunpack.c.l.b16 %v172
      %v1063 = vunpack.c.l.b16 %v173
      %v1064 = vunpack.c.l.b16 %v175
      %v1065 = vunpack.c.l.b16 %v176
      %v1066 = vunpack.c.l.b16 %v178
      %v1067 = vunpack.c.l.b16 %v179
      %v1068 = vunpack.c.l.b16 %v181
      %v1069 = vunpack.c.l.b16 %v182
      %v1070 = vunpack.c.l.b16 %v184
      %v1071 = vunpack.c.l.b16 %v185
      %v1072 = vunpack.c.l.b16 %v187
      %v1073 = vunpack.c.l.b16 %v188
      %v1074 = vunpack.c.l.b16 %v190
      %v1075 = vunpack.c.l.b16 %v191
      %v1076 = vunpack.c.l.b16 %v193
      %v1077 = vunpack.c.l.b16 %v194
      %v1078 = vunpack.c.l.b16 %v196
      %v1079 = vunpack.c.l.b16 %v197
      %v1080 = vunpack.c.l.b16 %v199
      %v1081 = vunpack.c.l.b16 %v200
      %v1082 = vunpack.c.l.b16 %v202
      %v1083 = vunpack.c.l.b16 %v203
      %v1084 = vunpack.c.l.b16 %v205
      %v1085 = vunpack.c.l.b16 %v206
      %v1086 = vunpack.c.l.b16 %v208
      %v1087 = vunpack.c.l.b16 %v209
      %v1088 = vunpack.c.l.b16 %v211
      %v1089 = vunpack.c.l.b16 %v212
      %v1090 = vunpack.c.l.b16 %v214
      %v1091 = vunpack.c.l.b16 %v215
      %v1092 = vunpack.c.l.b16 %v217
      %v1093 = vunpack.c.l.b16 %v218
      %v1094 = vpack.c.b16 %v1063, %v1062
      %v1095 = vpack.c.b16 %v1065, %v1064
      %v1096 = vpack.c.b16 %v1067, %v1066
      %v1097 = vpack.c.b16 %v1069, %v1068
      %v1098 = vpack.c.b16 %v1071, %v1070
      %v1099 = vpack.c.b16 %v1073, %v1072
      %v1100 = vpack.c.b16 %v1075, %v1074
      %v1101 = vpack.c.b16 %v1077, %v1076
      %v1102 = vpack.c.b16 %v1079, %v1078
      %v1103 = vpack.c.b16 %v1081, %v1080
      %v1104 = vpack.c.b16 %v1083, %v1082
      %v1105 = vpack.c.b16 %v1085, %v1084
      %v1106 = vpack.c.b16 %v1087, %v1086
      %v1107 = vpack.c.b16 %v1089, %v1088
      %v1108 = vpack.c.b16 %v1091, %v1090
      %v1109 = vpack.c.b16 %v1093, %v1092
      %v1142 = vunpack.c.l.b16 %v226
      %v1143 = vunpack.c.l.b16 %v227
      %v1144 = vunpack.c.l.b16 %v228
      %v1145 = vunpack.c.l.b16 %v229
      %v1146 = vunpack.c.l.b16 %v230
      %v1147 = vunpack.c.l.b16 %v231
      %v1148 = vunpack.c.l.b16 %v232
      %v1149 = vunpack.c.l.b16 %v233
      %v1150 = vunpack.c.l.b16 %v234
      %v1151 = vunpack.c.l.b16 %v235
      %v1152 = vunpack.c.l.b16 %v236
      %v1153 = vunpack.c.l.b16 %v237
      %v1154 = vunpack.c.l.b16 %v238
      %v1155 = vunpack.c.l.b16 %v239
      %v1156 = vunpack.c.l.b16 %v240
      %v1157 = vunpack.c.l.b16 %v241
      %v1158 = vpack.c.b16 %v1143, %v1142
      %v1159 = vpack.c.b16 %v1145, %v1144
      %v1160 = vpack.c.b16 %v1147, %v1146
      %v1161 = vpack.c.b16 %v1149, %v1148
      %v1162 = vpack.c.b16 %v1151, %v1150
      %v1163 = vpack.c.b16 %v1153, %v1152
      %v1164 = vpack.c.b16 %v1155, %v1154
      %v1165 = vpack.c.b16 %v1157, %v1156
      %1174 = vmatprep.subr.bf16.mxu0 0
      %1175 = vmatpush1.bf16.msra.mxu0 %v1158
      %1176 = vmatprep.subr.bf16.mxu0 0
      %1177 = vmatpush1.bf16.msra.mxu0 %v1159
      %1178 = vmatprep.subr.bf16.mxu0 0
      %1179 = vmatpush1.bf16.msra.mxu0 %v1160
      %1180 = vmatprep.subr.bf16.mxu0 0
      %1181 = vmatpush1.bf16.msra.mxu0 %v1161
      %1182 = vmatprep.subr.bf16.mxu0 0
      %1183 = vmatpush1.bf16.msra.mxu0 %v1162
      %1184 = vmatprep.subr.bf16.mxu0 0
      %1185 = vmatpush1.bf16.msra.mxu0 %v1163
      %1186 = vmatprep.subr.bf16.mxu0 0
      %1187 = vmatpush1.bf16.msra.mxu0 %v1164
      %1188 = vmatprep.subr.bf16.mxu0 0
      %1189 = vmatpush1.bf16.msra.mxu0 %v1165
      %1190 = vmatprep.subr.bf16.mxu0 0
      %1191 = vmatpush1.bf16.msra.mxu0 0
      %1192 = vmatprep.subr.bf16.mxu0 0
      %1193 = vmatpush1.bf16.msra.mxu0 0
      %1194 = vmatprep.subr.bf16.mxu0 0
      %1195 = vmatpush1.bf16.msra.mxu0 0
      %1196 = vmatprep.subr.bf16.mxu0 0
      %1197 = vmatpush1.bf16.msra.mxu0 0
      %1198 = vmatprep.subr.bf16.mxu0 0
      %1199 = vmatpush1.bf16.msra.mxu0 0
      %1200 = vmatprep.subr.bf16.mxu0 0
      %1201 = vmatpush1.bf16.msra.mxu0 0
      %1202 = vmatprep.subr.bf16.mxu0 0
      %1203 = vmatpush1.bf16.msra.mxu0 0
      %1204 = vmatprep.subr.bf16.mxu0 0
      %1205 = vmatpush1.bf16.msra.mxu0 0
      %1206 = vmatprep.mubr.bf16.mxu0 0
      %1207 = vmatmul.mubr.bf16.gmra.mrb[0].mxu0 %v1094
      %v1208 = vpop.f32.mrb[0].mxu0
      %v1209 = vadd.f32 %v904, %v1208
      %v1210 = vpop.f32.mrb[0].mxu0
      %v1211 = vpop.f32.mrb[0].mxu0
      %v1212 = vadd.f32 %v907, %v1211
      %v1213 = vpop.f32.mrb[0].mxu0
      %1214 = vmatprep.mubr.bf16.mxu0 0
      %1215 = vmatmul.mubr.bf16.gmra.mrb[0].mxu0 %v1095
      %v1216 = vpop.f32.mrb[0].mxu0
      %v1217 = vadd.f32 %v912, %v1216
      %v1218 = vpop.f32.mrb[0].mxu0
      %v1219 = vpop.f32.mrb[0].mxu0
      %v1220 = vadd.f32 %v915, %v1219
      %v1221 = vpop.f32.mrb[0].mxu0
      %1222 = vmatprep.mubr.bf16.mxu0 0
      %1223 = vmatmul.mubr.bf16.gmra.mrb[0].mxu0 %v1096
      %v1224 = vpop.f32.mrb[0].mxu0
      %v1225 = vadd.f32 %v920, %v1224
      %v1226 = vpop.f32.mrb[0].mxu0
      %v1227 = vpop.f32.mrb[0].mxu0
      %v1228 = vadd.f32 %v923, %v1227
      %v1229 = vpop.f32.mrb[0].mxu0
      %1230 = vmatprep.mubr.bf16.mxu0 0
      %1231 = vmatmul.mubr.bf16.gmra.mrb[0].mxu0 %v1097
      %v1232 = vpop.f32.mrb[0].mxu0
      %v1233 = vadd.f32 %v928, %v1232
      %v1234 = vpop.f32.mrb[0].mxu0
      %v1235 = vpop.f32.mrb[0].mxu0
      %v1236 = vadd.f32 %v931, %v1235
      %v1237 = vpop.f32.mrb[0].mxu0
      %1238 = vmatprep.mubr.bf16.mxu0 0
      %1239 = vmatmul.mubr.bf16.gmra.mrb[0].mxu0 %v1098
      %v1240 = vpop.f32.mrb[0].mxu0
      %v1241 = vadd.f32 %v936, %v1240
      %v1242 = vpop.f32.mrb[0].mxu0
      %v1243 = vpop.f32.mrb[0].mxu0
      %v1244 = vadd.f32 %v939, %v1243
      %v1245 = vpop.f32.mrb[0].mxu0
      %1246 = vmatprep.mubr.bf16.mxu0 0
      %1247 = vmatmul.mubr.bf16.gmra.mrb[0].mxu0 %v1099
      %v1248 = vpop.f32.mrb[0].mxu0
      %v1249 = vadd.f32 %v944, %v1248
      %v1250 = vpop.f32.mrb[0].mxu0
      %v1251 = vpop.f32.mrb[0].mxu0
      %v1252 = vadd.f32 %v947, %v1251
      %v1253 = vpop.f32.mrb[0].mxu0
      %1254 = vmatprep.mubr.bf16.mxu0 0
      %1255 = vmatmul.mubr.bf16.gmra.mrb[0].mxu0 %v1100
      %v1256 = vpop.f32.mrb[0].mxu0
      %v1257 = vadd.f32 %v952, %v1256
      %v1258 = vpop.f32.mrb[0].mxu0
      %v1259 = vpop.f32.mrb[0].mxu0
      %v1260 = vadd.f32 %v955, %v1259
      %v1261 = vpop.f32.mrb[0].mxu0
      %1262 = vmatprep.mubr.bf16.mxu0 0
      %1263 = vmatmul.mubr.bf16.gmra.mrb[0].mxu0 %v1101
      %v1264 = vpop.f32.mrb[0].mxu0
      %v1265 = vadd.f32 %v960, %v1264
      %v1266 = vpop.f32.mrb[0].mxu0
      %v1267 = vpop.f32.mrb[0].mxu0
      %v1268 = vadd.f32 %v963, %v1267
      %v1269 = vpop.f32.mrb[0].mxu0
      %1270 = vmatprep.mubr.bf16.mxu0 0
      %1271 = vmatmul.mubr.bf16.gmra.mrb[0].mxu0 %v1102
      %v1272 = vpop.f32.mrb[0].mxu0
      %v1273 = vadd.f32 %v968, %v1272
      %v1274 = vpop.f32.mrb[0].mxu0
      %v1275 = vpop.f32.mrb[0].mxu0
      %v1276 = vadd.f32 %v971, %v1275
      %v1277 = vpop.f32.mrb[0].mxu0
      %1278 = vmatprep.mubr.bf16.mxu0 0
      %1279 = vmatmul.mubr.bf16.gmra.mrb[0].mxu0 %v1103
      %v1280 = vpop.f32.mrb[0].mxu0
      %v1281 = vadd.f32 %v976, %v1280
      %v1282 = vpop.f32.mrb[0].mxu0
      %v1283 = vpop.f32.mrb[0].mxu0
      %v1284 = vadd.f32 %v979, %v1283
      %v1285 = vpop.f32.mrb[0].mxu0
      %1286 = vmatprep.mubr.bf16.mxu0 0
      %1287 = vmatmul.mubr.bf16.gmra.mrb[0].mxu0 %v1104
      %v1288 = vpop.f32.mrb[0].mxu0
      %v1289 = vadd.f32 %v984, %v1288
      %v1290 = vpop.f32.mrb[0].mxu0
      %v1291 = vpop.f32.mrb[0].mxu0
      %v1292 = vadd.f32 %v987, %v1291
      %v1293 = vpop.f32.mrb[0].mxu0
      %1294 = vmatprep.mubr.bf16.mxu0 0
      %1295 = vmatmul.mubr.bf16.gmra.mrb[0].mxu0 %v1105
      %v1296 = vpop.f32.mrb[0].mxu0
      %v1297 = vadd.f32 %v992, %v1296
      %v1298 = vpop.f32.mrb[0].mxu0
      %v1299 = vpop.f32.mrb[0].mxu0
      %v1300 = vadd.f32 %v995, %v1299
      %v1301 = vpop.f32.mrb[0].mxu0
      %1302 = vmatprep.mubr.bf16.mxu0 0
      %1303 = vmatmul.mubr.bf16.gmra.mrb[0].mxu0 %v1106
      %v1304 = vpop.f32.mrb[0].mxu0
      %v1305 = vadd.f32 %v1000, %v1304
      %v1306 = vpop.f32.mrb[0].mxu0
      %v1307 = vpop.f32.mrb[0].mxu0
      %v1308 = vadd.f32 %v1003, %v1307
      %v1309 = vpop.f32.mrb[0].mxu0
      %1310 = vmatprep.mubr.bf16.mxu0 0
      %1311 = vmatmul.mubr.bf16.gmra.mrb[0].mxu0 %v1107
      %v1312 = vpop.f32.mrb[0].mxu0
      %v1313 = vadd.f32 %v1008, %v1312
      %v1314 = vpop.f32.mrb[0].mxu0
      %v1315 = vpop.f32.mrb[0].mxu0
      %v1316 = vadd.f32 %v1011, %v1315
      %v1317 = vpop.f32.mrb[0].mxu0
      %1318 = vmatprep.mubr.bf16.mxu0 0
      %1319 = vmatmul.mubr.bf16.gmra.mrb[0].mxu0 %v1108
      %v1320 = vpop.f32.mrb[0].mxu0
      %v1321 = vadd.f32 %v1016, %v1320
      %v1322 = vpop.f32.mrb[0].mxu0
      %v1323 = vpop.f32.mrb[0].mxu0
      %v1324 = vadd.f32 %v1019, %v1323
      %v1325 = vpop.f32.mrb[0].mxu0
      %1326 = vmatprep.mubr.bf16.mxu0 0
      %1327 = vmatmul.mubr.bf16.gmra.mrb[0].mxu0 %v1109
      %v1328 = vpop.f32.mrb[0].mxu0
      %v1329 = vadd.f32 %v1024, %v1328
      %v1330 = vpop.f32.mrb[0].mxu0
      %v1331 = vpop.f32.mrb[0].mxu0
      %v1332 = vadd.f32 %v1027, %v1331
      %v1333 = vpop.f32.mrb[0].mxu0
      %1334 = vdwg.mxu0
      %vm1351 = vcmask 1042432
      %vm1352 = vcmask 1046532
      %vm1353 = vmor %vm1351, %vm1352
      %v1354 = vrot.slane %v172, 5
      %v1355 = vrot.slane %v1354, 4
      %v1356 = vrot.slane %v173, 5
      %v1357 = vsel %vm1353, %v1355, %v1356
      %v1358 = vrot.slane %v1356, 4
      %v1359 = vrot.slane %v174, 5
      %v1360 = vsel %vm1353, %v1358, %v1359
      %v1361 = vrot.slane %v175, 5
      %v1362 = vrot.slane %v1361, 4
      %v1363 = vrot.slane %v176, 5
      %v1364 = vsel %vm1353, %v1362, %v1363
      %v1365 = vrot.slane %v1363, 4
      %v1366 = vrot.slane %v177, 5
      %v1367 = vsel %vm1353, %v1365, %v1366
      %v1368 = vrot.slane %v178, 5
      %v1369 = vrot.slane %v1368, 4
      %v1370 = vrot.slane %v179, 5
      %v1371 = vsel %vm1353, %v1369, %v1370
      %v1372 = vrot.slane %v1370, 4
      %v1373 = vrot.slane %v180, 5
      %v1374 = vsel %vm1353, %v1372, %v1373
      %v1375 = vrot.slane %v181, 5
      %v1376 = vrot.slane %v1375, 4
      %v1377 = vrot.slane %v182, 5
      %v1378 = vsel %vm1353, %v1376, %v1377
      %v1379 = vrot.slane %v1377, 4
      %v1380 = vrot.slane %v183, 5
      %v1381 = vsel %vm1353, %v1379, %v1380
      %v1382 = vrot.slane %v184, 5
      %v1383 = vrot.slane %v1382, 4
      %v1384 = vrot.slane %v185, 5
      %v1385 = vsel %vm1353, %v1383, %v1384
      %v1386 = vrot.slane %v1384, 4
      %v1387 = vrot.slane %v186, 5
      %v1388 = vsel %vm1353, %v1386, %v1387
      %v1389 = vrot.slane %v187, 5
      %v1390 = vrot.slane %v1389, 4
      %v1391 = vrot.slane %v188, 5
      %v1392 = vsel %vm1353, %v1390, %v1391
      %v1393 = vrot.slane %v1391, 4
      %v1394 = vrot.slane %v189, 5
      %v1395 = vsel %vm1353, %v1393, %v1394
      %v1396 = vrot.slane %v190, 5
      %v1397 = vrot.slane %v1396, 4
      %v1398 = vrot.slane %v191, 5
      %v1399 = vsel %vm1353, %v1397, %v1398
      %v1400 = vrot.slane %v1398, 4
      %v1401 = vrot.slane %v192, 5
      %v1402 = vsel %vm1353, %v1400, %v1401
      %v1403 = vrot.slane %v193, 5
      %v1404 = vrot.slane %v1403, 4
      %v1405 = vrot.slane %v194, 5
      %v1406 = vsel %vm1353, %v1404, %v1405
      %v1407 = vrot.slane %v1405, 4
      %v1408 = vrot.slane %v195, 5
      %v1409 = vsel %vm1353, %v1407, %v1408
      %v1410 = vrot.slane %v196, 5
      %v1411 = vrot.slane %v1410, 4
      %v1412 = vrot.slane %v197, 5
      %v1413 = vsel %vm1353, %v1411, %v1412
      %v1414 = vrot.slane %v1412, 4
      %v1415 = vrot.slane %v198, 5
      %v1416 = vsel %vm1353, %v1414, %v1415
      %v1417 = vrot.slane %v199, 5
      %v1418 = vrot.slane %v1417, 4
      %v1419 = vrot.slane %v200, 5
      %v1420 = vsel %vm1353, %v1418, %v1419
      %v1421 = vrot.slane %v1419, 4
      %v1422 = vrot.slane %v201, 5
      %v1423 = vsel %vm1353, %v1421, %v1422
      %v1424 = vrot.slane %v202, 5
      %v1425 = vrot.slane %v1424, 4
      %v1426 = vrot.slane %v203, 5
      %v1427 = vsel %vm1353, %v1425, %v1426
      %v1428 = vrot.slane %v1426, 4
      %v1429 = vrot.slane %v204, 5
      %v1430 = vsel %vm1353, %v1428, %v1429
      %v1431 = vrot.slane %v205, 5
      %v1432 = vrot.slane %v1431, 4
      %v1433 = vrot.slane %v206, 5
      %v1434 = vsel %vm1353, %v1432, %v1433
      %v1435 = vrot.slane %v1433, 4
      %v1436 = vrot.slane %v207, 5
      %v1437 = vsel %vm1353, %v1435, %v1436
      %v1438 = vrot.slane %v208, 5
      %v1439 = vrot.slane %v1438, 4
      %v1440 = vrot.slane %v209, 5
      %v1441 = vsel %vm1353, %v1439, %v1440
      %v1442 = vrot.slane %v1440, 4
      %v1443 = vrot.slane %v210, 5
      %v1444 = vsel %vm1353, %v1442, %v1443
      %v1445 = vrot.slane %v211, 5
      %v1446 = vrot.slane %v1445, 4
      %v1447 = vrot.slane %v212, 5
      %v1448 = vsel %vm1353, %v1446, %v1447
      %v1449 = vrot.slane %v1447, 4
      %v1450 = vrot.slane %v213, 5
      %v1451 = vsel %vm1353, %v1449, %v1450
      %v1452 = vrot.slane %v214, 5
      %v1453 = vrot.slane %v1452, 4
      %v1454 = vrot.slane %v215, 5
      %v1455 = vsel %vm1353, %v1453, %v1454
      %v1456 = vrot.slane %v1454, 4
      %v1457 = vrot.slane %v216, 5
      %v1458 = vsel %vm1353, %v1456, %v1457
      %v1459 = vrot.slane %v217, 5
      %v1460 = vrot.slane %v1459, 4
      %v1461 = vrot.slane %v218, 5
      %v1462 = vsel %vm1353, %v1460, %v1461
      %v1463 = vrot.slane %v1461, 4
      %v1464 = vrot.slane %v219, 5
      %v1465 = vsel %vm1353, %v1463, %v1464
      %v1466 = vunpack.c.l.b16 %v1357
      %v1467 = vunpack.c.l.b16 %v1360
      %v1468 = vunpack.c.l.b16 %v1364
      %v1469 = vunpack.c.l.b16 %v1367
      %v1470 = vunpack.c.l.b16 %v1371
      %v1471 = vunpack.c.l.b16 %v1374
      %v1472 = vunpack.c.l.b16 %v1378
      %v1473 = vunpack.c.l.b16 %v1381
      %v1474 = vunpack.c.l.b16 %v1385
      %v1475 = vunpack.c.l.b16 %v1388
      %v1476 = vunpack.c.l.b16 %v1392
      %v1477 = vunpack.c.l.b16 %v1395
      %v1478 = vunpack.c.l.b16 %v1399
      %v1479 = vunpack.c.l.b16 %v1402
      %v1480 = vunpack.c.l.b16 %v1406
      %v1481 = vunpack.c.l.b16 %v1409
      %v1482 = vunpack.c.l.b16 %v1413
      %v1483 = vunpack.c.l.b16 %v1416
      %v1484 = vunpack.c.l.b16 %v1420
      %v1485 = vunpack.c.l.b16 %v1423
      %v1486 = vunpack.c.l.b16 %v1427
      %v1487 = vunpack.c.l.b16 %v1430
      %v1488 = vunpack.c.l.b16 %v1434
      %v1489 = vunpack.c.l.b16 %v1437
      %v1490 = vunpack.c.l.b16 %v1441
      %v1491 = vunpack.c.l.b16 %v1444
      %v1492 = vunpack.c.l.b16 %v1448
      %v1493 = vunpack.c.l.b16 %v1451
      %v1494 = vunpack.c.l.b16 %v1455
      %v1495 = vunpack.c.l.b16 %v1458
      %v1496 = vunpack.c.l.b16 %v1462
      %v1497 = vunpack.c.l.b16 %v1465
      %v1498 = vpack.c.b16 %v1467, %v1466
      %v1499 = vpack.c.b16 %v1469, %v1468
      %v1500 = vpack.c.b16 %v1471, %v1470
      %v1501 = vpack.c.b16 %v1473, %v1472
      %v1502 = vpack.c.b16 %v1475, %v1474
      %v1503 = vpack.c.b16 %v1477, %v1476
      %v1504 = vpack.c.b16 %v1479, %v1478
      %v1505 = vpack.c.b16 %v1481, %v1480
      %v1506 = vpack.c.b16 %v1483, %v1482
      %v1507 = vpack.c.b16 %v1485, %v1484
      %v1508 = vpack.c.b16 %v1487, %v1486
      %v1509 = vpack.c.b16 %v1489, %v1488
      %v1510 = vpack.c.b16 %v1491, %v1490
      %v1511 = vpack.c.b16 %v1493, %v1492
      %v1512 = vpack.c.b16 %v1495, %v1494
      %v1513 = vpack.c.b16 %v1497, %v1496
      %v1546 = vunpack.c.l.b16 %v258
      %v1547 = vunpack.c.l.b16 %v259
      %v1548 = vunpack.c.l.b16 %v260
      %v1549 = vunpack.c.l.b16 %v261
      %v1550 = vunpack.c.l.b16 %v262
      %v1551 = vunpack.c.l.b16 %v263
      %v1552 = vunpack.c.l.b16 %v264
      %v1553 = vunpack.c.l.b16 %v265
      %v1554 = vunpack.c.l.b16 %v266
      %v1555 = vunpack.c.l.b16 %v267
      %v1556 = vunpack.c.l.b16 %v268
      %v1557 = vunpack.c.l.b16 %v269
      %v1558 = vunpack.c.l.b16 %v270
      %v1559 = vunpack.c.l.b16 %v271
      %v1560 = vunpack.c.l.b16 %v272
      %v1561 = vunpack.c.l.b16 %v273
      %v1562 = vpack.c.b16 %v1547, %v1546
      %v1563 = vpack.c.b16 %v1549, %v1548
      %v1564 = vpack.c.b16 %v1551, %v1550
      %v1565 = vpack.c.b16 %v1553, %v1552
      %v1566 = vpack.c.b16 %v1555, %v1554
      %v1567 = vpack.c.b16 %v1557, %v1556
      %v1568 = vpack.c.b16 %v1559, %v1558
      %v1569 = vpack.c.b16 %v1561, %v1560
      %1578 = vmatprep.subr.bf16.mxu0 0
      %1579 = vmatpush1.bf16.msra.mxu0 %v1562
      %1580 = vmatprep.subr.bf16.mxu0 0
      %1581 = vmatpush1.bf16.msra.mxu0 %v1563
      %1582 = vmatprep.subr.bf16.mxu0 0
      %1583 = vmatpush1.bf16.msra.mxu0 %v1564
      %1584 = vmatprep.subr.bf16.mxu0 0
      %1585 = vmatpush1.bf16.msra.mxu0 %v1565
      %1586 = vmatprep.subr.bf16.mxu0 0
      %1587 = vmatpush1.bf16.msra.mxu0 %v1566
      %1588 = vmatprep.subr.bf16.mxu0 0
      %1589 = vmatpush1.bf16.msra.mxu0 %v1567
      %1590 = vmatprep.subr.bf16.mxu0 0
      %1591 = vmatpush1.bf16.msra.mxu0 %v1568
      %1592 = vmatprep.subr.bf16.mxu0 0
      %1593 = vmatpush1.bf16.msra.mxu0 %v1569
      %1594 = vmatprep.subr.bf16.mxu0 0
      %1595 = vmatpush1.bf16.msra.mxu0 0
      %1596 = vmatprep.subr.bf16.mxu0 0
      %1597 = vmatpush1.bf16.msra.mxu0 0
      %1598 = vmatprep.subr.bf16.mxu0 0
      %1599 = vmatpush1.bf16.msra.mxu0 0
      %1600 = vmatprep.subr.bf16.mxu0 0
      %1601 = vmatpush1.bf16.msra.mxu0 0
      %1602 = vmatprep.subr.bf16.mxu0 0
      %1603 = vmatpush1.bf16.msra.mxu0 0
      %1604 = vmatprep.subr.bf16.mxu0 0
      %1605 = vmatpush1.bf16.msra.mxu0 0
      %1606 = vmatprep.subr.bf16.mxu0 0
      %1607 = vmatpush1.bf16.msra.mxu0 0
      %1608 = vmatprep.subr.bf16.mxu0 0
      %1609 = vmatpush1.bf16.msra.mxu0 0
      %1610 = vmatprep.mubr.bf16.mxu0 0
      %1611 = vmatmul.mubr.bf16.gmra.mrb[0].mxu0 %v1498
      %v1612 = vpop.f32.mrb[0].mxu0
      %v1613 = vadd.f32 0.0, %v1612
      %v1614 = vpop.f32.mrb[0].mxu0
      %v1615 = vpop.f32.mrb[0].mxu0
      %v1616 = vadd.f32 0.0, %v1615
      %v1617 = vpop.f32.mrb[0].mxu0
      %1618 = vmatprep.mubr.bf16.mxu0 0
      %1619 = vmatmul.mubr.bf16.gmra.mrb[0].mxu0 %v1499
      %v1620 = vpop.f32.mrb[0].mxu0
      %v1621 = vadd.f32 0.0, %v1620
      %v1622 = vpop.f32.mrb[0].mxu0
      %v1623 = vpop.f32.mrb[0].mxu0
      %v1624 = vadd.f32 0.0, %v1623
      %v1625 = vpop.f32.mrb[0].mxu0
      %1626 = vmatprep.mubr.bf16.mxu0 0
      %1627 = vmatmul.mubr.bf16.gmra.mrb[0].mxu0 %v1500
      %v1628 = vpop.f32.mrb[0].mxu0
      %v1629 = vadd.f32 0.0, %v1628
      %v1630 = vpop.f32.mrb[0].mxu0
      %v1631 = vpop.f32.mrb[0].mxu0
      %v1632 = vadd.f32 0.0, %v1631
      %v1633 = vpop.f32.mrb[0].mxu0
      %1634 = vmatprep.mubr.bf16.mxu0 0
      %1635 = vmatmul.mubr.bf16.gmra.mrb[0].mxu0 %v1501
      %v1636 = vpop.f32.mrb[0].mxu0
      %v1637 = vadd.f32 0.0, %v1636
      %v1638 = vpop.f32.mrb[0].mxu0
      %v1639 = vpop.f32.mrb[0].mxu0
      %v1640 = vadd.f32 0.0, %v1639
      %v1641 = vpop.f32.mrb[0].mxu0
      %1642 = vmatprep.mubr.bf16.mxu0 0
      %1643 = vmatmul.mubr.bf16.gmra.mrb[0].mxu0 %v1502
      %v1644 = vpop.f32.mrb[0].mxu0
      %v1645 = vadd.f32 0.0, %v1644
      %v1646 = vpop.f32.mrb[0].mxu0
      %v1647 = vpop.f32.mrb[0].mxu0
      %v1648 = vadd.f32 0.0, %v1647
      %v1649 = vpop.f32.mrb[0].mxu0
      %1650 = vmatprep.mubr.bf16.mxu0 0
      %1651 = vmatmul.mubr.bf16.gmra.mrb[0].mxu0 %v1503
      %v1652 = vpop.f32.mrb[0].mxu0
      %v1653 = vadd.f32 0.0, %v1652
      %v1654 = vpop.f32.mrb[0].mxu0
      %v1655 = vpop.f32.mrb[0].mxu0
      %v1656 = vadd.f32 0.0, %v1655
      %v1657 = vpop.f32.mrb[0].mxu0
      %1658 = vmatprep.mubr.bf16.mxu0 0
      %1659 = vmatmul.mubr.bf16.gmra.mrb[0].mxu0 %v1504
      %v1660 = vpop.f32.mrb[0].mxu0
      %v1661 = vadd.f32 0.0, %v1660
      %v1662 = vpop.f32.mrb[0].mxu0
      %v1663 = vpop.f32.mrb[0].mxu0
      %v1664 = vadd.f32 0.0, %v1663
      %v1665 = vpop.f32.mrb[0].mxu0
      %1666 = vmatprep.mubr.bf16.mxu0 0
      %1667 = vmatmul.mubr.bf16.gmra.mrb[0].mxu0 %v1505
      %v1668 = vpop.f32.mrb[0].mxu0
      %v1669 = vadd.f32 0.0, %v1668
      %v1670 = vpop.f32.mrb[0].mxu0
      %v1671 = vpop.f32.mrb[0].mxu0
      %v1672 = vadd.f32 0.0, %v1671
      %v1673 = vpop.f32.mrb[0].mxu0
      %1674 = vmatprep.mubr.bf16.mxu0 0
      %1675 = vmatmul.mubr.bf16.gmra.mrb[0].mxu0 %v1506
      %v1676 = vpop.f32.mrb[0].mxu0
      %v1677 = vadd.f32 0.0, %v1676
      %v1678 = vpop.f32.mrb[0].mxu0
      %v1679 = vpop.f32.mrb[0].mxu0
      %v1680 = vadd.f32 0.0, %v1679
      %v1681 = vpop.f32.mrb[0].mxu0
      %1682 = vmatprep.mubr.bf16.mxu0 0
      %1683 = vmatmul.mubr.bf16.gmra.mrb[0].mxu0 %v1507
      %v1684 = vpop.f32.mrb[0].mxu0
      %v1685 = vadd.f32 0.0, %v1684
      %v1686 = vpop.f32.mrb[0].mxu0
      %v1687 = vpop.f32.mrb[0].mxu0
      %v1688 = vadd.f32 0.0, %v1687
      %v1689 = vpop.f32.mrb[0].mxu0
      %1690 = vmatprep.mubr.bf16.mxu0 0
      %1691 = vmatmul.mubr.bf16.gmra.mrb[0].mxu0 %v1508
      %v1692 = vpop.f32.mrb[0].mxu0
      %v1693 = vadd.f32 0.0, %v1692
      %v1694 = vpop.f32.mrb[0].mxu0
      %v1695 = vpop.f32.mrb[0].mxu0
      %v1696 = vadd.f32 0.0, %v1695
      %v1697 = vpop.f32.mrb[0].mxu0
      %1698 = vmatprep.mubr.bf16.mxu0 0
      %1699 = vmatmul.mubr.bf16.gmra.mrb[0].mxu0 %v1509
      %v1700 = vpop.f32.mrb[0].mxu0
      %v1701 = vadd.f32 0.0, %v1700
      %v1702 = vpop.f32.mrb[0].mxu0
      %v1703 = vpop.f32.mrb[0].mxu0
      %v1704 = vadd.f32 0.0, %v1703
      %v1705 = vpop.f32.mrb[0].mxu0
      %1706 = vmatprep.mubr.bf16.mxu0 0
      %1707 = vmatmul.mubr.bf16.gmra.mrb[0].mxu0 %v1510
      %v1708 = vpop.f32.mrb[0].mxu0
      %v1709 = vadd.f32 0.0, %v1708
      %v1710 = vpop.f32.mrb[0].mxu0
      %v1711 = vpop.f32.mrb[0].mxu0
      %v1712 = vadd.f32 0.0, %v1711
      %v1713 = vpop.f32.mrb[0].mxu0
      %1714 = vmatprep.mubr.bf16.mxu0 0
      %1715 = vmatmul.mubr.bf16.gmra.mrb[0].mxu0 %v1511
      %v1716 = vpop.f32.mrb[0].mxu0
      %v1717 = vadd.f32 0.0, %v1716
      %v1718 = vpop.f32.mrb[0].mxu0
      %v1719 = vpop.f32.mrb[0].mxu0
      %v1720 = vadd.f32 0.0, %v1719
      %v1721 = vpop.f32.mrb[0].mxu0
      %1722 = vmatprep.mubr.bf16.mxu0 0
      %1723 = vmatmul.mubr.bf16.gmra.mrb[0].mxu0 %v1512
      %v1724 = vpop.f32.mrb[0].mxu0
      %v1725 = vadd.f32 0.0, %v1724
      %v1726 = vpop.f32.mrb[0].mxu0
      %v1727 = vpop.f32.mrb[0].mxu0
      %v1728 = vadd.f32 0.0, %v1727
      %v1729 = vpop.f32.mrb[0].mxu0
      %1730 = vmatprep.mubr.bf16.mxu0 0
      %1731 = vmatmul.mubr.bf16.gmra.mrb[0].mxu0 %v1513
      %v1732 = vpop.f32.mrb[0].mxu0
      %v1733 = vadd.f32 0.0, %v1732
      %v1734 = vpop.f32.mrb[0].mxu0
      %v1735 = vpop.f32.mrb[0].mxu0
      %v1736 = vadd.f32 0.0, %v1735
      %v1737 = vpop.f32.mrb[0].mxu0
      %1738 = vdwg.mxu0
      %v1739 = vadd.f32 %v1209, %v1613
      %v1740 = vadd.f32 %v1212, %v1616
      %v1741 = vadd.f32 %v1217, %v1621
      %v1742 = vadd.f32 %v1220, %v1624
      %v1743 = vadd.f32 %v1225, %v1629
      %v1744 = vadd.f32 %v1228, %v1632
      %v1745 = vadd.f32 %v1233, %v1637
      %v1746 = vadd.f32 %v1236, %v1640
      %v1747 = vadd.f32 %v1241, %v1645
      %v1748 = vadd.f32 %v1244, %v1648
      %v1749 = vadd.f32 %v1249, %v1653
      %v1750 = vadd.f32 %v1252, %v1656
      %v1751 = vadd.f32 %v1257, %v1661
      %v1752 = vadd.f32 %v1260, %v1664
      %v1753 = vadd.f32 %v1265, %v1669
      %v1754 = vadd.f32 %v1268, %v1672
      %v1755 = vadd.f32 %v1273, %v1677
      %v1756 = vadd.f32 %v1276, %v1680
      %v1757 = vadd.f32 %v1281, %v1685
      %v1758 = vadd.f32 %v1284, %v1688
      %v1759 = vadd.f32 %v1289, %v1693
      %v1760 = vadd.f32 %v1292, %v1696
      %v1761 = vadd.f32 %v1297, %v1701
      %v1762 = vadd.f32 %v1300, %v1704
      %v1763 = vadd.f32 %v1305, %v1709
      %v1764 = vadd.f32 %v1308, %v1712
      %v1765 = vadd.f32 %v1313, %v1717
      %v1766 = vadd.f32 %v1316, %v1720
      %v1767 = vadd.f32 %v1321, %v1725
      %v1768 = vadd.f32 %v1324, %v1728
      %v1769 = vadd.f32 %v1329, %v1733
      %v1770 = vadd.f32 %v1332, %v1736
      %v1773 = vunpack.c.l.b16 %v220
      %v1774 = vunpack.c.l.b16 %v221
      %v1775 = vpack.c.b16 %v1774, %v1773
      %v1793 = vunpack.c.l.b16 %v274
      %v1794 = vunpack.c.l.b16 %v275
      %v1795 = vunpack.c.l.b16 %v276
      %v1796 = vunpack.c.l.b16 %v277
      %v1797 = vunpack.c.l.b16 %v278
      %v1798 = vunpack.c.l.b16 %v279
      %v1799 = vunpack.c.l.b16 %v280
      %v1800 = vunpack.c.l.b16 %v281
      %v1801 = vunpack.c.l.b16 %v282
      %v1802 = vunpack.c.l.b16 %v283
      %v1803 = vunpack.c.l.b16 %v284
      %v1804 = vunpack.c.l.b16 %v285
      %v1805 = vunpack.c.l.b16 %v286
      %v1806 = vunpack.c.l.b16 %v287
      %v1807 = vunpack.c.l.b16 %v288
      %v1808 = vunpack.c.l.b16 %v289
      %v1809 = vpack.c.b16 %v1794, %v1793
      %v1810 = vpack.c.b16 %v1796, %v1795
      %v1811 = vpack.c.b16 %v1798, %v1797
      %v1812 = vpack.c.b16 %v1800, %v1799
      %v1813 = vpack.c.b16 %v1802, %v1801
      %v1814 = vpack.c.b16 %v1804, %v1803
      %v1815 = vpack.c.b16 %v1806, %v1805
      %v1816 = vpack.c.b16 %v1808, %v1807
      %1825 = vmatprep.subr.bf16.mxu0 0
      %1826 = vmatpush1.bf16.msra.mxu0 %v1809
      %1827 = vmatprep.subr.bf16.mxu0 0
      %1828 = vmatpush1.bf16.msra.mxu0 %v1810
      %1829 = vmatprep.subr.bf16.mxu0 0
      %1830 = vmatpush1.bf16.msra.mxu0 %v1811
      %1831 = vmatprep.subr.bf16.mxu0 0
      %1832 = vmatpush1.bf16.msra.mxu0 %v1812
      %1833 = vmatprep.subr.bf16.mxu0 0
      %1834 = vmatpush1.bf16.msra.mxu0 %v1813
      %1835 = vmatprep.subr.bf16.mxu0 0
      %1836 = vmatpush1.bf16.msra.mxu0 %v1814
      %1837 = vmatprep.subr.bf16.mxu0 0
      %1838 = vmatpush1.bf16.msra.mxu0 %v1815
      %1839 = vmatprep.subr.bf16.mxu0 0
      %1840 = vmatpush1.bf16.msra.mxu0 %v1816
      %1841 = vmatprep.subr.bf16.mxu0 0
      %1842 = vmatpush1.bf16.msra.mxu0 0
      %1843 = vmatprep.subr.bf16.mxu0 0
      %1844 = vmatpush1.bf16.msra.mxu0 0
      %1845 = vmatprep.subr.bf16.mxu0 0
      %1846 = vmatpush1.bf16.msra.mxu0 0
      %1847 = vmatprep.subr.bf16.mxu0 0
      %1848 = vmatpush1.bf16.msra.mxu0 0
      %1849 = vmatprep.subr.bf16.mxu0 0
      %1850 = vmatpush1.bf16.msra.mxu0 0
      %1851 = vmatprep.subr.bf16.mxu0 0
      %1852 = vmatpush1.bf16.msra.mxu0 0
      %1853 = vmatprep.subr.bf16.mxu0 0
      %1854 = vmatpush1.bf16.msra.mxu0 0
      %1855 = vmatprep.subr.bf16.mxu0 0
      %1856 = vmatpush1.bf16.msra.mxu0 0
      %1857 = vmatprep.mubr.bf16.mxu0 0
      %1858 = vmatmul.mubr.bf16.gmra.mrb[0].mxu0 %v1095
      %v1859 = vpop.f32.mrb[0].mxu0
      %v1860 = vadd.f32 0.0, %v1859
      %v1861 = vpop.f32.mrb[0].mxu0
      %v1862 = vpop.f32.mrb[0].mxu0
      %v1863 = vadd.f32 0.0, %v1862
      %v1864 = vpop.f32.mrb[0].mxu0
      %1865 = vmatprep.mubr.bf16.mxu0 0
      %1866 = vmatmul.mubr.bf16.gmra.mrb[0].mxu0 %v1096
      %v1867 = vpop.f32.mrb[0].mxu0
      %v1868 = vadd.f32 0.0, %v1867
      %v1869 = vpop.f32.mrb[0].mxu0
      %v1870 = vpop.f32.mrb[0].mxu0
      %v1871 = vadd.f32 0.0, %v1870
      %v1872 = vpop.f32.mrb[0].mxu0
      %1873 = vmatprep.mubr.bf16.mxu0 0
      %1874 = vmatmul.mubr.bf16.gmra.mrb[0].mxu0 %v1097
      %v1875 = vpop.f32.mrb[0].mxu0
      %v1876 = vadd.f32 0.0, %v1875
      %v1877 = vpop.f32.mrb[0].mxu0
      %v1878 = vpop.f32.mrb[0].mxu0
      %v1879 = vadd.f32 0.0, %v1878
      %v1880 = vpop.f32.mrb[0].mxu0
      %1881 = vmatprep.mubr.bf16.mxu0 0
      %1882 = vmatmul.mubr.bf16.gmra.mrb[0].mxu0 %v1098
      %v1883 = vpop.f32.mrb[0].mxu0
      %v1884 = vadd.f32 0.0, %v1883
      %v1885 = vpop.f32.mrb[0].mxu0
      %v1886 = vpop.f32.mrb[0].mxu0
      %v1887 = vadd.f32 0.0, %v1886
      %v1888 = vpop.f32.mrb[0].mxu0
      %1889 = vmatprep.mubr.bf16.mxu0 0
      %1890 = vmatmul.mubr.bf16.gmra.mrb[0].mxu0 %v1099
      %v1891 = vpop.f32.mrb[0].mxu0
      %v1892 = vadd.f32 0.0, %v1891
      %v1893 = vpop.f32.mrb[0].mxu0
      %v1894 = vpop.f32.mrb[0].mxu0
      %v1895 = vadd.f32 0.0, %v1894
      %v1896 = vpop.f32.mrb[0].mxu0
      %1897 = vmatprep.mubr.bf16.mxu0 0
      %1898 = vmatmul.mubr.bf16.gmra.mrb[0].mxu0 %v1100
      %v1899 = vpop.f32.mrb[0].mxu0
      %v1900 = vadd.f32 0.0, %v1899
      %v1901 = vpop.f32.mrb[0].mxu0
      %v1902 = vpop.f32.mrb[0].mxu0
      %v1903 = vadd.f32 0.0, %v1902
      %v1904 = vpop.f32.mrb[0].mxu0
      %1905 = vmatprep.mubr.bf16.mxu0 0
      %1906 = vmatmul.mubr.bf16.gmra.mrb[0].mxu0 %v1101
      %v1907 = vpop.f32.mrb[0].mxu0
      %v1908 = vadd.f32 0.0, %v1907
      %v1909 = vpop.f32.mrb[0].mxu0
      %v1910 = vpop.f32.mrb[0].mxu0
      %v1911 = vadd.f32 0.0, %v1910
      %v1912 = vpop.f32.mrb[0].mxu0
      %1913 = vmatprep.mubr.bf16.mxu0 0
      %1914 = vmatmul.mubr.bf16.gmra.mrb[0].mxu0 %v1102
      %v1915 = vpop.f32.mrb[0].mxu0
      %v1916 = vadd.f32 0.0, %v1915
      %v1917 = vpop.f32.mrb[0].mxu0
      %v1918 = vpop.f32.mrb[0].mxu0
      %v1919 = vadd.f32 0.0, %v1918
      %v1920 = vpop.f32.mrb[0].mxu0
      %1921 = vmatprep.mubr.bf16.mxu0 0
      %1922 = vmatmul.mubr.bf16.gmra.mrb[0].mxu0 %v1103
      %v1923 = vpop.f32.mrb[0].mxu0
      %v1924 = vadd.f32 0.0, %v1923
      %v1925 = vpop.f32.mrb[0].mxu0
      %v1926 = vpop.f32.mrb[0].mxu0
      %v1927 = vadd.f32 0.0, %v1926
      %v1928 = vpop.f32.mrb[0].mxu0
      %1929 = vmatprep.mubr.bf16.mxu0 0
      %1930 = vmatmul.mubr.bf16.gmra.mrb[0].mxu0 %v1104
      %v1931 = vpop.f32.mrb[0].mxu0
      %v1932 = vadd.f32 0.0, %v1931
      %v1933 = vpop.f32.mrb[0].mxu0
      %v1934 = vpop.f32.mrb[0].mxu0
      %v1935 = vadd.f32 0.0, %v1934
      %v1936 = vpop.f32.mrb[0].mxu0
      %1937 = vmatprep.mubr.bf16.mxu0 0
      %1938 = vmatmul.mubr.bf16.gmra.mrb[0].mxu0 %v1105
      %v1939 = vpop.f32.mrb[0].mxu0
      %v1940 = vadd.f32 0.0, %v1939
      %v1941 = vpop.f32.mrb[0].mxu0
      %v1942 = vpop.f32.mrb[0].mxu0
      %v1943 = vadd.f32 0.0, %v1942
      %v1944 = vpop.f32.mrb[0].mxu0
      %1945 = vmatprep.mubr.bf16.mxu0 0
      %1946 = vmatmul.mubr.bf16.gmra.mrb[0].mxu0 %v1106
      %v1947 = vpop.f32.mrb[0].mxu0
      %v1948 = vadd.f32 0.0, %v1947
      %v1949 = vpop.f32.mrb[0].mxu0
      %v1950 = vpop.f32.mrb[0].mxu0
      %v1951 = vadd.f32 0.0, %v1950
      %v1952 = vpop.f32.mrb[0].mxu0
      %1953 = vmatprep.mubr.bf16.mxu0 0
      %1954 = vmatmul.mubr.bf16.gmra.mrb[0].mxu0 %v1107
      %v1955 = vpop.f32.mrb[0].mxu0
      %v1956 = vadd.f32 0.0, %v1955
      %v1957 = vpop.f32.mrb[0].mxu0
      %v1958 = vpop.f32.mrb[0].mxu0
      %v1959 = vadd.f32 0.0, %v1958
      %v1960 = vpop.f32.mrb[0].mxu0
      %1961 = vmatprep.mubr.bf16.mxu0 0
      %1962 = vmatmul.mubr.bf16.gmra.mrb[0].mxu0 %v1108
      %v1963 = vpop.f32.mrb[0].mxu0
      %v1964 = vadd.f32 0.0, %v1963
      %v1965 = vpop.f32.mrb[0].mxu0
      %v1966 = vpop.f32.mrb[0].mxu0
      %v1967 = vadd.f32 0.0, %v1966
      %v1968 = vpop.f32.mrb[0].mxu0
      %1969 = vmatprep.mubr.bf16.mxu0 0
      %1970 = vmatmul.mubr.bf16.gmra.mrb[0].mxu0 %v1109
      %v1971 = vpop.f32.mrb[0].mxu0
      %v1972 = vadd.f32 0.0, %v1971
      %v1973 = vpop.f32.mrb[0].mxu0
      %v1974 = vpop.f32.mrb[0].mxu0
      %v1975 = vadd.f32 0.0, %v1974
      %v1976 = vpop.f32.mrb[0].mxu0
      %1977 = vmatprep.mubr.bf16.mxu0 0
      %1978 = vmatmul.mubr.bf16.gmra.mrb[0].mxu0 %v1775
      %v1979 = vpop.f32.mrb[0].mxu0
      %v1980 = vadd.f32 0.0, %v1979
      %v1981 = vpop.f32.mrb[0].mxu0
      %v1982 = vpop.f32.mrb[0].mxu0
      %v1983 = vadd.f32 0.0, %v1982
      %v1984 = vpop.f32.mrb[0].mxu0
      %1985 = vdwg.mxu0
      %v1986 = vadd.f32 %v1739, %v1860
      %v1987 = vadd.f32 %v1740, %v1863
      %v1988 = vadd.f32 %v1741, %v1868
      %v1989 = vadd.f32 %v1742, %v1871
      %v1990 = vadd.f32 %v1743, %v1876
      %v1991 = vadd.f32 %v1744, %v1879
      %v1992 = vadd.f32 %v1745, %v1884
      %v1993 = vadd.f32 %v1746, %v1887
      %v1994 = vadd.f32 %v1747, %v1892
      %v1995 = vadd.f32 %v1748, %v1895
      %v1996 = vadd.f32 %v1749, %v1900
      %v1997 = vadd.f32 %v1750, %v1903
      %v1998 = vadd.f32 %v1751, %v1908
      %v1999 = vadd.f32 %v1752, %v1911
      %v2000 = vadd.f32 %v1753, %v1916
      %v2001 = vadd.f32 %v1754, %v1919
      %v2002 = vadd.f32 %v1755, %v1924
      %v2003 = vadd.f32 %v1756, %v1927
      %v2004 = vadd.f32 %v1757, %v1932
      %v2005 = vadd.f32 %v1758, %v1935
      %v2006 = vadd.f32 %v1759, %v1940
      %v2007 = vadd.f32 %v1760, %v1943
      %v2008 = vadd.f32 %v1761, %v1948
      %v2009 = vadd.f32 %v1762, %v1951
      %v2010 = vadd.f32 %v1763, %v1956
      %v2011 = vadd.f32 %v1764, %v1959
      %v2012 = vadd.f32 %v1765, %v1964
      %v2013 = vadd.f32 %v1766, %v1967
      %v2014 = vadd.f32 %v1767, %v1972
      %v2015 = vadd.f32 %v1768, %v1975
      %v2016 = vadd.f32 %v1769, %v1980
      %v2017 = vadd.f32 %v1770, %v1983
      %v2019 = vshrl.u32 %v220, 16
      %v2021 = vrot.slane %v2019, 4
      %v2022 = vshll.u32 %v220, 16
      %v2024 = vrot.slane %v2022, 5
      %v2025 = vor.u32 %v2021, %v2024
      %v2026 = vrot.slane %v2025, 4
      %v2028 = vshll.u32 %v221, 16
      %v2030 = vrot.slane %v2028, 5
      %v2031 = vsel %vm372, %v2026, %v2030
      %v2032 = vshrl.u32 %v221, 16
      %v2034 = vrot.slane %v2032, 4
      %v2035 = vor.u32 %v2034, %v2030
      %v2036 = vrot.slane %v2035, 4
      %v2038 = vshll.u32 %v222, 16
      %v2040 = vrot.slane %v2038, 5
      %v2041 = vsel %vm372, %v2036, %v2040
      %v2042 = vunpack.c.l.b16 %v2031
      %v2043 = vunpack.c.l.b16 %v2041
      %v2044 = vpack.c.b16 %v2043, %v2042
      %v2062 = vunpack.c.l.b16 %v290
      %v2063 = vunpack.c.l.b16 %v291
      %v2064 = vunpack.c.l.b16 %v292
      %v2065 = vunpack.c.l.b16 %v293
      %v2066 = vunpack.c.l.b16 %v294
      %v2067 = vunpack.c.l.b16 %v295
      %v2068 = vunpack.c.l.b16 %v296
      %v2069 = vunpack.c.l.b16 %v297
      %v2070 = vunpack.c.l.b16 %v298
      %v2071 = vunpack.c.l.b16 %v299
      %v2072 = vunpack.c.l.b16 %v300
      %v2073 = vunpack.c.l.b16 %v301
      %v2074 = vunpack.c.l.b16 %v302
      %v2075 = vunpack.c.l.b16 %v303
      %v2076 = vunpack.c.l.b16 %v304
      %v2077 = vunpack.c.l.b16 %v305
      %v2078 = vpack.c.b16 %v2063, %v2062
      %v2079 = vpack.c.b16 %v2065, %v2064
      %v2080 = vpack.c.b16 %v2067, %v2066
      %v2081 = vpack.c.b16 %v2069, %v2068
      %v2082 = vpack.c.b16 %v2071, %v2070
      %v2083 = vpack.c.b16 %v2073, %v2072
      %v2084 = vpack.c.b16 %v2075, %v2074
      %v2085 = vpack.c.b16 %v2077, %v2076
      %2094 = vmatprep.subr.bf16.mxu0 0
      %2095 = vmatpush1.bf16.msra.mxu0 %v2078
      %2096 = vmatprep.subr.bf16.mxu0 0
      %2097 = vmatpush1.bf16.msra.mxu0 %v2079
      %2098 = vmatprep.subr.bf16.mxu0 0
      %2099 = vmatpush1.bf16.msra.mxu0 %v2080
      %2100 = vmatprep.subr.bf16.mxu0 0
      %2101 = vmatpush1.bf16.msra.mxu0 %v2081
      %2102 = vmatprep.subr.bf16.mxu0 0
      %2103 = vmatpush1.bf16.msra.mxu0 %v2082
      %2104 = vmatprep.subr.bf16.mxu0 0
      %2105 = vmatpush1.bf16.msra.mxu0 %v2083
      %2106 = vmatprep.subr.bf16.mxu0 0
      %2107 = vmatpush1.bf16.msra.mxu0 %v2084
      %2108 = vmatprep.subr.bf16.mxu0 0
      %2109 = vmatpush1.bf16.msra.mxu0 %v2085
      %2110 = vmatprep.subr.bf16.mxu0 0
      %2111 = vmatpush1.bf16.msra.mxu0 0
      %2112 = vmatprep.subr.bf16.mxu0 0
      %2113 = vmatpush1.bf16.msra.mxu0 0
      %2114 = vmatprep.subr.bf16.mxu0 0
      %2115 = vmatpush1.bf16.msra.mxu0 0
      %2116 = vmatprep.subr.bf16.mxu0 0
      %2117 = vmatpush1.bf16.msra.mxu0 0
      %2118 = vmatprep.subr.bf16.mxu0 0
      %2119 = vmatpush1.bf16.msra.mxu0 0
      %2120 = vmatprep.subr.bf16.mxu0 0
      %2121 = vmatpush1.bf16.msra.mxu0 0
      %2122 = vmatprep.subr.bf16.mxu0 0
      %2123 = vmatpush1.bf16.msra.mxu0 0
      %2124 = vmatprep.subr.bf16.mxu0 0
      %2125 = vmatpush1.bf16.msra.mxu0 0
      %2126 = vmatprep.mubr.bf16.mxu0 0
      %2127 = vmatmul.mubr.bf16.gmra.mrb[0].mxu0 %v790
      %v2128 = vpop.f32.mrb[0].mxu0
      %v2129 = vadd.f32 0.0, %v2128
      %v2130 = vpop.f32.mrb[0].mxu0
      %v2131 = vpop.f32.mrb[0].mxu0
      %v2132 = vadd.f32 0.0, %v2131
      %v2133 = vpop.f32.mrb[0].mxu0
      %2134 = vmatprep.mubr.bf16.mxu0 0
      %2135 = vmatmul.mubr.bf16.gmra.mrb[0].mxu0 %v791
      %v2136 = vpop.f32.mrb[0].mxu0
      %v2137 = vadd.f32 0.0, %v2136
      %v2138 = vpop.f32.mrb[0].mxu0
      %v2139 = vpop.f32.mrb[0].mxu0
      %v2140 = vadd.f32 0.0, %v2139
      %v2141 = vpop.f32.mrb[0].mxu0
      %2142 = vmatprep.mubr.bf16.mxu0 0
      %2143 = vmatmul.mubr.bf16.gmra.mrb[0].mxu0 %v792
      %v2144 = vpop.f32.mrb[0].mxu0
      %v2145 = vadd.f32 0.0, %v2144
      %v2146 = vpop.f32.mrb[0].mxu0
      %v2147 = vpop.f32.mrb[0].mxu0
      %v2148 = vadd.f32 0.0, %v2147
      %v2149 = vpop.f32.mrb[0].mxu0
      %2150 = vmatprep.mubr.bf16.mxu0 0
      %2151 = vmatmul.mubr.bf16.gmra.mrb[0].mxu0 %v793
      %v2152 = vpop.f32.mrb[0].mxu0
      %v2153 = vadd.f32 0.0, %v2152
      %v2154 = vpop.f32.mrb[0].mxu0
      %v2155 = vpop.f32.mrb[0].mxu0
      %v2156 = vadd.f32 0.0, %v2155
      %v2157 = vpop.f32.mrb[0].mxu0
      %2158 = vmatprep.mubr.bf16.mxu0 0
      %2159 = vmatmul.mubr.bf16.gmra.mrb[0].mxu0 %v794
      %v2160 = vpop.f32.mrb[0].mxu0
      %v2161 = vadd.f32 0.0, %v2160
      %v2162 = vpop.f32.mrb[0].mxu0
      %v2163 = vpop.f32.mrb[0].mxu0
      %v2164 = vadd.f32 0.0, %v2163
      %v2165 = vpop.f32.mrb[0].mxu0
      %2166 = vmatprep.mubr.bf16.mxu0 0
      %2167 = vmatmul.mubr.bf16.gmra.mrb[0].mxu0 %v795
      %v2168 = vpop.f32.mrb[0].mxu0
      %v2169 = vadd.f32 0.0, %v2168
      %v2170 = vpop.f32.mrb[0].mxu0
      %v2171 = vpop.f32.mrb[0].mxu0
      %v2172 = vadd.f32 0.0, %v2171
      %v2173 = vpop.f32.mrb[0].mxu0
      %2174 = vmatprep.mubr.bf16.mxu0 0
      %2175 = vmatmul.mubr.bf16.gmra.mrb[0].mxu0 %v796
      %v2176 = vpop.f32.mrb[0].mxu0
      %v2177 = vadd.f32 0.0, %v2176
      %v2178 = vpop.f32.mrb[0].mxu0
      %v2179 = vpop.f32.mrb[0].mxu0
      %v2180 = vadd.f32 0.0, %v2179
      %v2181 = vpop.f32.mrb[0].mxu0
      %2182 = vmatprep.mubr.bf16.mxu0 0
      %2183 = vmatmul.mubr.bf16.gmra.mrb[0].mxu0 %v797
      %v2184 = vpop.f32.mrb[0].mxu0
      %v2185 = vadd.f32 0.0, %v2184
      %v2186 = vpop.f32.mrb[0].mxu0
      %v2187 = vpop.f32.mrb[0].mxu0
      %v2188 = vadd.f32 0.0, %v2187
      %v2189 = vpop.f32.mrb[0].mxu0
      %2190 = vmatprep.mubr.bf16.mxu0 0
      %2191 = vmatmul.mubr.bf16.gmra.mrb[0].mxu0 %v798
      %v2192 = vpop.f32.mrb[0].mxu0
      %v2193 = vadd.f32 0.0, %v2192
      %v2194 = vpop.f32.mrb[0].mxu0
      %v2195 = vpop.f32.mrb[0].mxu0
      %v2196 = vadd.f32 0.0, %v2195
      %v2197 = vpop.f32.mrb[0].mxu0
      %2198 = vmatprep.mubr.bf16.mxu0 0
      %2199 = vmatmul.mubr.bf16.gmra.mrb[0].mxu0 %v799
      %v2200 = vpop.f32.mrb[0].mxu0
      %v2201 = vadd.f32 0.0, %v2200
      %v2202 = vpop.f32.mrb[0].mxu0
      %v2203 = vpop.f32.mrb[0].mxu0
      %v2204 = vadd.f32 0.0, %v2203
      %v2205 = vpop.f32.mrb[0].mxu0
      %2206 = vmatprep.mubr.bf16.mxu0 0
      %2207 = vmatmul.mubr.bf16.gmra.mrb[0].mxu0 %v800
      %v2208 = vpop.f32.mrb[0].mxu0
      %v2209 = vadd.f32 0.0, %v2208
      %v2210 = vpop.f32.mrb[0].mxu0
      %v2211 = vpop.f32.mrb[0].mxu0
      %v2212 = vadd.f32 0.0, %v2211
      %v2213 = vpop.f32.mrb[0].mxu0
      %2214 = vmatprep.mubr.bf16.mxu0 0
      %2215 = vmatmul.mubr.bf16.gmra.mrb[0].mxu0 %v801
      %v2216 = vpop.f32.mrb[0].mxu0
      %v2217 = vadd.f32 0.0, %v2216
      %v2218 = vpop.f32.mrb[0].mxu0
      %v2219 = vpop.f32.mrb[0].mxu0
      %v2220 = vadd.f32 0.0, %v2219
      %v2221 = vpop.f32.mrb[0].mxu0
      %2222 = vmatprep.mubr.bf16.mxu0 0
      %2223 = vmatmul.mubr.bf16.gmra.mrb[0].mxu0 %v802
      %v2224 = vpop.f32.mrb[0].mxu0
      %v2225 = vadd.f32 0.0, %v2224
      %v2226 = vpop.f32.mrb[0].mxu0
      %v2227 = vpop.f32.mrb[0].mxu0
      %v2228 = vadd.f32 0.0, %v2227
      %v2229 = vpop.f32.mrb[0].mxu0
      %2230 = vmatprep.mubr.bf16.mxu0 0
      %2231 = vmatmul.mubr.bf16.gmra.mrb[0].mxu0 %v803
      %v2232 = vpop.f32.mrb[0].mxu0
      %v2233 = vadd.f32 0.0, %v2232
      %v2234 = vpop.f32.mrb[0].mxu0
      %v2235 = vpop.f32.mrb[0].mxu0
      %v2236 = vadd.f32 0.0, %v2235
      %v2237 = vpop.f32.mrb[0].mxu0
      %2238 = vmatprep.mubr.bf16.mxu0 0
      %2239 = vmatmul.mubr.bf16.gmra.mrb[0].mxu0 %v804
      %v2240 = vpop.f32.mrb[0].mxu0
      %v2241 = vadd.f32 0.0, %v2240
      %v2242 = vpop.f32.mrb[0].mxu0
      %v2243 = vpop.f32.mrb[0].mxu0
      %v2244 = vadd.f32 0.0, %v2243
      %v2245 = vpop.f32.mrb[0].mxu0
      %2246 = vmatprep.mubr.bf16.mxu0 0
      %2247 = vmatmul.mubr.bf16.gmra.mrb[0].mxu0 %v2044
      %v2248 = vpop.f32.mrb[0].mxu0
      %v2249 = vadd.f32 0.0, %v2248
      %v2250 = vpop.f32.mrb[0].mxu0
      %v2251 = vpop.f32.mrb[0].mxu0
      %v2252 = vadd.f32 0.0, %v2251
      %v2253 = vpop.f32.mrb[0].mxu0
      %2254 = vdwg.mxu0
      %v2255 = vadd.f32 %v1986, %v2129
      %v2256 = vadd.f32 %v1987, %v2132
      %v2257 = vadd.f32 %v1988, %v2137
      %v2258 = vadd.f32 %v1989, %v2140
      %v2259 = vadd.f32 %v1990, %v2145
      %v2260 = vadd.f32 %v1991, %v2148
      %v2261 = vadd.f32 %v1992, %v2153
      %v2262 = vadd.f32 %v1993, %v2156
      %v2263 = vadd.f32 %v1994, %v2161
      %v2264 = vadd.f32 %v1995, %v2164
      %v2265 = vadd.f32 %v1996, %v2169
      %v2266 = vadd.f32 %v1997, %v2172
      %v2267 = vadd.f32 %v1998, %v2177
      %v2268 = vadd.f32 %v1999, %v2180
      %v2269 = vadd.f32 %v2000, %v2185
      %v2270 = vadd.f32 %v2001, %v2188
      %v2271 = vadd.f32 %v2002, %v2193
      %v2272 = vadd.f32 %v2003, %v2196
      %v2273 = vadd.f32 %v2004, %v2201
      %v2274 = vadd.f32 %v2005, %v2204
      %v2275 = vadd.f32 %v2006, %v2209
      %v2276 = vadd.f32 %v2007, %v2212
      %v2277 = vadd.f32 %v2008, %v2217
      %v2278 = vadd.f32 %v2009, %v2220
      %v2279 = vadd.f32 %v2010, %v2225
      %v2280 = vadd.f32 %v2011, %v2228
      %v2281 = vadd.f32 %v2012, %v2233
      %v2282 = vadd.f32 %v2013, %v2236
      %v2283 = vadd.f32 %v2014, %v2241
      %v2284 = vadd.f32 %v2015, %v2244
      %v2285 = vadd.f32 %v2016, %v2249
      %v2286 = vadd.f32 %v2017, %v2252
      %v2288 = vrot.slane %v220, 5
      %v2289 = vrot.slane %v2288, 4
      %v2290 = vrot.slane %v221, 5
      %v2291 = vsel %vm1353, %v2289, %v2290
      %v2292 = vrot.slane %v2290, 4
      %v2293 = vrot.slane %v222, 5
      %v2294 = vsel %vm1353, %v2292, %v2293
      %v2295 = vunpack.c.l.b16 %v2291
      %v2296 = vunpack.c.l.b16 %v2294
      %v2297 = vpack.c.b16 %v2296, %v2295
      %v2315 = vunpack.c.l.b16 %v306
      %v2316 = vunpack.c.l.b16 %v307
      %v2317 = vunpack.c.l.b16 %v308
      %v2318 = vunpack.c.l.b16 %v309
      %v2319 = vunpack.c.l.b16 %v310
      %v2320 = vunpack.c.l.b16 %v311
      %v2321 = vunpack.c.l.b16 %v312
      %v2322 = vunpack.c.l.b16 %v313
      %v2323 = vunpack.c.l.b16 %v314
      %v2324 = vunpack.c.l.b16 %v315
      %v2325 = vunpack.c.l.b16 %v316
      %v2326 = vunpack.c.l.b16 %v317
      %v2327 = vunpack.c.l.b16 %v318
      %v2328 = vunpack.c.l.b16 %v319
      %v2329 = vunpack.c.l.b16 %v320
      %v2330 = vunpack.c.l.b16 %v321
      %v2331 = vpack.c.b16 %v2316, %v2315
      %v2332 = vpack.c.b16 %v2318, %v2317
      %v2333 = vpack.c.b16 %v2320, %v2319
      %v2334 = vpack.c.b16 %v2322, %v2321
      %v2335 = vpack.c.b16 %v2324, %v2323
      %v2336 = vpack.c.b16 %v2326, %v2325
      %v2337 = vpack.c.b16 %v2328, %v2327
      %v2338 = vpack.c.b16 %v2330, %v2329
      %2347 = vmatprep.subr.bf16.mxu0 0
      %2348 = vmatpush1.bf16.msra.mxu0 %v2331
      %2349 = vmatprep.subr.bf16.mxu0 0
      %2350 = vmatpush1.bf16.msra.mxu0 %v2332
      %2351 = vmatprep.subr.bf16.mxu0 0
      %2352 = vmatpush1.bf16.msra.mxu0 %v2333
      %2353 = vmatprep.subr.bf16.mxu0 0
      %2354 = vmatpush1.bf16.msra.mxu0 %v2334
      %2355 = vmatprep.subr.bf16.mxu0 0
      %2356 = vmatpush1.bf16.msra.mxu0 %v2335
      %2357 = vmatprep.subr.bf16.mxu0 0
      %2358 = vmatpush1.bf16.msra.mxu0 %v2336
      %2359 = vmatprep.subr.bf16.mxu0 0
      %2360 = vmatpush1.bf16.msra.mxu0 %v2337
      %2361 = vmatprep.subr.bf16.mxu0 0
      %2362 = vmatpush1.bf16.msra.mxu0 %v2338
      %2363 = vmatprep.subr.bf16.mxu0 0
      %2364 = vmatpush1.bf16.msra.mxu0 0
      %2365 = vmatprep.subr.bf16.mxu0 0
      %2366 = vmatpush1.bf16.msra.mxu0 0
      %2367 = vmatprep.subr.bf16.mxu0 0
      %2368 = vmatpush1.bf16.msra.mxu0 0
      %2369 = vmatprep.subr.bf16.mxu0 0
      %2370 = vmatpush1.bf16.msra.mxu0 0
      %2371 = vmatprep.subr.bf16.mxu0 0
      %2372 = vmatpush1.bf16.msra.mxu0 0
      %2373 = vmatprep.subr.bf16.mxu0 0
      %2374 = vmatpush1.bf16.msra.mxu0 0
      %2375 = vmatprep.subr.bf16.mxu0 0
      %2376 = vmatpush1.bf16.msra.mxu0 0
      %2377 = vmatprep.subr.bf16.mxu0 0
      %2378 = vmatpush1.bf16.msra.mxu0 0
      %2379 = vmatprep.mubr.bf16.mxu0 0
      %2380 = vmatmul.mubr.bf16.gmra.mrb[0].mxu0 %v1499
      %v2381 = vpop.f32.mrb[0].mxu0
      %v2382 = vadd.f32 0.0, %v2381
      %v2383 = vpop.f32.mrb[0].mxu0
      %v2384 = vpop.f32.mrb[0].mxu0
      %v2385 = vadd.f32 0.0, %v2384
      %v2386 = vpop.f32.mrb[0].mxu0
      %2387 = vmatprep.mubr.bf16.mxu0 0
      %2388 = vmatmul.mubr.bf16.gmra.mrb[0].mxu0 %v1500
      %v2389 = vpop.f32.mrb[0].mxu0
      %v2390 = vadd.f32 0.0, %v2389
      %v2391 = vpop.f32.mrb[0].mxu0
      %v2392 = vpop.f32.mrb[0].mxu0
      %v2393 = vadd.f32 0.0, %v2392
      %v2394 = vpop.f32.mrb[0].mxu0
      %2395 = vmatprep.mubr.bf16.mxu0 0
      %2396 = vmatmul.mubr.bf16.gmra.mrb[0].mxu0 %v1501
      %v2397 = vpop.f32.mrb[0].mxu0
      %v2398 = vadd.f32 0.0, %v2397
      %v2399 = vpop.f32.mrb[0].mxu0
      %v2400 = vpop.f32.mrb[0].mxu0
      %v2401 = vadd.f32 0.0, %v2400
      %v2402 = vpop.f32.mrb[0].mxu0
      %2403 = vmatprep.mubr.bf16.mxu0 0
      %2404 = vmatmul.mubr.bf16.gmra.mrb[0].mxu0 %v1502
      %v2405 = vpop.f32.mrb[0].mxu0
      %v2406 = vadd.f32 0.0, %v2405
      %v2407 = vpop.f32.mrb[0].mxu0
      %v2408 = vpop.f32.mrb[0].mxu0
      %v2409 = vadd.f32 0.0, %v2408
      %v2410 = vpop.f32.mrb[0].mxu0
      %2411 = vmatprep.mubr.bf16.mxu0 0
      %2412 = vmatmul.mubr.bf16.gmra.mrb[0].mxu0 %v1503
      %v2413 = vpop.f32.mrb[0].mxu0
      %v2414 = vadd.f32 0.0, %v2413
      %v2415 = vpop.f32.mrb[0].mxu0
      %v2416 = vpop.f32.mrb[0].mxu0
      %v2417 = vadd.f32 0.0, %v2416
      %v2418 = vpop.f32.mrb[0].mxu0
      %2419 = vmatprep.mubr.bf16.mxu0 0
      %2420 = vmatmul.mubr.bf16.gmra.mrb[0].mxu0 %v1504
      %v2421 = vpop.f32.mrb[0].mxu0
      %v2422 = vadd.f32 0.0, %v2421
      %v2423 = vpop.f32.mrb[0].mxu0
      %v2424 = vpop.f32.mrb[0].mxu0
      %v2425 = vadd.f32 0.0, %v2424
      %v2426 = vpop.f32.mrb[0].mxu0
      %2427 = vmatprep.mubr.bf16.mxu0 0
      %2428 = vmatmul.mubr.bf16.gmra.mrb[0].mxu0 %v1505
      %v2429 = vpop.f32.mrb[0].mxu0
      %v2430 = vadd.f32 0.0, %v2429
      %v2431 = vpop.f32.mrb[0].mxu0
      %v2432 = vpop.f32.mrb[0].mxu0
      %v2433 = vadd.f32 0.0, %v2432
      %v2434 = vpop.f32.mrb[0].mxu0
      %2435 = vmatprep.mubr.bf16.mxu0 0
      %2436 = vmatmul.mubr.bf16.gmra.mrb[0].mxu0 %v1506
      %v2437 = vpop.f32.mrb[0].mxu0
      %v2438 = vadd.f32 0.0, %v2437
      %v2439 = vpop.f32.mrb[0].mxu0
      %v2440 = vpop.f32.mrb[0].mxu0
      %v2441 = vadd.f32 0.0, %v2440
      %v2442 = vpop.f32.mrb[0].mxu0
      %2443 = vmatprep.mubr.bf16.mxu0 0
      %2444 = vmatmul.mubr.bf16.gmra.mrb[0].mxu0 %v1507
      %v2445 = vpop.f32.mrb[0].mxu0
      %v2446 = vadd.f32 0.0, %v2445
      %v2447 = vpop.f32.mrb[0].mxu0
      %v2448 = vpop.f32.mrb[0].mxu0
      %v2449 = vadd.f32 0.0, %v2448
      %v2450 = vpop.f32.mrb[0].mxu0
      %2451 = vmatprep.mubr.bf16.mxu0 0
      %2452 = vmatmul.mubr.bf16.gmra.mrb[0].mxu0 %v1508
      %v2453 = vpop.f32.mrb[0].mxu0
      %v2454 = vadd.f32 0.0, %v2453
      %v2455 = vpop.f32.mrb[0].mxu0
      %v2456 = vpop.f32.mrb[0].mxu0
      %v2457 = vadd.f32 0.0, %v2456
      %v2458 = vpop.f32.mrb[0].mxu0
      %2459 = vmatprep.mubr.bf16.mxu0 0
      %2460 = vmatmul.mubr.bf16.gmra.mrb[0].mxu0 %v1509
      %v2461 = vpop.f32.mrb[0].mxu0
      %v2462 = vadd.f32 0.0, %v2461
      %v2463 = vpop.f32.mrb[0].mxu0
      %v2464 = vpop.f32.mrb[0].mxu0
      %v2465 = vadd.f32 0.0, %v2464
      %v2466 = vpop.f32.mrb[0].mxu0
      %2467 = vmatprep.mubr.bf16.mxu0 0
      %2468 = vmatmul.mubr.bf16.gmra.mrb[0].mxu0 %v1510
      %v2469 = vpop.f32.mrb[0].mxu0
      %v2470 = vadd.f32 0.0, %v2469
      %v2471 = vpop.f32.mrb[0].mxu0
      %v2472 = vpop.f32.mrb[0].mxu0
      %v2473 = vadd.f32 0.0, %v2472
      %v2474 = vpop.f32.mrb[0].mxu0
      %2475 = vmatprep.mubr.bf16.mxu0 0
      %2476 = vmatmul.mubr.bf16.gmra.mrb[0].mxu0 %v1511
      %v2477 = vpop.f32.mrb[0].mxu0
      %v2478 = vadd.f32 0.0, %v2477
      %v2479 = vpop.f32.mrb[0].mxu0
      %v2480 = vpop.f32.mrb[0].mxu0
      %v2481 = vadd.f32 0.0, %v2480
      %v2482 = vpop.f32.mrb[0].mxu0
      %2483 = vmatprep.mubr.bf16.mxu0 0
      %2484 = vmatmul.mubr.bf16.gmra.mrb[0].mxu0 %v1512
      %v2485 = vpop.f32.mrb[0].mxu0
      %v2486 = vadd.f32 0.0, %v2485
      %v2487 = vpop.f32.mrb[0].mxu0
      %v2488 = vpop.f32.mrb[0].mxu0
      %v2489 = vadd.f32 0.0, %v2488
      %v2490 = vpop.f32.mrb[0].mxu0
      %2491 = vmatprep.mubr.bf16.mxu0 0
      %2492 = vmatmul.mubr.bf16.gmra.mrb[0].mxu0 %v1513
      %v2493 = vpop.f32.mrb[0].mxu0
      %v2494 = vadd.f32 0.0, %v2493
      %v2495 = vpop.f32.mrb[0].mxu0
      %v2496 = vpop.f32.mrb[0].mxu0
      %v2497 = vadd.f32 0.0, %v2496
      %v2498 = vpop.f32.mrb[0].mxu0
      %2499 = vmatprep.mubr.bf16.mxu0 0
      %2500 = vmatmul.mubr.bf16.gmra.mrb[0].mxu0 %v2297
      %v2501 = vpop.f32.mrb[0].mxu0
      %v2502 = vadd.f32 0.0, %v2501
      %v2503 = vpop.f32.mrb[0].mxu0
      %v2504 = vpop.f32.mrb[0].mxu0
      %v2505 = vadd.f32 0.0, %v2504
      %v2506 = vpop.f32.mrb[0].mxu0
      %2507 = vdwg.mxu0
      %v2508 = vadd.f32 %v2255, %v2382
      %v2509 = vadd.f32 %v2256, %v2385
      %v2510 = vadd.f32 %v2257, %v2390
      %v2511 = vadd.f32 %v2258, %v2393
      %v2512 = vadd.f32 %v2259, %v2398
      %v2513 = vadd.f32 %v2260, %v2401
      %v2514 = vadd.f32 %v2261, %v2406
      %v2515 = vadd.f32 %v2262, %v2409
      %v2516 = vadd.f32 %v2263, %v2414
      %v2517 = vadd.f32 %v2264, %v2417
      %v2518 = vadd.f32 %v2265, %v2422
      %v2519 = vadd.f32 %v2266, %v2425
      %v2520 = vadd.f32 %v2267, %v2430
      %v2521 = vadd.f32 %v2268, %v2433
      %v2522 = vadd.f32 %v2269, %v2438
      %v2523 = vadd.f32 %v2270, %v2441
      %v2524 = vadd.f32 %v2271, %v2446
      %v2525 = vadd.f32 %v2272, %v2449
      %v2526 = vadd.f32 %v2273, %v2454
      %v2527 = vadd.f32 %v2274, %v2457
      %v2528 = vadd.f32 %v2275, %v2462
      %v2529 = vadd.f32 %v2276, %v2465
      %v2530 = vadd.f32 %v2277, %v2470
      %v2531 = vadd.f32 %v2278, %v2473
      %v2532 = vadd.f32 %v2279, %v2478
      %v2533 = vadd.f32 %v2280, %v2481
      %v2534 = vadd.f32 %v2281, %v2486
      %v2535 = vadd.f32 %v2282, %v2489
      %v2536 = vadd.f32 %v2283, %v2494
      %v2537 = vadd.f32 %v2284, %v2497
      %v2538 = vadd.f32 %v2285, %v2502
      %v2539 = vadd.f32 %v2286, %v2505
      %v2542 = vunpack.c.l.b16 %v223
      %v2543 = vunpack.c.l.b16 %v224
      %v2544 = vpack.c.b16 %v2543, %v2542
      %v2562 = vunpack.c.l.b16 %v322
      %v2563 = vunpack.c.l.b16 %v323
      %v2564 = vunpack.c.l.b16 %v324
      %v2565 = vunpack.c.l.b16 %v325
      %v2566 = vunpack.c.l.b16 %v326
      %v2567 = vunpack.c.l.b16 %v327
      %v2568 = vunpack.c.l.b16 %v328
      %v2569 = vunpack.c.l.b16 %v329
      %v2570 = vunpack.c.l.b16 %v330
      %v2571 = vunpack.c.l.b16 %v331
      %v2572 = vunpack.c.l.b16 %v332
      %v2573 = vunpack.c.l.b16 %v333
      %v2574 = vunpack.c.l.b16 %v334
      %v2575 = vunpack.c.l.b16 %v335
      %v2576 = vunpack.c.l.b16 %v336
      %v2577 = vunpack.c.l.b16 %v337
      %v2578 = vpack.c.b16 %v2563, %v2562
      %v2579 = vpack.c.b16 %v2565, %v2564
      %v2580 = vpack.c.b16 %v2567, %v2566
      %v2581 = vpack.c.b16 %v2569, %v2568
      %v2582 = vpack.c.b16 %v2571, %v2570
      %v2583 = vpack.c.b16 %v2573, %v2572
      %v2584 = vpack.c.b16 %v2575, %v2574
      %v2585 = vpack.c.b16 %v2577, %v2576
      %2594 = vmatprep.subr.bf16.mxu0 0
      %2595 = vmatpush1.bf16.msra.mxu0 %v2578
      %2596 = vmatprep.subr.bf16.mxu0 0
      %2597 = vmatpush1.bf16.msra.mxu0 %v2579
      %2598 = vmatprep.subr.bf16.mxu0 0
      %2599 = vmatpush1.bf16.msra.mxu0 %v2580
      %2600 = vmatprep.subr.bf16.mxu0 0
      %2601 = vmatpush1.bf16.msra.mxu0 %v2581
      %2602 = vmatprep.subr.bf16.mxu0 0
      %2603 = vmatpush1.bf16.msra.mxu0 %v2582
      %2604 = vmatprep.subr.bf16.mxu0 0
      %2605 = vmatpush1.bf16.msra.mxu0 %v2583
      %2606 = vmatprep.subr.bf16.mxu0 0
      %2607 = vmatpush1.bf16.msra.mxu0 %v2584
      %2608 = vmatprep.subr.bf16.mxu0 0
      %2609 = vmatpush1.bf16.msra.mxu0 %v2585
      %2610 = vmatprep.subr.bf16.mxu0 0
      %2611 = vmatpush1.bf16.msra.mxu0 0
      %2612 = vmatprep.subr.bf16.mxu0 0
      %2613 = vmatpush1.bf16.msra.mxu0 0
      %2614 = vmatprep.subr.bf16.mxu0 0
      %2615 = vmatpush1.bf16.msra.mxu0 0
      %2616 = vmatprep.subr.bf16.mxu0 0
      %2617 = vmatpush1.bf16.msra.mxu0 0
      %2618 = vmatprep.subr.bf16.mxu0 0
      %2619 = vmatpush1.bf16.msra.mxu0 0
      %2620 = vmatprep.subr.bf16.mxu0 0
      %2621 = vmatpush1.bf16.msra.mxu0 0
      %2622 = vmatprep.subr.bf16.mxu0 0
      %2623 = vmatpush1.bf16.msra.mxu0 0
      %2624 = vmatprep.subr.bf16.mxu0 0
      %2625 = vmatpush1.bf16.msra.mxu0 0
      %2626 = vmatprep.mubr.bf16.mxu0 0
      %2627 = vmatmul.mubr.bf16.gmra.mrb[0].mxu0 %v1096
      %v2628 = vpop.f32.mrb[0].mxu0
      %v2629 = vadd.f32 0.0, %v2628
      %v2630 = vpop.f32.mrb[0].mxu0
      %v2631 = vpop.f32.mrb[0].mxu0
      %v2632 = vadd.f32 0.0, %v2631
      %v2633 = vpop.f32.mrb[0].mxu0
      %2634 = vmatprep.mubr.bf16.mxu0 0
      %2635 = vmatmul.mubr.bf16.gmra.mrb[0].mxu0 %v1097
      %v2636 = vpop.f32.mrb[0].mxu0
      %v2637 = vadd.f32 0.0, %v2636
      %v2638 = vpop.f32.mrb[0].mxu0
      %v2639 = vpop.f32.mrb[0].mxu0
      %v2640 = vadd.f32 0.0, %v2639
      %v2641 = vpop.f32.mrb[0].mxu0
      %2642 = vmatprep.mubr.bf16.mxu0 0
      %2643 = vmatmul.mubr.bf16.gmra.mrb[0].mxu0 %v1098
      %v2644 = vpop.f32.mrb[0].mxu0
      %v2645 = vadd.f32 0.0, %v2644
      %v2646 = vpop.f32.mrb[0].mxu0
      %v2647 = vpop.f32.mrb[0].mxu0
      %v2648 = vadd.f32 0.0, %v2647
      %v2649 = vpop.f32.mrb[0].mxu0
      %2650 = vmatprep.mubr.bf16.mxu0 0
      %2651 = vmatmul.mubr.bf16.gmra.mrb[0].mxu0 %v1099
      %v2652 = vpop.f32.mrb[0].mxu0
      %v2653 = vadd.f32 0.0, %v2652
      %v2654 = vpop.f32.mrb[0].mxu0
      %v2655 = vpop.f32.mrb[0].mxu0
      %v2656 = vadd.f32 0.0, %v2655
      %v2657 = vpop.f32.mrb[0].mxu0
      %2658 = vmatprep.mubr.bf16.mxu0 0
      %2659 = vmatmul.mubr.bf16.gmra.mrb[0].mxu0 %v1100
      %v2660 = vpop.f32.mrb[0].mxu0
      %v2661 = vadd.f32 0.0, %v2660
      %v2662 = vpop.f32.mrb[0].mxu0
      %v2663 = vpop.f32.mrb[0].mxu0
      %v2664 = vadd.f32 0.0, %v2663
      %v2665 = vpop.f32.mrb[0].mxu0
      %2666 = vmatprep.mubr.bf16.mxu0 0
      %2667 = vmatmul.mubr.bf16.gmra.mrb[0].mxu0 %v1101
      %v2668 = vpop.f32.mrb[0].mxu0
      %v2669 = vadd.f32 0.0, %v2668
      %v2670 = vpop.f32.mrb[0].mxu0
      %v2671 = vpop.f32.mrb[0].mxu0
      %v2672 = vadd.f32 0.0, %v2671
      %v2673 = vpop.f32.mrb[0].mxu0
      %2674 = vmatprep.mubr.bf16.mxu0 0
      %2675 = vmatmul.mubr.bf16.gmra.mrb[0].mxu0 %v1102
      %v2676 = vpop.f32.mrb[0].mxu0
      %v2677 = vadd.f32 0.0, %v2676
      %v2678 = vpop.f32.mrb[0].mxu0
      %v2679 = vpop.f32.mrb[0].mxu0
      %v2680 = vadd.f32 0.0, %v2679
      %v2681 = vpop.f32.mrb[0].mxu0
      %2682 = vmatprep.mubr.bf16.mxu0 0
      %2683 = vmatmul.mubr.bf16.gmra.mrb[0].mxu0 %v1103
      %v2684 = vpop.f32.mrb[0].mxu0
      %v2685 = vadd.f32 0.0, %v2684
      %v2686 = vpop.f32.mrb[0].mxu0
      %v2687 = vpop.f32.mrb[0].mxu0
      %v2688 = vadd.f32 0.0, %v2687
      %v2689 = vpop.f32.mrb[0].mxu0
      %2690 = vmatprep.mubr.bf16.mxu0 0
      %2691 = vmatmul.mubr.bf16.gmra.mrb[0].mxu0 %v1104
      %v2692 = vpop.f32.mrb[0].mxu0
      %v2693 = vadd.f32 0.0, %v2692
      %v2694 = vpop.f32.mrb[0].mxu0
      %v2695 = vpop.f32.mrb[0].mxu0
      %v2696 = vadd.f32 0.0, %v2695
      %v2697 = vpop.f32.mrb[0].mxu0
      %2698 = vmatprep.mubr.bf16.mxu0 0
      %2699 = vmatmul.mubr.bf16.gmra.mrb[0].mxu0 %v1105
      %v2700 = vpop.f32.mrb[0].mxu0
      %v2701 = vadd.f32 0.0, %v2700
      %v2702 = vpop.f32.mrb[0].mxu0
      %v2703 = vpop.f32.mrb[0].mxu0
      %v2704 = vadd.f32 0.0, %v2703
      %v2705 = vpop.f32.mrb[0].mxu0
      %2706 = vmatprep.mubr.bf16.mxu0 0
      %2707 = vmatmul.mubr.bf16.gmra.mrb[0].mxu0 %v1106
      %v2708 = vpop.f32.mrb[0].mxu0
      %v2709 = vadd.f32 0.0, %v2708
      %v2710 = vpop.f32.mrb[0].mxu0
      %v2711 = vpop.f32.mrb[0].mxu0
      %v2712 = vadd.f32 0.0, %v2711
      %v2713 = vpop.f32.mrb[0].mxu0
      %2714 = vmatprep.mubr.bf16.mxu0 0
      %2715 = vmatmul.mubr.bf16.gmra.mrb[0].mxu0 %v1107
      %v2716 = vpop.f32.mrb[0].mxu0
      %v2717 = vadd.f32 0.0, %v2716
      %v2718 = vpop.f32.mrb[0].mxu0
      %v2719 = vpop.f32.mrb[0].mxu0
      %v2720 = vadd.f32 0.0, %v2719
      %v2721 = vpop.f32.mrb[0].mxu0
      %2722 = vmatprep.mubr.bf16.mxu0 0
      %2723 = vmatmul.mubr.bf16.gmra.mrb[0].mxu0 %v1108
      %v2724 = vpop.f32.mrb[0].mxu0
      %v2725 = vadd.f32 0.0, %v2724
      %v2726 = vpop.f32.mrb[0].mxu0
      %v2727 = vpop.f32.mrb[0].mxu0
      %v2728 = vadd.f32 0.0, %v2727
      %v2729 = vpop.f32.mrb[0].mxu0
      %2730 = vmatprep.mubr.bf16.mxu0 0
      %2731 = vmatmul.mubr.bf16.gmra.mrb[0].mxu0 %v1109
      %v2732 = vpop.f32.mrb[0].mxu0
      %v2733 = vadd.f32 0.0, %v2732
      %v2734 = vpop.f32.mrb[0].mxu0
      %v2735 = vpop.f32.mrb[0].mxu0
      %v2736 = vadd.f32 0.0, %v2735
      %v2737 = vpop.f32.mrb[0].mxu0
      %2738 = vmatprep.mubr.bf16.mxu0 0
      %2739 = vmatmul.mubr.bf16.gmra.mrb[0].mxu0 %v1775
      %v2740 = vpop.f32.mrb[0].mxu0
      %v2741 = vadd.f32 0.0, %v2740
      %v2742 = vpop.f32.mrb[0].mxu0
      %v2743 = vpop.f32.mrb[0].mxu0
      %v2744 = vadd.f32 0.0, %v2743
      %v2745 = vpop.f32.mrb[0].mxu0
      %2746 = vmatprep.mubr.bf16.mxu0 0
      %2747 = vmatmul.mubr.bf16.gmra.mrb[0].mxu0 %v2544
      %v2748 = vpop.f32.mrb[0].mxu0
      %v2749 = vadd.f32 0.0, %v2748
      %v2750 = vpop.f32.mrb[0].mxu0
      %v2751 = vpop.f32.mrb[0].mxu0
      %v2752 = vadd.f32 0.0, %v2751
      %v2753 = vpop.f32.mrb[0].mxu0
      %2754 = vdwg.mxu0
      %v2755 = vadd.f32 %v2508, %v2629
      %v2756 = vadd.f32 %v2509, %v2632
      %v2757 = vadd.f32 %v2510, %v2637
      %v2758 = vadd.f32 %v2511, %v2640
      %v2759 = vadd.f32 %v2512, %v2645
      %v2760 = vadd.f32 %v2513, %v2648
      %v2761 = vadd.f32 %v2514, %v2653
      %v2762 = vadd.f32 %v2515, %v2656
      %v2763 = vadd.f32 %v2516, %v2661
      %v2764 = vadd.f32 %v2517, %v2664
      %v2765 = vadd.f32 %v2518, %v2669
      %v2766 = vadd.f32 %v2519, %v2672
      %v2767 = vadd.f32 %v2520, %v2677
      %v2768 = vadd.f32 %v2521, %v2680
      %v2769 = vadd.f32 %v2522, %v2685
      %v2770 = vadd.f32 %v2523, %v2688
      %v2771 = vadd.f32 %v2524, %v2693
      %v2772 = vadd.f32 %v2525, %v2696
      %v2773 = vadd.f32 %v2526, %v2701
      %v2774 = vadd.f32 %v2527, %v2704
      %v2775 = vadd.f32 %v2528, %v2709
      %v2776 = vadd.f32 %v2529, %v2712
      %v2777 = vadd.f32 %v2530, %v2717
      %v2778 = vadd.f32 %v2531, %v2720
      %v2779 = vadd.f32 %v2532, %v2725
      %v2780 = vadd.f32 %v2533, %v2728
      %v2781 = vadd.f32 %v2534, %v2733
      %v2782 = vadd.f32 %v2535, %v2736
      %v2783 = vadd.f32 %v2536, %v2741
      %v2784 = vadd.f32 %v2537, %v2744
      %v2785 = vadd.f32 %v2538, %v2749
      %v2786 = vadd.f32 %v2539, %v2752
      %v2788 = vshrl.u32 %v223, 16
      %v2790 = vrot.slane %v2788, 4
      %v2791 = vshll.u32 %v223, 16
      %v2793 = vrot.slane %v2791, 5
      %v2794 = vor.u32 %v2790, %v2793
      %v2795 = vrot.slane %v2794, 4
      %v2797 = vshll.u32 %v224, 16
      %v2799 = vrot.slane %v2797, 5
      %v2800 = vsel %vm372, %v2795, %v2799
      %v2801 = vshrl.u32 %v224, 16
      %v2803 = vrot.slane %v2801, 4
      %v2804 = vor.u32 %v2803, %v2799
      %v2805 = vrot.slane %v2804, 4
      %v2807 = vshll.u32 %v225, 16
      %v2809 = vrot.slane %v2807, 5
      %v2810 = vsel %vm372, %v2805, %v2809
      %v2811 = vunpack.c.l.b16 %v2800
      %v2812 = vunpack.c.l.b16 %v2810
      %v2813 = vpack.c.b16 %v2812, %v2811
      %v2831 = vunpack.c.l.b16 %v338
      %v2832 = vunpack.c.l.b16 %v339
      %v2833 = vunpack.c.l.b16 %v340
      %v2834 = vunpack.c.l.b16 %v341
      %v2835 = vunpack.c.l.b16 %v342
      %v2836 = vunpack.c.l.b16 %v343
      %v2837 = vunpack.c.l.b16 %v344
      %v2838 = vunpack.c.l.b16 %v345
      %v2839 = vunpack.c.l.b16 %v346
      %v2840 = vunpack.c.l.b16 %v347
      %v2841 = vunpack.c.l.b16 %v348
      %v2842 = vunpack.c.l.b16 %v349
      %v2843 = vunpack.c.l.b16 %v350
      %v2844 = vunpack.c.l.b16 %v351
      %v2845 = vunpack.c.l.b16 %v352
      %v2846 = vunpack.c.l.b16 %v353
      %v2847 = vpack.c.b16 %v2832, %v2831
      %v2848 = vpack.c.b16 %v2834, %v2833
      %v2849 = vpack.c.b16 %v2836, %v2835
      %v2850 = vpack.c.b16 %v2838, %v2837
      %v2851 = vpack.c.b16 %v2840, %v2839
      %v2852 = vpack.c.b16 %v2842, %v2841
      %v2853 = vpack.c.b16 %v2844, %v2843
      %v2854 = vpack.c.b16 %v2846, %v2845
      %2863 = vmatprep.subr.bf16.mxu0 0
      %2864 = vmatpush1.bf16.msra.mxu0 %v2847
      %2865 = vmatprep.subr.bf16.mxu0 0
      %2866 = vmatpush1.bf16.msra.mxu0 %v2848
      %2867 = vmatprep.subr.bf16.mxu0 0
      %2868 = vmatpush1.bf16.msra.mxu0 %v2849
      %2869 = vmatprep.subr.bf16.mxu0 0
      %2870 = vmatpush1.bf16.msra.mxu0 %v2850
      %2871 = vmatprep.subr.bf16.mxu0 0
      %2872 = vmatpush1.bf16.msra.mxu0 %v2851
      %2873 = vmatprep.subr.bf16.mxu0 0
      %2874 = vmatpush1.bf16.msra.mxu0 %v2852
      %2875 = vmatprep.subr.bf16.mxu0 0
      %2876 = vmatpush1.bf16.msra.mxu0 %v2853
      %2877 = vmatprep.subr.bf16.mxu0 0
      %2878 = vmatpush1.bf16.msra.mxu0 %v2854
      %2879 = vmatprep.subr.bf16.mxu0 0
      %2880 = vmatpush1.bf16.msra.mxu0 0
      %2881 = vmatprep.subr.bf16.mxu0 0
      %2882 = vmatpush1.bf16.msra.mxu0 0
      %2883 = vmatprep.subr.bf16.mxu0 0
      %2884 = vmatpush1.bf16.msra.mxu0 0
      %2885 = vmatprep.subr.bf16.mxu0 0
      %2886 = vmatpush1.bf16.msra.mxu0 0
      %2887 = vmatprep.subr.bf16.mxu0 0
      %2888 = vmatpush1.bf16.msra.mxu0 0
      %2889 = vmatprep.subr.bf16.mxu0 0
      %2890 = vmatpush1.bf16.msra.mxu0 0
      %2891 = vmatprep.subr.bf16.mxu0 0
      %2892 = vmatpush1.bf16.msra.mxu0 0
      %2893 = vmatprep.subr.bf16.mxu0 0
      %2894 = vmatpush1.bf16.msra.mxu0 0
      %2895 = vmatprep.mubr.bf16.mxu0 0
      %2896 = vmatmul.mubr.bf16.gmra.mrb[0].mxu0 %v791
      %v2897 = vpop.f32.mrb[0].mxu0
      %v2898 = vadd.f32 0.0, %v2897
      %v2899 = vpop.f32.mrb[0].mxu0
      %v2900 = vpop.f32.mrb[0].mxu0
      %v2901 = vadd.f32 0.0, %v2900
      %v2902 = vpop.f32.mrb[0].mxu0
      %2903 = vmatprep.mubr.bf16.mxu0 0
      %2904 = vmatmul.mubr.bf16.gmra.mrb[0].mxu0 %v792
      %v2905 = vpop.f32.mrb[0].mxu0
      %v2906 = vadd.f32 0.0, %v2905
      %v2907 = vpop.f32.mrb[0].mxu0
      %v2908 = vpop.f32.mrb[0].mxu0
      %v2909 = vadd.f32 0.0, %v2908
      %v2910 = vpop.f32.mrb[0].mxu0
      %2911 = vmatprep.mubr.bf16.mxu0 0
      %2912 = vmatmul.mubr.bf16.gmra.mrb[0].mxu0 %v793
      %v2913 = vpop.f32.mrb[0].mxu0
      %v2914 = vadd.f32 0.0, %v2913
      %v2915 = vpop.f32.mrb[0].mxu0
      %v2916 = vpop.f32.mrb[0].mxu0
      %v2917 = vadd.f32 0.0, %v2916
      %v2918 = vpop.f32.mrb[0].mxu0
      %2919 = vmatprep.mubr.bf16.mxu0 0
      %2920 = vmatmul.mubr.bf16.gmra.mrb[0].mxu0 %v794
      %v2921 = vpop.f32.mrb[0].mxu0
      %v2922 = vadd.f32 0.0, %v2921
      %v2923 = vpop.f32.mrb[0].mxu0
      %v2924 = vpop.f32.mrb[0].mxu0
      %v2925 = vadd.f32 0.0, %v2924
      %v2926 = vpop.f32.mrb[0].mxu0
      %2927 = vmatprep.mubr.bf16.mxu0 0
      %2928 = vmatmul.mubr.bf16.gmra.mrb[0].mxu0 %v795
      %v2929 = vpop.f32.mrb[0].mxu0
      %v2930 = vadd.f32 0.0, %v2929
      %v2931 = vpop.f32.mrb[0].mxu0
      %v2932 = vpop.f32.mrb[0].mxu0
      %v2933 = vadd.f32 0.0, %v2932
      %v2934 = vpop.f32.mrb[0].mxu0
      %2935 = vmatprep.mubr.bf16.mxu0 0
      %2936 = vmatmul.mubr.bf16.gmra.mrb[0].mxu0 %v796
      %v2937 = vpop.f32.mrb[0].mxu0
      %v2938 = vadd.f32 0.0, %v2937
      %v2939 = vpop.f32.mrb[0].mxu0
      %v2940 = vpop.f32.mrb[0].mxu0
      %v2941 = vadd.f32 0.0, %v2940
      %v2942 = vpop.f32.mrb[0].mxu0
      %2943 = vmatprep.mubr.bf16.mxu0 0
      %2944 = vmatmul.mubr.bf16.gmra.mrb[0].mxu0 %v797
      %v2945 = vpop.f32.mrb[0].mxu0
      %v2946 = vadd.f32 0.0, %v2945
      %v2947 = vpop.f32.mrb[0].mxu0
      %v2948 = vpop.f32.mrb[0].mxu0
      %v2949 = vadd.f32 0.0, %v2948
      %v2950 = vpop.f32.mrb[0].mxu0
      %2951 = vmatprep.mubr.bf16.mxu0 0
      %2952 = vmatmul.mubr.bf16.gmra.mrb[0].mxu0 %v798
      %v2953 = vpop.f32.mrb[0].mxu0
      %v2954 = vadd.f32 0.0, %v2953
      %v2955 = vpop.f32.mrb[0].mxu0
      %v2956 = vpop.f32.mrb[0].mxu0
      %v2957 = vadd.f32 0.0, %v2956
      %v2958 = vpop.f32.mrb[0].mxu0
      %2959 = vmatprep.mubr.bf16.mxu0 0
      %2960 = vmatmul.mubr.bf16.gmra.mrb[0].mxu0 %v799
      %v2961 = vpop.f32.mrb[0].mxu0
      %v2962 = vadd.f32 0.0, %v2961
      %v2963 = vpop.f32.mrb[0].mxu0
      %v2964 = vpop.f32.mrb[0].mxu0
      %v2965 = vadd.f32 0.0, %v2964
      %v2966 = vpop.f32.mrb[0].mxu0
      %2967 = vmatprep.mubr.bf16.mxu0 0
      %2968 = vmatmul.mubr.bf16.gmra.mrb[0].mxu0 %v800
      %v2969 = vpop.f32.mrb[0].mxu0
      %v2970 = vadd.f32 0.0, %v2969
      %v2971 = vpop.f32.mrb[0].mxu0
      %v2972 = vpop.f32.mrb[0].mxu0
      %v2973 = vadd.f32 0.0, %v2972
      %v2974 = vpop.f32.mrb[0].mxu0
      %2975 = vmatprep.mubr.bf16.mxu0 0
      %2976 = vmatmul.mubr.bf16.gmra.mrb[0].mxu0 %v801
      %v2977 = vpop.f32.mrb[0].mxu0
      %v2978 = vadd.f32 0.0, %v2977
      %v2979 = vpop.f32.mrb[0].mxu0
      %v2980 = vpop.f32.mrb[0].mxu0
      %v2981 = vadd.f32 0.0, %v2980
      %v2982 = vpop.f32.mrb[0].mxu0
      %2983 = vmatprep.mubr.bf16.mxu0 0
      %2984 = vmatmul.mubr.bf16.gmra.mrb[0].mxu0 %v802
      %v2985 = vpop.f32.mrb[0].mxu0
      %v2986 = vadd.f32 0.0, %v2985
      %v2987 = vpop.f32.mrb[0].mxu0
      %v2988 = vpop.f32.mrb[0].mxu0
      %v2989 = vadd.f32 0.0, %v2988
      %v2990 = vpop.f32.mrb[0].mxu0
      %2991 = vmatprep.mubr.bf16.mxu0 0
      %2992 = vmatmul.mubr.bf16.gmra.mrb[0].mxu0 %v803
      %v2993 = vpop.f32.mrb[0].mxu0
      %v2994 = vadd.f32 0.0, %v2993
      %v2995 = vpop.f32.mrb[0].mxu0
      %v2996 = vpop.f32.mrb[0].mxu0
      %v2997 = vadd.f32 0.0, %v2996
      %v2998 = vpop.f32.mrb[0].mxu0
      %2999 = vmatprep.mubr.bf16.mxu0 0
      %3000 = vmatmul.mubr.bf16.gmra.mrb[0].mxu0 %v804
      %v3001 = vpop.f32.mrb[0].mxu0
      %v3002 = vadd.f32 0.0, %v3001
      %v3003 = vpop.f32.mrb[0].mxu0
      %v3004 = vpop.f32.mrb[0].mxu0
      %v3005 = vadd.f32 0.0, %v3004
      %v3006 = vpop.f32.mrb[0].mxu0
      %3007 = vmatprep.mubr.bf16.mxu0 0
      %3008 = vmatmul.mubr.bf16.gmra.mrb[0].mxu0 %v2044
      %v3009 = vpop.f32.mrb[0].mxu0
      %v3010 = vadd.f32 0.0, %v3009
      %v3011 = vpop.f32.mrb[0].mxu0
      %v3012 = vpop.f32.mrb[0].mxu0
      %v3013 = vadd.f32 0.0, %v3012
      %v3014 = vpop.f32.mrb[0].mxu0
      %3015 = vmatprep.mubr.bf16.mxu0 0
      %3016 = vmatmul.mubr.bf16.gmra.mrb[0].mxu0 %v2813
      %v3017 = vpop.f32.mrb[0].mxu0
      %v3018 = vadd.f32 0.0, %v3017
      %v3019 = vpop.f32.mrb[0].mxu0
      %v3020 = vpop.f32.mrb[0].mxu0
      %v3021 = vadd.f32 0.0, %v3020
      %v3022 = vpop.f32.mrb[0].mxu0
      %3023 = vdwg.mxu0
      %v3024 = vadd.f32 %v2755, %v2898
      %v3025 = vadd.f32 %v2756, %v2901
      %v3026 = vadd.f32 %v2757, %v2906
      %v3027 = vadd.f32 %v2758, %v2909
      %v3028 = vadd.f32 %v2759, %v2914
      %v3029 = vadd.f32 %v2760, %v2917
      %v3030 = vadd.f32 %v2761, %v2922
      %v3031 = vadd.f32 %v2762, %v2925
      %v3032 = vadd.f32 %v2763, %v2930
      %v3033 = vadd.f32 %v2764, %v2933
      %v3034 = vadd.f32 %v2765, %v2938
      %v3035 = vadd.f32 %v2766, %v2941
      %v3036 = vadd.f32 %v2767, %v2946
      %v3037 = vadd.f32 %v2768, %v2949
      %v3038 = vadd.f32 %v2769, %v2954
      %v3039 = vadd.f32 %v2770, %v2957
      %v3040 = vadd.f32 %v2771, %v2962
      %v3041 = vadd.f32 %v2772, %v2965
      %v3042 = vadd.f32 %v2773, %v2970
      %v3043 = vadd.f32 %v2774, %v2973
      %v3044 = vadd.f32 %v2775, %v2978
      %v3045 = vadd.f32 %v2776, %v2981
      %v3046 = vadd.f32 %v2777, %v2986
      %v3047 = vadd.f32 %v2778, %v2989
      %v3048 = vadd.f32 %v2779, %v2994
      %v3049 = vadd.f32 %v2780, %v2997
      %v3050 = vadd.f32 %v2781, %v3002
      %v3051 = vadd.f32 %v2782, %v3005
      %v3052 = vadd.f32 %v2783, %v3010
      %v3053 = vadd.f32 %v2784, %v3013
      %v3054 = vadd.f32 %v2785, %v3018
      %v3055 = vadd.f32 %v2786, %v3021
      %v3057 = vrot.slane %v223, 5
      %v3058 = vrot.slane %v3057, 4
      %v3059 = vrot.slane %v224, 5
      %v3060 = vsel %vm1353, %v3058, %v3059
      %v3061 = vrot.slane %v3059, 4
      %v3062 = vrot.slane %v225, 5
      %v3063 = vsel %vm1353, %v3061, %v3062
      %v3064 = vunpack.c.l.b16 %v3060
      %v3065 = vunpack.c.l.b16 %v3063
      %v3066 = vpack.c.b16 %v3065, %v3064
      %v3084 = vunpack.c.l.b16 %v354
      %v3085 = vunpack.c.l.b16 %v355
      %v3086 = vunpack.c.l.b16 %v356
      %v3087 = vunpack.c.l.b16 %v357
      %v3088 = vunpack.c.l.b16 %v358
      %v3089 = vunpack.c.l.b16 %v359
      %v3090 = vunpack.c.l.b16 %v360
      %v3091 = vunpack.c.l.b16 %v361
      %v3092 = vunpack.c.l.b16 %v362
      %v3093 = vunpack.c.l.b16 %v363
      %v3094 = vunpack.c.l.b16 %v364
      %v3095 = vunpack.c.l.b16 %v365
      %v3096 = vunpack.c.l.b16 %v366
      %v3097 = vunpack.c.l.b16 %v367
      %v3098 = vunpack.c.l.b16 %v368
      %v3099 = vunpack.c.l.b16 %v369
      %v3100 = vpack.c.b16 %v3085, %v3084
      %v3101 = vpack.c.b16 %v3087, %v3086
      %v3102 = vpack.c.b16 %v3089, %v3088
      %v3103 = vpack.c.b16 %v3091, %v3090
      %v3104 = vpack.c.b16 %v3093, %v3092
      %v3105 = vpack.c.b16 %v3095, %v3094
      %v3106 = vpack.c.b16 %v3097, %v3096
      %v3107 = vpack.c.b16 %v3099, %v3098
      %3116 = vmatprep.subr.bf16.mxu0 0
      %3117 = vmatpush1.bf16.msra.mxu0 %v3100
      %3118 = vmatprep.subr.bf16.mxu0 0
      %3119 = vmatpush1.bf16.msra.mxu0 %v3101
      %3120 = vmatprep.subr.bf16.mxu0 0
      %3121 = vmatpush1.bf16.msra.mxu0 %v3102
      %3122 = vmatprep.subr.bf16.mxu0 0
      %3123 = vmatpush1.bf16.msra.mxu0 %v3103
      %3124 = vmatprep.subr.bf16.mxu0 0
      %3125 = vmatpush1.bf16.msra.mxu0 %v3104
      %3126 = vmatprep.subr.bf16.mxu0 0
      %3127 = vmatpush1.bf16.msra.mxu0 %v3105
      %3128 = vmatprep.subr.bf16.mxu0 0
      %3129 = vmatpush1.bf16.msra.mxu0 %v3106
      %3130 = vmatprep.subr.bf16.mxu0 0
      %3131 = vmatpush1.bf16.msra.mxu0 %v3107
      %3132 = vmatprep.subr.bf16.mxu0 0
      %3133 = vmatpush1.bf16.msra.mxu0 0
      %3134 = vmatprep.subr.bf16.mxu0 0
      %3135 = vmatpush1.bf16.msra.mxu0 0
      %3136 = vmatprep.subr.bf16.mxu0 0
      %3137 = vmatpush1.bf16.msra.mxu0 0
      %3138 = vmatprep.subr.bf16.mxu0 0
      %3139 = vmatpush1.bf16.msra.mxu0 0
      %3140 = vmatprep.subr.bf16.mxu0 0
      %3141 = vmatpush1.bf16.msra.mxu0 0
      %3142 = vmatprep.subr.bf16.mxu0 0
      %3143 = vmatpush1.bf16.msra.mxu0 0
      %3144 = vmatprep.subr.bf16.mxu0 0
      %3145 = vmatpush1.bf16.msra.mxu0 0
      %3146 = vmatprep.subr.bf16.mxu0 0
      %3147 = vmatpush1.bf16.msra.mxu0 0
      %3148 = vmatprep.mubr.bf16.mxu0 0
      %3149 = vmatmul.mubr.bf16.gmra.mrb[0].mxu0 %v1500
      %v3150 = vpop.f32.mrb[0].mxu0
      %v3151 = vadd.f32 0.0, %v3150
      %v3152 = vpop.f32.mrb[0].mxu0
      %v3153 = vpop.f32.mrb[0].mxu0
      %v3154 = vadd.f32 0.0, %v3153
      %v3155 = vpop.f32.mrb[0].mxu0
      %3156 = vmatprep.mubr.bf16.mxu0 0
      %3157 = vmatmul.mubr.bf16.gmra.mrb[0].mxu0 %v1501
      %v3158 = vpop.f32.mrb[0].mxu0
      %v3159 = vadd.f32 0.0, %v3158
      %v3160 = vpop.f32.mrb[0].mxu0
      %v3161 = vpop.f32.mrb[0].mxu0
      %v3162 = vadd.f32 0.0, %v3161
      %v3163 = vpop.f32.mrb[0].mxu0
      %3164 = vmatprep.mubr.bf16.mxu0 0
      %3165 = vmatmul.mubr.bf16.gmra.mrb[0].mxu0 %v1502
      %v3166 = vpop.f32.mrb[0].mxu0
      %v3167 = vadd.f32 0.0, %v3166
      %v3168 = vpop.f32.mrb[0].mxu0
      %v3169 = vpop.f32.mrb[0].mxu0
      %v3170 = vadd.f32 0.0, %v3169
      %v3171 = vpop.f32.mrb[0].mxu0
      %3172 = vmatprep.mubr.bf16.mxu0 0
      %3173 = vmatmul.mubr.bf16.gmra.mrb[0].mxu0 %v1503
      %v3174 = vpop.f32.mrb[0].mxu0
      %v3175 = vadd.f32 0.0, %v3174
      %v3176 = vpop.f32.mrb[0].mxu0
      %v3177 = vpop.f32.mrb[0].mxu0
      %v3178 = vadd.f32 0.0, %v3177
      %v3179 = vpop.f32.mrb[0].mxu0
      %3180 = vmatprep.mubr.bf16.mxu0 0
      %3181 = vmatmul.mubr.bf16.gmra.mrb[0].mxu0 %v1504
      %v3182 = vpop.f32.mrb[0].mxu0
      %v3183 = vadd.f32 0.0, %v3182
      %v3184 = vpop.f32.mrb[0].mxu0
      %v3185 = vpop.f32.mrb[0].mxu0
      %v3186 = vadd.f32 0.0, %v3185
      %v3187 = vpop.f32.mrb[0].mxu0
      %3188 = vmatprep.mubr.bf16.mxu0 0
      %3189 = vmatmul.mubr.bf16.gmra.mrb[0].mxu0 %v1505
      %v3190 = vpop.f32.mrb[0].mxu0
      %v3191 = vadd.f32 0.0, %v3190
      %v3192 = vpop.f32.mrb[0].mxu0
      %v3193 = vpop.f32.mrb[0].mxu0
      %v3194 = vadd.f32 0.0, %v3193
      %v3195 = vpop.f32.mrb[0].mxu0
      %3196 = vmatprep.mubr.bf16.mxu0 0
      %3197 = vmatmul.mubr.bf16.gmra.mrb[0].mxu0 %v1506
      %v3198 = vpop.f32.mrb[0].mxu0
      %v3199 = vadd.f32 0.0, %v3198
      %v3200 = vpop.f32.mrb[0].mxu0
      %v3201 = vpop.f32.mrb[0].mxu0
      %v3202 = vadd.f32 0.0, %v3201
      %v3203 = vpop.f32.mrb[0].mxu0
      %3204 = vmatprep.mubr.bf16.mxu0 0
      %3205 = vmatmul.mubr.bf16.gmra.mrb[0].mxu0 %v1507
      %v3206 = vpop.f32.mrb[0].mxu0
      %v3207 = vadd.f32 0.0, %v3206
      %v3208 = vpop.f32.mrb[0].mxu0
      %v3209 = vpop.f32.mrb[0].mxu0
      %v3210 = vadd.f32 0.0, %v3209
      %v3211 = vpop.f32.mrb[0].mxu0
      %3212 = vmatprep.mubr.bf16.mxu0 0
      %3213 = vmatmul.mubr.bf16.gmra.mrb[0].mxu0 %v1508
      %v3214 = vpop.f32.mrb[0].mxu0
      %v3215 = vadd.f32 0.0, %v3214
      %v3216 = vpop.f32.mrb[0].mxu0
      %v3217 = vpop.f32.mrb[0].mxu0
      %v3218 = vadd.f32 0.0, %v3217
      %v3219 = vpop.f32.mrb[0].mxu0
      %3220 = vmatprep.mubr.bf16.mxu0 0
      %3221 = vmatmul.mubr.bf16.gmra.mrb[0].mxu0 %v1509
      %v3222 = vpop.f32.mrb[0].mxu0
      %v3223 = vadd.f32 0.0, %v3222
      %v3224 = vpop.f32.mrb[0].mxu0
      %v3225 = vpop.f32.mrb[0].mxu0
      %v3226 = vadd.f32 0.0, %v3225
      %v3227 = vpop.f32.mrb[0].mxu0
      %3228 = vmatprep.mubr.bf16.mxu0 0
      %3229 = vmatmul.mubr.bf16.gmra.mrb[0].mxu0 %v1510
      %v3230 = vpop.f32.mrb[0].mxu0
      %v3231 = vadd.f32 0.0, %v3230
      %v3232 = vpop.f32.mrb[0].mxu0
      %v3233 = vpop.f32.mrb[0].mxu0
      %v3234 = vadd.f32 0.0, %v3233
      %v3235 = vpop.f32.mrb[0].mxu0
      %3236 = vmatprep.mubr.bf16.mxu0 0
      %3237 = vmatmul.mubr.bf16.gmra.mrb[0].mxu0 %v1511
      %v3238 = vpop.f32.mrb[0].mxu0
      %v3239 = vadd.f32 0.0, %v3238
      %v3240 = vpop.f32.mrb[0].mxu0
      %v3241 = vpop.f32.mrb[0].mxu0
      %v3242 = vadd.f32 0.0, %v3241
      %v3243 = vpop.f32.mrb[0].mxu0
      %3244 = vmatprep.mubr.bf16.mxu0 0
      %3245 = vmatmul.mubr.bf16.gmra.mrb[0].mxu0 %v1512
      %v3246 = vpop.f32.mrb[0].mxu0
      %v3247 = vadd.f32 0.0, %v3246
      %v3248 = vpop.f32.mrb[0].mxu0
      %v3249 = vpop.f32.mrb[0].mxu0
      %v3250 = vadd.f32 0.0, %v3249
      %v3251 = vpop.f32.mrb[0].mxu0
      %3252 = vmatprep.mubr.bf16.mxu0 0
      %3253 = vmatmul.mubr.bf16.gmra.mrb[0].mxu0 %v1513
      %v3254 = vpop.f32.mrb[0].mxu0
      %v3255 = vadd.f32 0.0, %v3254
      %v3256 = vpop.f32.mrb[0].mxu0
      %v3257 = vpop.f32.mrb[0].mxu0
      %v3258 = vadd.f32 0.0, %v3257
      %v3259 = vpop.f32.mrb[0].mxu0
      %3260 = vmatprep.mubr.bf16.mxu0 0
      %3261 = vmatmul.mubr.bf16.gmra.mrb[0].mxu0 %v2297
      %v3262 = vpop.f32.mrb[0].mxu0
      %v3263 = vadd.f32 0.0, %v3262
      %v3264 = vpop.f32.mrb[0].mxu0
      %v3265 = vpop.f32.mrb[0].mxu0
      %v3266 = vadd.f32 0.0, %v3265
      %v3267 = vpop.f32.mrb[0].mxu0
      %3268 = vmatprep.mubr.bf16.mxu0 0
      %3269 = vmatmul.mubr.bf16.gmra.mrb[0].mxu0 %v3066
      %v3270 = vpop.f32.mrb[0].mxu0
      %v3271 = vadd.f32 0.0, %v3270
      %v3272 = vpop.f32.mrb[0].mxu0
      %v3273 = vpop.f32.mrb[0].mxu0
      %v3274 = vadd.f32 0.0, %v3273
      %v3275 = vpop.f32.mrb[0].mxu0
      %3276 = vdwg.mxu0
      %v3277 = vadd.f32 %v3024, %v3151
      %v3278 = vadd.f32 %v3025, %v3154
      %v3279 = vadd.f32 %v3026, %v3159
      %v3280 = vadd.f32 %v3027, %v3162
      %v3281 = vadd.f32 %v3028, %v3167
      %v3282 = vadd.f32 %v3029, %v3170
      %v3283 = vadd.f32 %v3030, %v3175
      %v3284 = vadd.f32 %v3031, %v3178
      %v3285 = vadd.f32 %v3032, %v3183
      %v3286 = vadd.f32 %v3033, %v3186
      %v3287 = vadd.f32 %v3034, %v3191
      %v3288 = vadd.f32 %v3035, %v3194
      %v3289 = vadd.f32 %v3036, %v3199
      %v3290 = vadd.f32 %v3037, %v3202
      %v3291 = vadd.f32 %v3038, %v3207
      %v3292 = vadd.f32 %v3039, %v3210
      %v3293 = vadd.f32 %v3040, %v3215
      %v3294 = vadd.f32 %v3041, %v3218
      %v3295 = vadd.f32 %v3042, %v3223
      %v3296 = vadd.f32 %v3043, %v3226
      %v3297 = vadd.f32 %v3044, %v3231
      %v3298 = vadd.f32 %v3045, %v3234
      %v3299 = vadd.f32 %v3046, %v3239
      %v3300 = vadd.f32 %v3047, %v3242
      %v3301 = vadd.f32 %v3048, %v3247
      %v3302 = vadd.f32 %v3049, %v3250
      %v3303 = vadd.f32 %v3050, %v3255
      %v3304 = vadd.f32 %v3051, %v3258
      %v3305 = vadd.f32 %v3052, %v3263
      %v3306 = vadd.f32 %v3053, %v3266
      %v3307 = vadd.f32 %v3054, %v3271
      %v3308 = vadd.f32 %v3055, %v3274
      %v3309 = vld [vmem:[%s2] sm:$0x1]
      %v3311 = vlaneseq
      %v3312 = vshrl.u32 %v3311, 7
      %v3313 = vsub.s32 0, %v3312
      %v3314 = vrot.slane %v3309, %v3313
      %v3316 = vadd.f32 %v3277, %v3314
      %v3317 = vadd.f32 %v3278, %v3314
      %v3318 = vadd.f32 %v3279, %v3314
      %v3319 = vadd.f32 %v3280, %v3314
      %v3320 = vadd.f32 %v3281, %v3314
      %v3321 = vadd.f32 %v3282, %v3314
      %v3322 = vadd.f32 %v3283, %v3314
      %v3323 = vadd.f32 %v3284, %v3314
      %v3324 = vadd.f32 %v3285, %v3314
      %v3325 = vadd.f32 %v3286, %v3314
      %v3326 = vadd.f32 %v3287, %v3314
      %v3327 = vadd.f32 %v3288, %v3314
      %v3328 = vadd.f32 %v3289, %v3314
      %v3329 = vadd.f32 %v3290, %v3314
      %v3330 = vadd.f32 %v3291, %v3314
      %v3331 = vadd.f32 %v3292, %v3314
      %v3332 = vadd.f32 %v3293, %v3314
      %v3333 = vadd.f32 %v3294, %v3314
      %v3334 = vadd.f32 %v3295, %v3314
      %v3335 = vadd.f32 %v3296, %v3314
      %v3336 = vadd.f32 %v3297, %v3314
      %v3337 = vadd.f32 %v3298, %v3314
      %v3338 = vadd.f32 %v3299, %v3314
      %v3339 = vadd.f32 %v3300, %v3314
      %v3340 = vadd.f32 %v3301, %v3314
      %v3341 = vadd.f32 %v3302, %v3314
      %v3342 = vadd.f32 %v3303, %v3314
      %v3343 = vadd.f32 %v3304, %v3314
      %v3344 = vadd.f32 %v3305, %v3314
      %v3345 = vadd.f32 %v3306, %v3314
      %v3346 = vadd.f32 %v3307, %v3314
      %v3347 = vadd.f32 %v3308, %v3314
      %v3348 = vmax.f32 %v3316, 0.0
      %v3349 = vmax.f32 %v3317, 0.0
      %v3350 = vmax.f32 %v3318, 0.0
      %v3351 = vmax.f32 %v3319, 0.0
      %v3352 = vmax.f32 %v3320, 0.0
      %v3353 = vmax.f32 %v3321, 0.0
      %v3354 = vmax.f32 %v3322, 0.0
      %v3355 = vmax.f32 %v3323, 0.0
      %v3356 = vmax.f32 %v3324, 0.0
      %v3357 = vmax.f32 %v3325, 0.0
      %v3358 = vmax.f32 %v3326, 0.0
      %v3359 = vmax.f32 %v3327, 0.0
      %v3360 = vmax.f32 %v3328, 0.0
      %v3361 = vmax.f32 %v3329, 0.0
      %v3362 = vmax.f32 %v3330, 0.0
      %v3363 = vmax.f32 %v3331, 0.0
      %v3364 = vmax.f32 %v3332, 0.0
      %v3365 = vmax.f32 %v3333, 0.0
      %v3366 = vmax.f32 %v3334, 0.0
      %v3367 = vmax.f32 %v3335, 0.0
      %v3368 = vmax.f32 %v3336, 0.0
      %v3369 = vmax.f32 %v3337, 0.0
      %v3370 = vmax.f32 %v3338, 0.0
      %v3371 = vmax.f32 %v3339, 0.0
      %v3372 = vmax.f32 %v3340, 0.0
      %v3373 = vmax.f32 %v3341, 0.0
      %v3374 = vmax.f32 %v3342, 0.0
      %v3375 = vmax.f32 %v3343, 0.0
      %v3376 = vmax.f32 %v3344, 0.0
      %v3377 = vmax.f32 %v3345, 0.0
      %v3378 = vmax.f32 %v3346, 0.0
      %v3379 = vmax.f32 %v3347, 0.0
      %v3380 = vpack.c.bf16 %v3349, %v3348
      %v3381 = vpack.c.bf16 %v3351, %v3350
      %v3382 = vpack.c.bf16 %v3353, %v3352
      %v3383 = vpack.c.bf16 %v3355, %v3354
      %v3384 = vpack.c.bf16 %v3357, %v3356
      %v3385 = vpack.c.bf16 %v3359, %v3358
      %v3386 = vpack.c.bf16 %v3361, %v3360
      %v3387 = vpack.c.bf16 %v3363, %v3362
      %v3388 = vpack.c.bf16 %v3365, %v3364
      %v3389 = vpack.c.bf16 %v3367, %v3366
      %v3390 = vpack.c.bf16 %v3369, %v3368
      %v3391 = vpack.c.bf16 %v3371, %v3370
      %v3392 = vpack.c.bf16 %v3373, %v3372
      %v3393 = vpack.c.bf16 %v3375, %v3374
      %v3394 = vpack.c.bf16 %v3377, %v3376
      %v3395 = vpack.c.bf16 %v3379, %v3378
      %v3412 = vunpack.c.l.b16 %v3380
      %v3413 = vunpack.c.h.b16 %v3380
      %v3414 = vunpack.c.l.b16 %v3381
      %v3415 = vunpack.c.h.b16 %v3381
      %v3416 = vunpack.c.l.b16 %v3382
      %v3417 = vunpack.c.h.b16 %v3382
      %v3418 = vunpack.c.l.b16 %v3383
      %v3419 = vunpack.c.h.b16 %v3383
      %v3420 = vunpack.c.l.b16 %v3384
      %v3421 = vunpack.c.h.b16 %v3384
      %v3422 = vunpack.c.l.b16 %v3385
      %v3423 = vunpack.c.h.b16 %v3385
      %v3424 = vunpack.c.l.b16 %v3386
      %v3425 = vunpack.c.h.b16 %v3386
      %v3426 = vunpack.c.l.b16 %v3387
      %v3427 = vunpack.c.h.b16 %v3387
      %v3428 = vunpack.c.l.b16 %v3388
      %v3429 = vunpack.c.h.b16 %v3388
      %v3430 = vunpack.c.l.b16 %v3389
      %v3431 = vunpack.c.h.b16 %v3389
      %v3432 = vunpack.c.l.b16 %v3390
      %v3433 = vunpack.c.h.b16 %v3390
      %v3434 = vunpack.c.l.b16 %v3391
      %v3435 = vunpack.c.h.b16 %v3391
      %v3436 = vunpack.c.l.b16 %v3392
      %v3437 = vunpack.c.h.b16 %v3392
      %v3438 = vunpack.c.l.b16 %v3393
      %v3439 = vunpack.c.h.b16 %v3393
      %v3440 = vunpack.c.l.b16 %v3394
      %v3441 = vunpack.c.h.b16 %v3394
      %v3442 = vunpack.c.l.b16 %v3395
      %v3443 = vunpack.c.h.b16 %v3395
      %v3444 = vpack.c.b16 %v3412, %v3412
      %v3445 = vpack.c.b16 %v3413, %v3413
      %v3446 = vpack.c.b16 %v3414, %v3414
      %v3447 = vpack.c.b16 %v3415, %v3415
      %v3448 = vpack.c.b16 %v3416, %v3416
      %v3449 = vpack.c.b16 %v3417, %v3417
      %v3450 = vpack.c.b16 %v3418, %v3418
      %v3451 = vpack.c.b16 %v3419, %v3419
      %v3452 = vpack.c.b16 %v3420, %v3420
      %v3453 = vpack.c.b16 %v3421, %v3421
      %v3454 = vpack.c.b16 %v3422, %v3422
      %v3455 = vpack.c.b16 %v3423, %v3423
      %v3456 = vpack.c.b16 %v3424, %v3424
      %v3457 = vpack.c.b16 %v3425, %v3425
      %v3458 = vpack.c.b16 %v3426, %v3426
      %v3459 = vpack.c.b16 %v3427, %v3427
      %v3460 = vpack.c.b16 %v3428, %v3428
      %v3461 = vpack.c.b16 %v3429, %v3429
      %v3462 = vpack.c.b16 %v3430, %v3430
      %v3463 = vpack.c.b16 %v3431, %v3431
      %v3464 = vpack.c.b16 %v3432, %v3432
      %v3465 = vpack.c.b16 %v3433, %v3433
      %v3466 = vpack.c.b16 %v3434, %v3434
      %v3467 = vpack.c.b16 %v3435, %v3435
      %v3468 = vpack.c.b16 %v3436, %v3436
      %v3469 = vpack.c.b16 %v3437, %v3437
      %v3470 = vpack.c.b16 %v3438, %v3438
      %v3471 = vpack.c.b16 %v3439, %v3439
      %v3472 = vpack.c.b16 %v3440, %v3440
      %v3473 = vpack.c.b16 %v3441, %v3441
      %v3474 = vpack.c.b16 %v3442, %v3442
      %v3475 = vpack.c.b16 %v3443, %v3443
      %3508 = vst [vmem:[%s170] sm:$0xf] %v3444
      %3509 = vst [vmem:[%s170 + $0x4] sm:$0xf] %v3445
      %3510 = vst [vmem:[%s170 + $0x8] sm:$0xf] %v3446
      %3511 = vst [vmem:[%s170 + $0xc] sm:$0xf] %v3447
      %3512 = vst [vmem:[%s170 + $0x10] sm:$0xf] %v3448
      %3513 = vst [vmem:[%s170 + $0x14] sm:$0xf] %v3449
      %3514 = vst [vmem:[%s170 + $0x18] sm:$0xf] %v3450
      %3515 = vst [vmem:[%s170 + $0x1c] sm:$0xf] %v3451
      %3516 = vst [vmem:[%s170 + $0x20] sm:$0xf] %v3452
      %3517 = vst [vmem:[%s170 + $0x24] sm:$0xf] %v3453
      %3518 = vst [vmem:[%s170 + $0x28] sm:$0xf] %v3454
      %3519 = vst [vmem:[%s170 + $0x2c] sm:$0xf] %v3455
      %3520 = vst [vmem:[%s170 + $0x30] sm:$0xf] %v3456
      %3521 = vst [vmem:[%s170 + $0x34] sm:$0xf] %v3457
      %3522 = vst [vmem:[%s170 + $0x38] sm:$0xf] %v3458
      %3523 = vst [vmem:[%s170 + $0x3c] sm:$0xf] %v3459
      %3524 = vst [vmem:[%s170 + $0x40] sm:$0xf] %v3460
      %3525 = vst [vmem:[%s170 + $0x44] sm:$0xf] %v3461
      %3526 = vst [vmem:[%s170 + $0x48] sm:$0xf] %v3462
      %3527 = vst [vmem:[%s170 + $0x4c] sm:$0xf] %v3463
      %3528 = vst [vmem:[%s170 + $0x50] sm:$0xf] %v3464
      %3529 = vst [vmem:[%s170 + $0x54] sm:$0xf] %v3465
      %3530 = vst [vmem:[%s170 + $0x58] sm:$0xf] %v3466
      %3531 = vst [vmem:[%s170 + $0x5c] sm:$0xf] %v3467
      %3532 = vst [vmem:[%s170 + $0x60] sm:$0xf] %v3468
      %3533 = vst [vmem:[%s170 + $0x64] sm:$0xf] %v3469
      %3534 = vst [vmem:[%s170 + $0x68] sm:$0xf] %v3470
      %3535 = vst [vmem:[%s170 + $0x6c] sm:$0xf] %v3471
      %3536 = vst [vmem:[%s170 + $0x70] sm:$0xf] %v3472
      %3537 = vst [vmem:[%s170 + $0x74] sm:$0xf] %v3473
      %3538 = vst [vmem:[%s170 + $0x78] sm:$0xf] %v3474
      %3539 = vst [vmem:[%s170 + $0x7c] sm:$0xf] %v3475
      %p3540 = scmp.lt.s32.totalorder %s14, 1
      %s3541 = scalar_select %p3540, %s14, 1
      %s3542 = smul.addr %s3541, 32
      %s3543 = smul.addr %s3542, 4
      %s3544 = scalar_lea.vmem %s3, %s3543
      // Predicated region
      $region33: #{bottleneck_forward.5} parent=31 // pred_check
        %p3545 = pneg %p100
      $region34: #{bottleneck_forward.5} parent=31 // pred_check_branch
        %3547 = sbr.rel (%p3545) target = $region36
      $region35: #{bottleneck_forward.5} parent=31 // pred_region
        _
      $region36: #{bottleneck_forward.5} parent=31 // pred_fallthru
        _
    $region32: #{bottleneck_forward.5} parent=5 // pred_fallthru
      _
    %p3548 = scmp.le.s32.totalorder 2, %s9
    // Predicated region
    $region37: #{bottleneck_forward.5} parent=5 // pred_check
      %p3549 = pneg %p3548
    $region38: #{bottleneck_forward.5} parent=5 // pred_check_branch
      %3551 = sbr.rel (%p3549) target = $region40
    $region39: #{bottleneck_forward.5} parent=5 // pred_region
      %s3552 = ssub.s32 %s9, 2
      // Predicated region
      $region41: #{bottleneck_forward.5} parent=39 // pred_check
        %p3553 = pneg %p106
      $region42: #{bottleneck_forward.5} parent=39 // pred_check_branch
        %3555 = sbr.rel (%p3553) target = $region44
      $region43: #{bottleneck_forward.5} parent=39 // pred_region
        %p3556 = scmp.lt.s32.totalorder %s15, 1
        %s3557 = scalar_select %p3556, %s15, 1
        %s3558 = smul.addr %s3557, 32
        %s3559 = smul.addr %s3558, 4
        %s3560 = scalar_lea.vmem %s3, %s3559
      $region44: #{bottleneck_forward.5} parent=39 // pred_fallthru
        _
    $region40: #{bottleneck_forward.5} parent=5 // pred_fallthru
      _
  $region6: #{bottleneck_forward.5} parent=0 // loop_footer
    %s13 = sadd.s32 1, %s9
  $region7: #{bottleneck_forward.5} parent=0 // loop_footer_branch
    %8 = sbr.rel target = $region3
  $region8: #{bottleneck_forward.5} parent=0 // loop_exit
    _

</llo_original>
